<compile_context>
chip_gen: v7x
topology: tpu7x:2x2x1
jax: 0.10.0
libtpu: 0.0.40
codegen_flags: <defaults>
</compile_context>

<pallas_src>
import jax
import jax.numpy as jnp
from jax.experimental import pallas as pl
from jax.experimental.pallas import tpu as pltpu


def attention_gate_kernel(x1_ref, x2_ref, w1_ref, b1_ref, w2_ref, b2_ref,
                          wg_ref, bg_ref, o_ref):
    """One spatial tile.

    x1_ref: (C1, TSr, L) VMEM      w1_ref: (C1, F) SMEM   b1_ref: (F,) SMEM
    x2_ref: (C2, TSr, L) VMEM      w2_ref: (C2, F) SMEM   b2_ref: (F,) SMEM
    o_ref : (C1, TSr, L) VMEM      wg_ref: (F,)    SMEM   bg_ref: (1,) SMEM
    """
    c1, f_int = w1_ref.shape
    c2, _ = w2_ref.shape

    # g = sum_f wg[f] * relu( sum_c w1[c,f]*x1[c] + sum_c w2[c,f]*x2[c]
    #                         + b1[f] + b2[f] ) + bg
    # All as VPU broadcast-FMAs on lane-dense (TSr, L) pixel tiles.
    g = None
    for f in range(f_int):
        v = None
        for c in range(c1):
            term = x1_ref[c].astype(jnp.float32) * w1_ref[c, f]
            v = term if v is None else v + term
        for c in range(c2):
            v = v + x2_ref[c].astype(jnp.float32) * w2_ref[c, f]
        v = jnp.maximum(v + (b1_ref[f] + b2_ref[f]), 0.0)   # ReLU(conv1 + conv2)
        gt = v * wg_ref[f]
        g = gt if g is None else g + gt
    g = g + bg_ref[0]

    h = jax.nn.sigmoid(g)                                    # (TSr, L) gate, EUP

    x1 = x1_ref[...].astype(jnp.float32)                     # (C1, TSr, L)
    o_ref[...] = (x1 * h).astype(o_ref.dtype)                # h broadcasts over channels


def _pick_row_tile(rows, max_rows):
    """Largest multiple of 8 dividing `rows`, capped at max_rows; else full rows."""
    best = None
    t = 8
    while t <= min(rows, max_rows):
        if rows % t == 0:
            best = t
        t += 8
    return best if best is not None else rows


def attention_gate(inp_1, inp_2, w1, b1, w2, b2, wg, bg, *,
                   max_pixels_per_tile=8192):
    """inp_1: (N, C1, H, W), inp_2: (N, C2, H, W) -> (N, C1, H, W).

    1x1 conv weights stored as (C_in, C_out); biases as (C_out,)."""
    N, C1, H, W = inp_1.shape
    N2, C2, H2, W2 = inp_2.shape
    assert (N, H, W) == (N2, H2, W2)
    F = w1.shape[1]
    HW = H * W

    # Free reshapes only: spatial pixels become (rows, lanes) with lanes on
    # the fast (lane) axis. No data movement.
    lanes = 128 if HW % 128 == 0 else HW
    rows = HW // lanes
    x1 = inp_1.reshape(N, C1, rows, lanes)
    x2 = inp_2.reshape(N, C2, rows, lanes)

    ts_rows = _pick_row_tile(rows, max(1, max_pixels_per_tile // lanes))
    grid = (N, rows // ts_rows)

    # Tiny constant weights/biases live as SMEM scalars (not pipelined VMEM).
    smem = pl.BlockSpec(memory_space=pltpu.MemorySpace.SMEM)

    out = pl.pallas_call(
        attention_gate_kernel,
        out_shape=jax.ShapeDtypeStruct((N, C1, rows, lanes), inp_1.dtype),
        grid=grid,
        in_specs=[
            pl.BlockSpec((None, C1, ts_rows, lanes), lambda n, s: (n, 0, s, 0)),
            pl.BlockSpec((None, C2, ts_rows, lanes), lambda n, s: (n, 0, s, 0)),
            smem,  # w1 (C1, F)
            smem,  # b1 (F,)
            smem,  # w2 (C2, F)
            smem,  # b2 (F,)
            smem,  # wg (F,)
            smem,  # bg (1,)
        ],
        out_specs=pl.BlockSpec((None, C1, ts_rows, lanes), lambda n, s: (n, 0, s, 0)),
        compiler_params=pltpu.CompilerParams(
            dimension_semantics=("parallel", "parallel")),
    )(x1, x2, w1, b1.reshape(F), w2, b2.reshape(F), wg.reshape(F), bg.reshape(1))

    return out.reshape(N, C1, H, W)


def reference_attention_gate(inp_1, inp_2, w1, b1, w2, b2, wg, bg):
    """Pure-JAX reference mirroring the PyTorch forward (NCHW)."""
    def conv1x1(x, w, b):  # w: (Cin, Cout)
        y = jnp.einsum('nchw,cf->nfhw', x, w)
        return y + b.reshape(1, -1, 1, 1)
    f = jax.nn.relu(conv1x1(inp_1, w1, b1) + conv1x1(inp_2, w2, b2))
    g = conv1x1(f, wg, bg)
    h = jax.nn.sigmoid(g)
    return inp_1 * h


if __name__ == "__main__":
    # Small shapes consistent with the module.
    N, C1, C2, F_INT, H, W = 2, 4, 8, 16, 16, 16

    key = jax.random.PRNGKey(0)
    k = jax.random.split(key, 8)
    inp_1 = jax.random.normal(k[0], (N, C1, H, W), dtype=jnp.float32)
    inp_2 = jax.random.normal(k[1], (N, C2, H, W), dtype=jnp.float32)

    # Conv2d kernel_size=1 weights stored as (Cin, Cout).
    w1 = jax.random.normal(k[2], (C1, F_INT), dtype=jnp.float32) * 0.1
    b1 = jax.random.normal(k[3], (F_INT,), dtype=jnp.float32) * 0.1
    w2 = jax.random.normal(k[4], (C2, F_INT), dtype=jnp.float32) * 0.1
    b2 = jax.random.normal(k[5], (F_INT,), dtype=jnp.float32) * 0.1
    wg = jax.random.normal(k[6], (F_INT, 1), dtype=jnp.float32) * 0.1
    bg = jax.random.normal(k[7], (1,), dtype=jnp.float32) * 0.1

    out = attention_gate(inp_1, inp_2, w1, b1, w2, b2, wg, bg)
    out = jax.block_until_ready(out)

    ref = reference_attention_gate(inp_1, inp_2, w1, b1, w2, b2, wg, bg)
    assert out.shape == (N, C1, H, W)
    assert jnp.allclose(out, ref, atol=1e-5, rtol=1e-5), "mismatch vs reference"

    print("KERNEL_OK")
</pallas_src>

<mosaic_0001>
module attributes {stable_mosaic.version = 11 : i64} {
  func.func @attention_gate_kernel(%arg0: i32, %arg1: i32, %arg2: memref<1x4x2x128xf32, #tpu.memory_space<vmem>>, %arg3: memref<1x8x2x128xf32, #tpu.memory_space<vmem>>, %arg4: memref<4x16xf32, #tpu.memory_space<smem>>, %arg5: memref<16xf32, #tpu.memory_space<smem>>, %arg6: memref<8x16xf32, #tpu.memory_space<smem>>, %arg7: memref<16xf32, #tpu.memory_space<smem>>, %arg8: memref<16xf32, #tpu.memory_space<smem>>, %arg9: memref<1xf32, #tpu.memory_space<smem>>, %arg10: memref<1x4x2x128xf32, #tpu.memory_space<vmem>>) attributes {dimension_semantics = [#tpu.dimension_semantics<parallel>, #tpu.dimension_semantics<parallel>], iteration_bounds = array<i64: 2, 1>, scalar_prefetch = 0 : i64, scratch_operands = 0 : i64, tpu.core_type = #tpu.core_type<tc>, window_params = [{transform_indices = @transform_0, window_bounds = array<i64: 1, 4, 2, 128>}, {transform_indices = @transform_1, window_bounds = array<i64: 1, 8, 2, 128>}, {transform_indices = @transform_2, window_bounds = array<i64: 4, 16>}, {transform_indices = @transform_3, window_bounds = array<i64: 16>}, {transform_indices = @transform_4, window_bounds = array<i64: 8, 16>}, {transform_indices = @transform_5, window_bounds = array<i64: 16>}, {transform_indices = @transform_6, window_bounds = array<i64: 16>}, {transform_indices = @transform_7, window_bounds = array<i64: 1>}, {transform_indices = @transform_8, window_bounds = array<i64: 1, 4, 2, 128>}]} {
    %c0 = arith.constant 0 : index
    %c0_0 = arith.constant 0 : index
    %c0_1 = arith.constant 0 : index
    %c0_2 = arith.constant 0 : index
    %0 = vector.load %arg2[%c0, %c0_0, %c0_1, %c0_2] : memref<1x4x2x128xf32, #tpu.memory_space<vmem>>, vector<1x1x2x128xf32>
    %1 = vector.shape_cast %0 : vector<1x1x2x128xf32> to vector<2x128xf32>
    %c0_3 = arith.constant 0 : index
    %c0_4 = arith.constant 0 : index
    %2 = memref.load %arg4[%c0_3, %c0_4] : memref<4x16xf32, #tpu.memory_space<smem>>
    %3 = vector.broadcast %2 : f32 to vector<2x128xf32>
    %4 = arith.mulf %1, %3 : vector<2x128xf32>
    %c0_5 = arith.constant 0 : index
    %c1 = arith.constant 1 : index
    %c0_6 = arith.constant 0 : index
    %c0_7 = arith.constant 0 : index
    %5 = vector.load %arg2[%c0_5, %c1, %c0_6, %c0_7] : memref<1x4x2x128xf32, #tpu.memory_space<vmem>>, vector<1x1x2x128xf32>
    %6 = vector.shape_cast %5 : vector<1x1x2x128xf32> to vector<2x128xf32>
    %c1_8 = arith.constant 1 : index
    %c0_9 = arith.constant 0 : index
    %7 = memref.load %arg4[%c1_8, %c0_9] : memref<4x16xf32, #tpu.memory_space<smem>>
    %8 = vector.broadcast %7 : f32 to vector<2x128xf32>
    %9 = arith.mulf %6, %8 : vector<2x128xf32>
    %10 = arith.addf %4, %9 : vector<2x128xf32>
    %c0_10 = arith.constant 0 : index
    %c2 = arith.constant 2 : index
    %c0_11 = arith.constant 0 : index
    %c0_12 = arith.constant 0 : index
    %11 = vector.load %arg2[%c0_10, %c2, %c0_11, %c0_12] : memref<1x4x2x128xf32, #tpu.memory_space<vmem>>, vector<1x1x2x128xf32>
    %12 = vector.shape_cast %11 : vector<1x1x2x128xf32> to vector<2x128xf32>
    %c2_13 = arith.constant 2 : index
    %c0_14 = arith.constant 0 : index
    %13 = memref.load %arg4[%c2_13, %c0_14] : memref<4x16xf32, #tpu.memory_space<smem>>
    %14 = vector.broadcast %13 : f32 to vector<2x128xf32>
    %15 = arith.mulf %12, %14 : vector<2x128xf32>
    %16 = arith.addf %10, %15 : vector<2x128xf32>
    %c0_15 = arith.constant 0 : index
    %c3 = arith.constant 3 : index
    %c0_16 = arith.constant 0 : index
    %c0_17 = arith.constant 0 : index
    %17 = vector.load %arg2[%c0_15, %c3, %c0_16, %c0_17] : memref<1x4x2x128xf32, #tpu.memory_space<vmem>>, vector<1x1x2x128xf32>
    %18 = vector.shape_cast %17 : vector<1x1x2x128xf32> to vector<2x128xf32>
    %c3_18 = arith.constant 3 : index
    %c0_19 = arith.constant 0 : index
    %19 = memref.load %arg4[%c3_18, %c0_19] : memref<4x16xf32, #tpu.memory_space<smem>>
    %20 = vector.broadcast %19 : f32 to vector<2x128xf32>
    %21 = arith.mulf %18, %20 : vector<2x128xf32>
    %22 = arith.addf %16, %21 : vector<2x128xf32>
    %c0_20 = arith.constant 0 : index
    %c0_21 = arith.constant 0 : index
    %c0_22 = arith.constant 0 : index
    %c0_23 = arith.constant 0 : index
    %23 = vector.load %arg3[%c0_20, %c0_21, %c0_22, %c0_23] : memref<1x8x2x128xf32, #tpu.memory_space<vmem>>, vector<1x1x2x128xf32>
    %24 = vector.shape_cast %23 : vector<1x1x2x128xf32> to vector<2x128xf32>
    %c0_24 = arith.constant 0 : index
    %c0_25 = arith.constant 0 : index
    %25 = memref.load %arg6[%c0_24, %c0_25] : memref<8x16xf32, #tpu.memory_space<smem>>
    %26 = vector.broadcast %25 : f32 to vector<2x128xf32>
    %27 = arith.mulf %24, %26 : vector<2x128xf32>
    %28 = arith.addf %22, %27 : vector<2x128xf32>
    %c0_26 = arith.constant 0 : index
    %c1_27 = arith.constant 1 : index
    %c0_28 = arith.constant 0 : index
    %c0_29 = arith.constant 0 : index
    %29 = vector.load %arg3[%c0_26, %c1_27, %c0_28, %c0_29] : memref<1x8x2x128xf32, #tpu.memory_space<vmem>>, vector<1x1x2x128xf32>
    %30 = vector.shape_cast %29 : vector<1x1x2x128xf32> to vector<2x128xf32>
    %c1_30 = arith.constant 1 : index
    %c0_31 = arith.constant 0 : index
    %31 = memref.load %arg6[%c1_30, %c0_31] : memref<8x16xf32, #tpu.memory_space<smem>>
    %32 = vector.broadcast %31 : f32 to vector<2x128xf32>
    %33 = arith.mulf %30, %32 : vector<2x128xf32>
    %34 = arith.addf %28, %33 : vector<2x128xf32>
    %c0_32 = arith.constant 0 : index
    %c2_33 = arith.constant 2 : index
    %c0_34 = arith.constant 0 : index
    %c0_35 = arith.constant 0 : index
    %35 = vector.load %arg3[%c0_32, %c2_33, %c0_34, %c0_35] : memref<1x8x2x128xf32, #tpu.memory_space<vmem>>, vector<1x1x2x128xf32>
    %36 = vector.shape_cast %35 : vector<1x1x2x128xf32> to vector<2x128xf32>
    %c2_36 = arith.constant 2 : index
    %c0_37 = arith.constant 0 : index
    %37 = memref.load %arg6[%c2_36, %c0_37] : memref<8x16xf32, #tpu.memory_space<smem>>
    %38 = vector.broadcast %37 : f32 to vector<2x128xf32>
    %39 = arith.mulf %36, %38 : vector<2x128xf32>
    %40 = arith.addf %34, %39 : vector<2x128xf32>
    %c0_38 = arith.constant 0 : index
    %c3_39 = arith.constant 3 : index
    %c0_40 = arith.constant 0 : index
    %c0_41 = arith.constant 0 : index
    %41 = vector.load %arg3[%c0_38, %c3_39, %c0_40, %c0_41] : memref<1x8x2x128xf32, #tpu.memory_space<vmem>>, vector<1x1x2x128xf32>
    %42 = vector.shape_cast %41 : vector<1x1x2x128xf32> to vector<2x128xf32>
    %c3_42 = arith.constant 3 : index
    %c0_43 = arith.constant 0 : index
    %43 = memref.load %arg6[%c3_42, %c0_43] : memref<8x16xf32, #tpu.memory_space<smem>>
    %44 = vector.broadcast %43 : f32 to vector<2x128xf32>
    %45 = arith.mulf %42, %44 : vector<2x128xf32>
    %46 = arith.addf %40, %45 : vector<2x128xf32>
    %c0_44 = arith.constant 0 : index
    %c4 = arith.constant 4 : index
    %c0_45 = arith.constant 0 : index
    %c0_46 = arith.constant 0 : index
    %47 = vector.load %arg3[%c0_44, %c4, %c0_45, %c0_46] : memref<1x8x2x128xf32, #tpu.memory_space<vmem>>, vector<1x1x2x128xf32>
    %48 = vector.shape_cast %47 : vector<1x1x2x128xf32> to vector<2x128xf32>
    %c4_47 = arith.constant 4 : index
    %c0_48 = arith.constant 0 : index
    %49 = memref.load %arg6[%c4_47, %c0_48] : memref<8x16xf32, #tpu.memory_space<smem>>
    %50 = vector.broadcast %49 : f32 to vector<2x128xf32>
    %51 = arith.mulf %48, %50 : vector<2x128xf32>
    %52 = arith.addf %46, %51 : vector<2x128xf32>
    %c0_49 = arith.constant 0 : index
    %c5 = arith.constant 5 : index
    %c0_50 = arith.constant 0 : index
    %c0_51 = arith.constant 0 : index
    %53 = vector.load %arg3[%c0_49, %c5, %c0_50, %c0_51] : memref<1x8x2x128xf32, #tpu.memory_space<vmem>>, vector<1x1x2x128xf32>
    %54 = vector.shape_cast %53 : vector<1x1x2x128xf32> to vector<2x128xf32>
    %c5_52 = arith.constant 5 : index
    %c0_53 = arith.constant 0 : index
    %55 = memref.load %arg6[%c5_52, %c0_53] : memref<8x16xf32, #tpu.memory_space<smem>>
    %56 = vector.broadcast %55 : f32 to vector<2x128xf32>
    %57 = arith.mulf %54, %56 : vector<2x128xf32>
    %58 = arith.addf %52, %57 : vector<2x128xf32>
    %c0_54 = arith.constant 0 : index
    %c6 = arith.constant 6 : index
    %c0_55 = arith.constant 0 : index
    %c0_56 = arith.constant 0 : index
    %59 = vector.load %arg3[%c0_54, %c6, %c0_55, %c0_56] : memref<1x8x2x128xf32, #tpu.memory_space<vmem>>, vector<1x1x2x128xf32>
    %60 = vector.shape_cast %59 : vector<1x1x2x128xf32> to vector<2x128xf32>
    %c6_57 = arith.constant 6 : index
    %c0_58 = arith.constant 0 : index
    %61 = memref.load %arg6[%c6_57, %c0_58] : memref<8x16xf32, #tpu.memory_space<smem>>
    %62 = vector.broadcast %61 : f32 to vector<2x128xf32>
    %63 = arith.mulf %60, %62 : vector<2x128xf32>
    %64 = arith.addf %58, %63 : vector<2x128xf32>
    %c0_59 = arith.constant 0 : index
    %c7 = arith.constant 7 : index
    %c0_60 = arith.constant 0 : index
    %c0_61 = arith.constant 0 : index
    %65 = vector.load %arg3[%c0_59, %c7, %c0_60, %c0_61] : memref<1x8x2x128xf32, #tpu.memory_space<vmem>>, vector<1x1x2x128xf32>
    %66 = vector.shape_cast %65 : vector<1x1x2x128xf32> to vector<2x128xf32>
    %c7_62 = arith.constant 7 : index
    %c0_63 = arith.constant 0 : index
    %67 = memref.load %arg6[%c7_62, %c0_63] : memref<8x16xf32, #tpu.memory_space<smem>>
    %68 = vector.broadcast %67 : f32 to vector<2x128xf32>
    %69 = arith.mulf %66, %68 : vector<2x128xf32>
    %70 = arith.addf %64, %69 : vector<2x128xf32>
    %c0_64 = arith.constant 0 : index
    %71 = memref.load %arg5[%c0_64] : memref<16xf32, #tpu.memory_space<smem>>
    %c0_65 = arith.constant 0 : index
    %72 = memref.load %arg7[%c0_65] : memref<16xf32, #tpu.memory_space<smem>>
    %73 = arith.addf %71, %72 : f32
    %74 = vector.broadcast %73 : f32 to vector<2x128xf32>
    %75 = arith.addf %70, %74 : vector<2x128xf32>
    %cst = arith.constant 0.000000e+00 : f32
    %76 = vector.broadcast %cst : f32 to vector<2x128xf32>
    %77 = arith.maximumf %75, %76 : vector<2x128xf32>
    %c0_66 = arith.constant 0 : index
    %78 = memref.load %arg8[%c0_66] : memref<16xf32, #tpu.memory_space<smem>>
    %79 = vector.broadcast %78 : f32 to vector<2x128xf32>
    %80 = arith.mulf %77, %79 : vector<2x128xf32>
    %c0_67 = arith.constant 0 : index
    %c0_68 = arith.constant 0 : index
    %c0_69 = arith.constant 0 : index
    %c0_70 = arith.constant 0 : index
    %81 = vector.load %arg2[%c0_67, %c0_68, %c0_69, %c0_70] : memref<1x4x2x128xf32, #tpu.memory_space<vmem>>, vector<1x1x2x128xf32>
    %82 = vector.shape_cast %81 : vector<1x1x2x128xf32> to vector<2x128xf32>
    %c0_71 = arith.constant 0 : index
    %c1_72 = arith.constant 1 : index
    %83 = memref.load %arg4[%c0_71, %c1_72] : memref<4x16xf32, #tpu.memory_space<smem>>
    %84 = vector.broadcast %83 : f32 to vector<2x128xf32>
    %85 = arith.mulf %82, %84 : vector<2x128xf32>
    %c0_73 = arith.constant 0 : index
    %c1_74 = arith.constant 1 : index
    %c0_75 = arith.constant 0 : index
    %c0_76 = arith.constant 0 : index
    %86 = vector.load %arg2[%c0_73, %c1_74, %c0_75, %c0_76] : memref<1x4x2x128xf32, #tpu.memory_space<vmem>>, vector<1x1x2x128xf32>
    %87 = vector.shape_cast %86 : vector<1x1x2x128xf32> to vector<2x128xf32>
    %c1_77 = arith.constant 1 : index
    %c1_78 = arith.constant 1 : index
    %88 = memref.load %arg4[%c1_77, %c1_78] : memref<4x16xf32, #tpu.memory_space<smem>>
    %89 = vector.broadcast %88 : f32 to vector<2x128xf32>
    %90 = arith.mulf %87, %89 : vector<2x128xf32>
    %91 = arith.addf %85, %90 : vector<2x128xf32>
    %c0_79 = arith.constant 0 : index
    %c2_80 = arith.constant 2 : index
    %c0_81 = arith.constant 0 : index
    %c0_82 = arith.constant 0 : index
    %92 = vector.load %arg2[%c0_79, %c2_80, %c0_81, %c0_82] : memref<1x4x2x128xf32, #tpu.memory_space<vmem>>, vector<1x1x2x128xf32>
    %93 = vector.shape_cast %92 : vector<1x1x2x128xf32> to vector<2x128xf32>
    %c2_83 = arith.constant 2 : index
    %c1_84 = arith.constant 1 : index
    %94 = memref.load %arg4[%c2_83, %c1_84] : memref<4x16xf32, #tpu.memory_space<smem>>
    %95 = vector.broadcast %94 : f32 to vector<2x128xf32>
    %96 = arith.mulf %93, %95 : vector<2x128xf32>
    %97 = arith.addf %91, %96 : vector<2x128xf32>
    %c0_85 = arith.constant 0 : index
    %c3_86 = arith.constant 3 : index
    %c0_87 = arith.constant 0 : index
    %c0_88 = arith.constant 0 : index
    %98 = vector.load %arg2[%c0_85, %c3_86, %c0_87, %c0_88] : memref<1x4x2x128xf32, #tpu.memory_space<vmem>>, vector<1x1x2x128xf32>
    %99 = vector.shape_cast %98 : vector<1x1x2x128xf32> to vector<2x128xf32>
    %c3_89 = arith.constant 3 : index
    %c1_90 = arith.constant 1 : index
    %100 = memref.load %arg4[%c3_89, %c1_90] : memref<4x16xf32, #tpu.memory_space<smem>>
    %101 = vector.broadcast %100 : f32 to vector<2x128xf32>
    %102 = arith.mulf %99, %101 : vector<2x128xf32>
    %103 = arith.addf %97, %102 : vector<2x128xf32>
    %c0_91 = arith.constant 0 : index
    %c0_92 = arith.constant 0 : index
    %c0_93 = arith.constant 0 : index
    %c0_94 = arith.constant 0 : index
    %104 = vector.load %arg3[%c0_91, %c0_92, %c0_93, %c0_94] : memref<1x8x2x128xf32, #tpu.memory_space<vmem>>, vector<1x1x2x128xf32>
    %105 = vector.shape_cast %104 : vector<1x1x2x128xf32> to vector<2x128xf32>
    %c0_95 = arith.constant 0 : index
    %c1_96 = arith.constant 1 : index
    %106 = memref.load %arg6[%c0_95, %c1_96] : memref<8x16xf32, #tpu.memory_space<smem>>
    %107 = vector.broadcast %106 : f32 to vector<2x128xf32>
    %108 = arith.mulf %105, %107 : vector<2x128xf32>
    %109 = arith.addf %103, %108 : vector<2x128xf32>
    %c0_97 = arith.constant 0 : index
    %c1_98 = arith.constant 1 : index
    %c0_99 = arith.constant 0 : index
    %c0_100 = arith.constant 0 : index
    %110 = vector.load %arg3[%c0_97, %c1_98, %c0_99, %c0_100] : memref<1x8x2x128xf32, #tpu.memory_space<vmem>>, vector<1x1x2x128xf32>
    %111 = vector.shape_cast %110 : vector<1x1x2x128xf32> to vector<2x128xf32>
    %c1_101 = arith.constant 1 : index
    %c1_102 = arith.constant 1 : index
    %112 = memref.load %arg6[%c1_101, %c1_102] : memref<8x16xf32, #tpu.memory_space<smem>>
    %113 = vector.broadcast %112 : f32 to vector<2x128xf32>
    %114 = arith.mulf %111, %113 : vector<2x128xf32>
    %115 = arith.addf %109, %114 : vector<2x128xf32>
    %c0_103 = arith.constant 0 : index
    %c2_104 = arith.constant 2 : index
    %c0_105 = arith.constant 0 : index
    %c0_106 = arith.constant 0 : index
    %116 = vector.load %arg3[%c0_103, %c2_104, %c0_105, %c0_106] : memref<1x8x2x128xf32, #tpu.memory_space<vmem>>, vector<1x1x2x128xf32>
    %117 = vector.shape_cast %116 : vector<1x1x2x128xf32> to vector<2x128xf32>
    %c2_107 = arith.constant 2 : index
    %c1_108 = arith.constant 1 : index
    %118 = memref.load %arg6[%c2_107, %c1_108] : memref<8x16xf32, #tpu.memory_space<smem>>
    %119 = vector.broadcast %118 : f32 to vector<2x128xf32>
    %120 = arith.mulf %117, %119 : vector<2x128xf32>
    %121 = arith.addf %115, %120 : vector<2x128xf32>
    %c0_109 = arith.constant 0 : index
    %c3_110 = arith.constant 3 : index
    %c0_111 = arith.constant 0 : index
    %c0_112 = arith.constant 0 : index
    %122 = vector.load %arg3[%c0_109, %c3_110, %c0_111, %c0_112] : memref<1x8x2x128xf32, #tpu.memory_space<vmem>>, vector<1x1x2x128xf32>
    %123 = vector.shape_cast %122 : vector<1x1x2x128xf32> to vector<2x128xf32>
    %c3_113 = arith.constant 3 : index
    %c1_114 = arith.constant 1 : index
    %124 = memref.load %arg6[%c3_113, %c1_114] : memref<8x16xf32, #tpu.memory_space<smem>>
    %125 = vector.broadcast %124 : f32 to vector<2x128xf32>
    %126 = arith.mulf %123, %125 : vector<2x128xf32>
    %127 = arith.addf %121, %126 : vector<2x128xf32>
    %c0_115 = arith.constant 0 : index
    %c4_116 = arith.constant 4 : index
    %c0_117 = arith.constant 0 : index
    %c0_118 = arith.constant 0 : index
    %128 = vector.load %arg3[%c0_115, %c4_116, %c0_117, %c0_118] : memref<1x8x2x128xf32, #tpu.memory_space<vmem>>, vector<1x1x2x128xf32>
    %129 = vector.shape_cast %128 : vector<1x1x2x128xf32> to vector<2x128xf32>
    %c4_119 = arith.constant 4 : index
    %c1_120 = arith.constant 1 : index
    %130 = memref.load %arg6[%c4_119, %c1_120] : memref<8x16xf32, #tpu.memory_space<smem>>
    %131 = vector.broadcast %130 : f32 to vector<2x128xf32>
    %132 = arith.mulf %129, %131 : vector<2x128xf32>
    %133 = arith.addf %127, %132 : vector<2x128xf32>
    %c0_121 = arith.constant 0 : index
    %c5_122 = arith.constant 5 : index
    %c0_123 = arith.constant 0 : index
    %c0_124 = arith.constant 0 : index
    %134 = vector.load %arg3[%c0_121, %c5_122, %c0_123, %c0_124] : memref<1x8x2x128xf32, #tpu.memory_space<vmem>>, vector<1x1x2x128xf32>
    %135 = vector.shape_cast %134 : vector<1x1x2x128xf32> to vector<2x128xf32>
    %c5_125 = arith.constant 5 : index
    %c1_126 = arith.constant 1 : index
    %136 = memref.load %arg6[%c5_125, %c1_126] : memref<8x16xf32, #tpu.memory_space<smem>>
    %137 = vector.broadcast %136 : f32 to vector<2x128xf32>
    %138 = arith.mulf %135, %137 : vector<2x128xf32>
    %139 = arith.addf %133, %138 : vector<2x128xf32>
    %c0_127 = arith.constant 0 : index
    %c6_128 = arith.constant 6 : index
    %c0_129 = arith.constant 0 : index
    %c0_130 = arith.constant 0 : index
    %140 = vector.load %arg3[%c0_127, %c6_128, %c0_129, %c0_130] : memref<1x8x2x128xf32, #tpu.memory_space<vmem>>, vector<1x1x2x128xf32>
    %141 = vector.shape_cast %140 : vector<1x1x2x128xf32> to vector<2x128xf32>
    %c6_131 = arith.constant 6 : index
    %c1_132 = arith.constant 1 : index
    %142 = memref.load %arg6[%c6_131, %c1_132] : memref<8x16xf32, #tpu.memory_space<smem>>
    %143 = vector.broadcast %142 : f32 to vector<2x128xf32>
    %144 = arith.mulf %141, %143 : vector<2x128xf32>
    %145 = arith.addf %139, %144 : vector<2x128xf32>
    %c0_133 = arith.constant 0 : index
    %c7_134 = arith.constant 7 : index
    %c0_135 = arith.constant 0 : index
    %c0_136 = arith.constant 0 : index
    %146 = vector.load %arg3[%c0_133, %c7_134, %c0_135, %c0_136] : memref<1x8x2x128xf32, #tpu.memory_space<vmem>>, vector<1x1x2x128xf32>
    %147 = vector.shape_cast %146 : vector<1x1x2x128xf32> to vector<2x128xf32>
    %c7_137 = arith.constant 7 : index
    %c1_138 = arith.constant 1 : index
    %148 = memref.load %arg6[%c7_137, %c1_138] : memref<8x16xf32, #tpu.memory_space<smem>>
    %149 = vector.broadcast %148 : f32 to vector<2x128xf32>
    %150 = arith.mulf %147, %149 : vector<2x128xf32>
    %151 = arith.addf %145, %150 : vector<2x128xf32>
    %c1_139 = arith.constant 1 : index
    %152 = memref.load %arg5[%c1_139] : memref<16xf32, #tpu.memory_space<smem>>
    %c1_140 = arith.constant 1 : index
    %153 = memref.load %arg7[%c1_140] : memref<16xf32, #tpu.memory_space<smem>>
    %154 = arith.addf %152, %153 : f32
    %155 = vector.broadcast %154 : f32 to vector<2x128xf32>
    %156 = arith.addf %151, %155 : vector<2x128xf32>
    %cst_141 = arith.constant 0.000000e+00 : f32
    %157 = vector.broadcast %cst_141 : f32 to vector<2x128xf32>
    %158 = arith.maximumf %156, %157 : vector<2x128xf32>
    %c1_142 = arith.constant 1 : index
    %159 = memref.load %arg8[%c1_142] : memref<16xf32, #tpu.memory_space<smem>>
    %160 = vector.broadcast %159 : f32 to vector<2x128xf32>
    %161 = arith.mulf %158, %160 : vector<2x128xf32>
    %162 = arith.addf %80, %161 : vector<2x128xf32>
    %c0_143 = arith.constant 0 : index
    %c0_144 = arith.constant 0 : index
    %c0_145 = arith.constant 0 : index
    %c0_146 = arith.constant 0 : index
    %163 = vector.load %arg2[%c0_143, %c0_144, %c0_145, %c0_146] : memref<1x4x2x128xf32, #tpu.memory_space<vmem>>, vector<1x1x2x128xf32>
    %164 = vector.shape_cast %163 : vector<1x1x2x128xf32> to vector<2x128xf32>
    %c0_147 = arith.constant 0 : index
    %c2_148 = arith.constant 2 : index
    %165 = memref.load %arg4[%c0_147, %c2_148] : memref<4x16xf32, #tpu.memory_space<smem>>
    %166 = vector.broadcast %165 : f32 to vector<2x128xf32>
    %167 = arith.mulf %164, %166 : vector<2x128xf32>
    %c0_149 = arith.constant 0 : index
    %c1_150 = arith.constant 1 : index
    %c0_151 = arith.constant 0 : index
    %c0_152 = arith.constant 0 : index
    %168 = vector.load %arg2[%c0_149, %c1_150, %c0_151, %c0_152] : memref<1x4x2x128xf32, #tpu.memory_space<vmem>>, vector<1x1x2x128xf32>
    %169 = vector.shape_cast %168 : vector<1x1x2x128xf32> to vector<2x128xf32>
    %c1_153 = arith.constant 1 : index
    %c2_154 = arith.constant 2 : index
    %170 = memref.load %arg4[%c1_153, %c2_154] : memref<4x16xf32, #tpu.memory_space<smem>>
    %171 = vector.broadcast %170 : f32 to vector<2x128xf32>
    %172 = arith.mulf %169, %171 : vector<2x128xf32>
    %173 = arith.addf %167, %172 : vector<2x128xf32>
    %c0_155 = arith.constant 0 : index
    %c2_156 = arith.constant 2 : index
    %c0_157 = arith.constant 0 : index
    %c0_158 = arith.constant 0 : index
    %174 = vector.load %arg2[%c0_155, %c2_156, %c0_157, %c0_158] : memref<1x4x2x128xf32, #tpu.memory_space<vmem>>, vector<1x1x2x128xf32>
    %175 = vector.shape_cast %174 : vector<1x1x2x128xf32> to vector<2x128xf32>
    %c2_159 = arith.constant 2 : index
    %c2_160 = arith.constant 2 : index
    %176 = memref.load %arg4[%c2_159, %c2_160] : memref<4x16xf32, #tpu.memory_space<smem>>
    %177 = vector.broadcast %176 : f32 to vector<2x128xf32>
    %178 = arith.mulf %175, %177 : vector<2x128xf32>
    %179 = arith.addf %173, %178 : vector<2x128xf32>
    %c0_161 = arith.constant 0 : index
    %c3_162 = arith.constant 3 : index
    %c0_163 = arith.constant 0 : index
    %c0_164 = arith.constant 0 : index
    %180 = vector.load %arg2[%c0_161, %c3_162, %c0_163, %c0_164] : memref<1x4x2x128xf32, #tpu.memory_space<vmem>>, vector<1x1x2x128xf32>
    %181 = vector.shape_cast %180 : vector<1x1x2x128xf32> to vector<2x128xf32>
    %c3_165 = arith.constant 3 : index
    %c2_166 = arith.constant 2 : index
    %182 = memref.load %arg4[%c3_165, %c2_166] : memref<4x16xf32, #tpu.memory_space<smem>>
    %183 = vector.broadcast %182 : f32 to vector<2x128xf32>
    %184 = arith.mulf %181, %183 : vector<2x128xf32>
    %185 = arith.addf %179, %184 : vector<2x128xf32>
    %c0_167 = arith.constant 0 : index
    %c0_168 = arith.constant 0 : index
    %c0_169 = arith.constant 0 : index
    %c0_170 = arith.constant 0 : index
    %186 = vector.load %arg3[%c0_167, %c0_168, %c0_169, %c0_170] : memref<1x8x2x128xf32, #tpu.memory_space<vmem>>, vector<1x1x2x128xf32>
    %187 = vector.shape_cast %186 : vector<1x1x2x128xf32> to vector<2x128xf32>
    %c0_171 = arith.constant 0 : index
    %c2_172 = arith.constant 2 : index
    %188 = memref.load %arg6[%c0_171, %c2_172] : memref<8x16xf32, #tpu.memory_space<smem>>
    %189 = vector.broadcast %188 : f32 to vector<2x128xf32>
    %190 = arith.mulf %187, %189 : vector<2x128xf32>
    %191 = arith.addf %185, %190 : vector<2x128xf32>
    %c0_173 = arith.constant 0 : index
    %c1_174 = arith.constant 1 : index
    %c0_175 = arith.constant 0 : index
    %c0_176 = arith.constant 0 : index
    %192 = vector.load %arg3[%c0_173, %c1_174, %c0_175, %c0_176] : memref<1x8x2x128xf32, #tpu.memory_space<vmem>>, vector<1x1x2x128xf32>
    %193 = vector.shape_cast %192 : vector<1x1x2x128xf32> to vector<2x128xf32>
    %c1_177 = arith.constant 1 : index
    %c2_178 = arith.constant 2 : index
    %194 = memref.load %arg6[%c1_177, %c2_178] : memref<8x16xf32, #tpu.memory_space<smem>>
    %195 = vector.broadcast %194 : f32 to vector<2x128xf32>
    %196 = arith.mulf %193, %195 : vector<2x128xf32>
    %197 = arith.addf %191, %196 : vector<2x128xf32>
    %c0_179 = arith.constant 0 : index
    %c2_180 = arith.constant 2 : index
    %c0_181 = arith.constant 0 : index
    %c0_182 = arith.constant 0 : index
    %198 = vector.load %arg3[%c0_179, %c2_180, %c0_181, %c0_182] : memref<1x8x2x128xf32, #tpu.memory_space<vmem>>, vector<1x1x2x128xf32>
    %199 = vector.shape_cast %198 : vector<1x1x2x128xf32> to vector<2x128xf32>
    %c2_183 = arith.constant 2 : index
    %c2_184 = arith.constant 2 : index
    %200 = memref.load %arg6[%c2_183, %c2_184] : memref<8x16xf32, #tpu.memory_space<smem>>
    %201 = vector.broadcast %200 : f32 to vector<2x128xf32>
    %202 = arith.mulf %199, %201 : vector<2x128xf32>
    %203 = arith.addf %197, %202 : vector<2x128xf32>
    %c0_185 = arith.constant 0 : index
    %c3_186 = arith.constant 3 : index
    %c0_187 = arith.constant 0 : index
    %c0_188 = arith.constant 0 : index
    %204 = vector.load %arg3[%c0_185, %c3_186, %c0_187, %c0_188] : memref<1x8x2x128xf32, #tpu.memory_space<vmem>>, vector<1x1x2x128xf32>
    %205 = vector.shape_cast %204 : vector<1x1x2x128xf32> to vector<2x128xf32>
    %c3_189 = arith.constant 3 : index
    %c2_190 = arith.constant 2 : index
    %206 = memref.load %arg6[%c3_189, %c2_190] : memref<8x16xf32, #tpu.memory_space<smem>>
    %207 = vector.broadcast %206 : f32 to vector<2x128xf32>
    %208 = arith.mulf %205, %207 : vector<2x128xf32>
    %209 = arith.addf %203, %208 : vector<2x128xf32>
    %c0_191 = arith.constant 0 : index
    %c4_192 = arith.constant 4 : index
    %c0_193 = arith.constant 0 : index
    %c0_194 = arith.constant 0 : index
    %210 = vector.load %arg3[%c0_191, %c4_192, %c0_193, %c0_194] : memref<1x8x2x128xf32, #tpu.memory_space<vmem>>, vector<1x1x2x128xf32>
    %211 = vector.shape_cast %210 : vector<1x1x2x128xf32> to vector<2x128xf32>
    %c4_195 = arith.constant 4 : index
    %c2_196 = arith.constant 2 : index
    %212 = memref.load %arg6[%c4_195, %c2_196] : memref<8x16xf32, #tpu.memory_space<smem>>
    %213 = vector.broadcast %212 : f32 to vector<2x128xf32>
    %214 = arith.mulf %211, %213 : vector<2x128xf32>
    %215 = arith.addf %209, %214 : vector<2x128xf32>
    %c0_197 = arith.constant 0 : index
    %c5_198 = arith.constant 5 : index
    %c0_199 = arith.constant 0 : index
    %c0_200 = arith.constant 0 : index
    %216 = vector.load %arg3[%c0_197, %c5_198, %c0_199, %c0_200] : memref<1x8x2x128xf32, #tpu.memory_space<vmem>>, vector<1x1x2x128xf32>
    %217 = vector.shape_cast %216 : vector<1x1x2x128xf32> to vector<2x128xf32>
    %c5_201 = arith.constant 5 : index
    %c2_202 = arith.constant 2 : index
    %218 = memref.load %arg6[%c5_201, %c2_202] : memref<8x16xf32, #tpu.memory_space<smem>>
    %219 = vector.broadcast %218 : f32 to vector<2x128xf32>
    %220 = arith.mulf %217, %219 : vector<2x128xf32>
    %221 = arith.addf %215, %220 : vector<2x128xf32>
    %c0_203 = arith.constant 0 : index
    %c6_204 = arith.constant 6 : index
    %c0_205 = arith.constant 0 : index
    %c0_206 = arith.constant 0 : index
    %222 = vector.load %arg3[%c0_203, %c6_204, %c0_205, %c0_206] : memref<1x8x2x128xf32, #tpu.memory_space<vmem>>, vector<1x1x2x128xf32>
    %223 = vector.shape_cast %222 : vector<1x1x2x128xf32> to vector<2x128xf32>
    %c6_207 = arith.constant 6 : index
    %c2_208 = arith.constant 2 : index
    %224 = memref.load %arg6[%c6_207, %c2_208] : memref<8x16xf32, #tpu.memory_space<smem>>
    %225 = vector.broadcast %224 : f32 to vector<2x128xf32>
    %226 = arith.mulf %223, %225 : vector<2x128xf32>
    %227 = arith.addf %221, %226 : vector<2x128xf32>
    %c0_209 = arith.constant 0 : index
    %c7_210 = arith.constant 7 : index
    %c0_211 = arith.constant 0 : index
    %c0_212 = arith.constant 0 : index
    %228 = vector.load %arg3[%c0_209, %c7_210, %c0_211, %c0_212] : memref<1x8x2x128xf32, #tpu.memory_space<vmem>>, vector<1x1x2x128xf32>
    %229 = vector.shape_cast %228 : vector<1x1x2x128xf32> to vector<2x128xf32>
    %c7_213 = arith.constant 7 : index
    %c2_214 = arith.constant 2 : index
    %230 = memref.load %arg6[%c7_213, %c2_214] : memref<8x16xf32, #tpu.memory_space<smem>>
    %231 = vector.broadcast %230 : f32 to vector<2x128xf32>
    %232 = arith.mulf %229, %231 : vector<2x128xf32>
    %233 = arith.addf %227, %232 : vector<2x128xf32>
    %c2_215 = arith.constant 2 : index
    %234 = memref.load %arg5[%c2_215] : memref<16xf32, #tpu.memory_space<smem>>
    %c2_216 = arith.constant 2 : index
    %235 = memref.load %arg7[%c2_216] : memref<16xf32, #tpu.memory_space<smem>>
    %236 = arith.addf %234, %235 : f32
    %237 = vector.broadcast %236 : f32 to vector<2x128xf32>
    %238 = arith.addf %233, %237 : vector<2x128xf32>
    %cst_217 = arith.constant 0.000000e+00 : f32
    %239 = vector.broadcast %cst_217 : f32 to vector<2x128xf32>
    %240 = arith.maximumf %238, %239 : vector<2x128xf32>
    %c2_218 = arith.constant 2 : index
    %241 = memref.load %arg8[%c2_218] : memref<16xf32, #tpu.memory_space<smem>>
    %242 = vector.broadcast %241 : f32 to vector<2x128xf32>
    %243 = arith.mulf %240, %242 : vector<2x128xf32>
    %244 = arith.addf %162, %243 : vector<2x128xf32>
    %c0_219 = arith.constant 0 : index
    %c0_220 = arith.constant 0 : index
    %c0_221 = arith.constant 0 : index
    %c0_222 = arith.constant 0 : index
    %245 = vector.load %arg2[%c0_219, %c0_220, %c0_221, %c0_222] : memref<1x4x2x128xf32, #tpu.memory_space<vmem>>, vector<1x1x2x128xf32>
    %246 = vector.shape_cast %245 : vector<1x1x2x128xf32> to vector<2x128xf32>
    %c0_223 = arith.constant 0 : index
    %c3_224 = arith.constant 3 : index
    %247 = memref.load %arg4[%c0_223, %c3_224] : memref<4x16xf32, #tpu.memory_space<smem>>
    %248 = vector.broadcast %247 : f32 to vector<2x128xf32>
    %249 = arith.mulf %246, %248 : vector<2x128xf32>
    %c0_225 = arith.constant 0 : index
    %c1_226 = arith.constant 1 : index
    %c0_227 = arith.constant 0 : index
    %c0_228 = arith.constant 0 : index
    %250 = vector.load %arg2[%c0_225, %c1_226, %c0_227, %c0_228] : memref<1x4x2x128xf32, #tpu.memory_space<vmem>>, vector<1x1x2x128xf32>
    %251 = vector.shape_cast %250 : vector<1x1x2x128xf32> to vector<2x128xf32>
    %c1_229 = arith.constant 1 : index
    %c3_230 = arith.constant 3 : index
    %252 = memref.load %arg4[%c1_229, %c3_230] : memref<4x16xf32, #tpu.memory_space<smem>>
    %253 = vector.broadcast %252 : f32 to vector<2x128xf32>
    %254 = arith.mulf %251, %253 : vector<2x128xf32>
    %255 = arith.addf %249, %254 : vector<2x128xf32>
    %c0_231 = arith.constant 0 : index
    %c2_232 = arith.constant 2 : index
    %c0_233 = arith.constant 0 : index
    %c0_234 = arith.constant 0 : index
    %256 = vector.load %arg2[%c0_231, %c2_232, %c0_233, %c0_234] : memref<1x4x2x128xf32, #tpu.memory_space<vmem>>, vector<1x1x2x128xf32>
    %257 = vector.shape_cast %256 : vector<1x1x2x128xf32> to vector<2x128xf32>
    %c2_235 = arith.constant 2 : index
    %c3_236 = arith.constant 3 : index
    %258 = memref.load %arg4[%c2_235, %c3_236] : memref<4x16xf32, #tpu.memory_space<smem>>
    %259 = vector.broadcast %258 : f32 to vector<2x128xf32>
    %260 = arith.mulf %257, %259 : vector<2x128xf32>
    %261 = arith.addf %255, %260 : vector<2x128xf32>
    %c0_237 = arith.constant 0 : index
    %c3_238 = arith.constant 3 : index
    %c0_239 = arith.constant 0 : index
    %c0_240 = arith.constant 0 : index
    %262 = vector.load %arg2[%c0_237, %c3_238, %c0_239, %c0_240] : memref<1x4x2x128xf32, #tpu.memory_space<vmem>>, vector<1x1x2x128xf32>
    %263 = vector.shape_cast %262 : vector<1x1x2x128xf32> to vector<2x128xf32>
    %c3_241 = arith.constant 3 : index
    %c3_242 = arith.constant 3 : index
    %264 = memref.load %arg4[%c3_241, %c3_242] : memref<4x16xf32, #tpu.memory_space<smem>>
    %265 = vector.broadcast %264 : f32 to vector<2x128xf32>
    %266 = arith.mulf %263, %265 : vector<2x128xf32>
    %267 = arith.addf %261, %266 : vector<2x128xf32>
    %c0_243 = arith.constant 0 : index
    %c0_244 = arith.constant 0 : index
    %c0_245 = arith.constant 0 : index
    %c0_246 = arith.constant 0 : index
    %268 = vector.load %arg3[%c0_243, %c0_244, %c0_245, %c0_246] : memref<1x8x2x128xf32, #tpu.memory_space<vmem>>, vector<1x1x2x128xf32>
    %269 = vector.shape_cast %268 : vector<1x1x2x128xf32> to vector<2x128xf32>
    %c0_247 = arith.constant 0 : index
    %c3_248 = arith.constant 3 : index
    %270 = memref.load %arg6[%c0_247, %c3_248] : memref<8x16xf32, #tpu.memory_space<smem>>
    %271 = vector.broadcast %270 : f32 to vector<2x128xf32>
    %272 = arith.mulf %269, %271 : vector<2x128xf32>
    %273 = arith.addf %267, %272 : vector<2x128xf32>
    %c0_249 = arith.constant 0 : index
    %c1_250 = arith.constant 1 : index
    %c0_251 = arith.constant 0 : index
    %c0_252 = arith.constant 0 : index
    %274 = vector.load %arg3[%c0_249, %c1_250, %c0_251, %c0_252] : memref<1x8x2x128xf32, #tpu.memory_space<vmem>>, vector<1x1x2x128xf32>
    %275 = vector.shape_cast %274 : vector<1x1x2x128xf32> to vector<2x128xf32>
    %c1_253 = arith.constant 1 : index
    %c3_254 = arith.constant 3 : index
    %276 = memref.load %arg6[%c1_253, %c3_254] : memref<8x16xf32, #tpu.memory_space<smem>>
    %277 = vector.broadcast %276 : f32 to vector<2x128xf32>
    %278 = arith.mulf %275, %277 : vector<2x128xf32>
    %279 = arith.addf %273, %278 : vector<2x128xf32>
    %c0_255 = arith.constant 0 : index
    %c2_256 = arith.constant 2 : index
    %c0_257 = arith.constant 0 : index
    %c0_258 = arith.constant 0 : index
    %280 = vector.load %arg3[%c0_255, %c2_256, %c0_257, %c0_258] : memref<1x8x2x128xf32, #tpu.memory_space<vmem>>, vector<1x1x2x128xf32>
    %281 = vector.shape_cast %280 : vector<1x1x2x128xf32> to vector<2x128xf32>
    %c2_259 = arith.constant 2 : index
    %c3_260 = arith.constant 3 : index
    %282 = memref.load %arg6[%c2_259, %c3_260] : memref<8x16xf32, #tpu.memory_space<smem>>
    %283 = vector.broadcast %282 : f32 to vector<2x128xf32>
    %284 = arith.mulf %281, %283 : vector<2x128xf32>
    %285 = arith.addf %279, %284 : vector<2x128xf32>
    %c0_261 = arith.constant 0 : index
    %c3_262 = arith.constant 3 : index
    %c0_263 = arith.constant 0 : index
    %c0_264 = arith.constant 0 : index
    %286 = vector.load %arg3[%c0_261, %c3_262, %c0_263, %c0_264] : memref<1x8x2x128xf32, #tpu.memory_space<vmem>>, vector<1x1x2x128xf32>
    %287 = vector.shape_cast %286 : vector<1x1x2x128xf32> to vector<2x128xf32>
    %c3_265 = arith.constant 3 : index
    %c3_266 = arith.constant 3 : index
    %288 = memref.load %arg6[%c3_265, %c3_266] : memref<8x16xf32, #tpu.memory_space<smem>>
    %289 = vector.broadcast %288 : f32 to vector<2x128xf32>
    %290 = arith.mulf %287, %289 : vector<2x128xf32>
    %291 = arith.addf %285, %290 : vector<2x128xf32>
    %c0_267 = arith.constant 0 : index
    %c4_268 = arith.constant 4 : index
    %c0_269 = arith.constant 0 : index
    %c0_270 = arith.constant 0 : index
    %292 = vector.load %arg3[%c0_267, %c4_268, %c0_269, %c0_270] : memref<1x8x2x128xf32, #tpu.memory_space<vmem>>, vector<1x1x2x128xf32>
    %293 = vector.shape_cast %292 : vector<1x1x2x128xf32> to vector<2x128xf32>
    %c4_271 = arith.constant 4 : index
    %c3_272 = arith.constant 3 : index
    %294 = memref.load %arg6[%c4_271, %c3_272] : memref<8x16xf32, #tpu.memory_space<smem>>
    %295 = vector.broadcast %294 : f32 to vector<2x128xf32>
    %296 = arith.mulf %293, %295 : vector<2x128xf32>
    %297 = arith.addf %291, %296 : vector<2x128xf32>
    %c0_273 = arith.constant 0 : index
    %c5_274 = arith.constant 5 : index
    %c0_275 = arith.constant 0 : index
    %c0_276 = arith.constant 0 : index
    %298 = vector.load %arg3[%c0_273, %c5_274, %c0_275, %c0_276] : memref<1x8x2x128xf32, #tpu.memory_space<vmem>>, vector<1x1x2x128xf32>
    %299 = vector.shape_cast %298 : vector<1x1x2x128xf32> to vector<2x128xf32>
    %c5_277 = arith.constant 5 : index
    %c3_278 = arith.constant 3 : index
    %300 = memref.load %arg6[%c5_277, %c3_278] : memref<8x16xf32, #tpu.memory_space<smem>>
    %301 = vector.broadcast %300 : f32 to vector<2x128xf32>
    %302 = arith.mulf %299, %301 : vector<2x128xf32>
    %303 = arith.addf %297, %302 : vector<2x128xf32>
    %c0_279 = arith.constant 0 : index
    %c6_280 = arith.constant 6 : index
    %c0_281 = arith.constant 0 : index
    %c0_282 = arith.constant 0 : index
    %304 = vector.load %arg3[%c0_279, %c6_280, %c0_281, %c0_282] : memref<1x8x2x128xf32, #tpu.memory_space<vmem>>, vector<1x1x2x128xf32>
    %305 = vector.shape_cast %304 : vector<1x1x2x128xf32> to vector<2x128xf32>
    %c6_283 = arith.constant 6 : index
    %c3_284 = arith.constant 3 : index
    %306 = memref.load %arg6[%c6_283, %c3_284] : memref<8x16xf32, #tpu.memory_space<smem>>
    %307 = vector.broadcast %306 : f32 to vector<2x128xf32>
    %308 = arith.mulf %305, %307 : vector<2x128xf32>
    %309 = arith.addf %303, %308 : vector<2x128xf32>
    %c0_285 = arith.constant 0 : index
    %c7_286 = arith.constant 7 : index
    %c0_287 = arith.constant 0 : index
    %c0_288 = arith.constant 0 : index
    %310 = vector.load %arg3[%c0_285, %c7_286, %c0_287, %c0_288] : memref<1x8x2x128xf32, #tpu.memory_space<vmem>>, vector<1x1x2x128xf32>
    %311 = vector.shape_cast %310 : vector<1x1x2x128xf32> to vector<2x128xf32>
    %c7_289 = arith.constant 7 : index
    %c3_290 = arith.constant 3 : index
    %312 = memref.load %arg6[%c7_289, %c3_290] : memref<8x16xf32, #tpu.memory_space<smem>>
    %313 = vector.broadcast %312 : f32 to vector<2x128xf32>
    %314 = arith.mulf %311, %313 : vector<2x128xf32>
    %315 = arith.addf %309, %314 : vector<2x128xf32>
    %c3_291 = arith.constant 3 : index
    %316 = memref.load %arg5[%c3_291] : memref<16xf32, #tpu.memory_space<smem>>
    %c3_292 = arith.constant 3 : index
    %317 = memref.load %arg7[%c3_292] : memref<16xf32, #tpu.memory_space<smem>>
    %318 = arith.addf %316, %317 : f32
    %319 = vector.broadcast %318 : f32 to vector<2x128xf32>
    %320 = arith.addf %315, %319 : vector<2x128xf32>
    %cst_293 = arith.constant 0.000000e+00 : f32
    %321 = vector.broadcast %cst_293 : f32 to vector<2x128xf32>
    %322 = arith.maximumf %320, %321 : vector<2x128xf32>
    %c3_294 = arith.constant 3 : index
    %323 = memref.load %arg8[%c3_294] : memref<16xf32, #tpu.memory_space<smem>>
    %324 = vector.broadcast %323 : f32 to vector<2x128xf32>
    %325 = arith.mulf %322, %324 : vector<2x128xf32>
    %326 = arith.addf %244, %325 : vector<2x128xf32>
    %c0_295 = arith.constant 0 : index
    %c0_296 = arith.constant 0 : index
    %c0_297 = arith.constant 0 : index
    %c0_298 = arith.constant 0 : index
    %327 = vector.load %arg2[%c0_295, %c0_296, %c0_297, %c0_298] : memref<1x4x2x128xf32, #tpu.memory_space<vmem>>, vector<1x1x2x128xf32>
    %328 = vector.shape_cast %327 : vector<1x1x2x128xf32> to vector<2x128xf32>
    %c0_299 = arith.constant 0 : index
    %c4_300 = arith.constant 4 : index
    %329 = memref.load %arg4[%c0_299, %c4_300] : memref<4x16xf32, #tpu.memory_space<smem>>
    %330 = vector.broadcast %329 : f32 to vector<2x128xf32>
    %331 = arith.mulf %328, %330 : vector<2x128xf32>
    %c0_301 = arith.constant 0 : index
    %c1_302 = arith.constant 1 : index
    %c0_303 = arith.constant 0 : index
    %c0_304 = arith.constant 0 : index
    %332 = vector.load %arg2[%c0_301, %c1_302, %c0_303, %c0_304] : memref<1x4x2x128xf32, #tpu.memory_space<vmem>>, vector<1x1x2x128xf32>
    %333 = vector.shape_cast %332 : vector<1x1x2x128xf32> to vector<2x128xf32>
    %c1_305 = arith.constant 1 : index
    %c4_306 = arith.constant 4 : index
    %334 = memref.load %arg4[%c1_305, %c4_306] : memref<4x16xf32, #tpu.memory_space<smem>>
    %335 = vector.broadcast %334 : f32 to vector<2x128xf32>
    %336 = arith.mulf %333, %335 : vector<2x128xf32>
    %337 = arith.addf %331, %336 : vector<2x128xf32>
    %c0_307 = arith.constant 0 : index
    %c2_308 = arith.constant 2 : index
    %c0_309 = arith.constant 0 : index
    %c0_310 = arith.constant 0 : index
    %338 = vector.load %arg2[%c0_307, %c2_308, %c0_309, %c0_310] : memref<1x4x2x128xf32, #tpu.memory_space<vmem>>, vector<1x1x2x128xf32>
    %339 = vector.shape_cast %338 : vector<1x1x2x128xf32> to vector<2x128xf32>
    %c2_311 = arith.constant 2 : index
    %c4_312 = arith.constant 4 : index
    %340 = memref.load %arg4[%c2_311, %c4_312] : memref<4x16xf32, #tpu.memory_space<smem>>
    %341 = vector.broadcast %340 : f32 to vector<2x128xf32>
    %342 = arith.mulf %339, %341 : vector<2x128xf32>
    %343 = arith.addf %337, %342 : vector<2x128xf32>
    %c0_313 = arith.constant 0 : index
    %c3_314 = arith.constant 3 : index
    %c0_315 = arith.constant 0 : index
    %c0_316 = arith.constant 0 : index
    %344 = vector.load %arg2[%c0_313, %c3_314, %c0_315, %c0_316] : memref<1x4x2x128xf32, #tpu.memory_space<vmem>>, vector<1x1x2x128xf32>
    %345 = vector.shape_cast %344 : vector<1x1x2x128xf32> to vector<2x128xf32>
    %c3_317 = arith.constant 3 : index
    %c4_318 = arith.constant 4 : index
    %346 = memref.load %arg4[%c3_317, %c4_318] : memref<4x16xf32, #tpu.memory_space<smem>>
    %347 = vector.broadcast %346 : f32 to vector<2x128xf32>
    %348 = arith.mulf %345, %347 : vector<2x128xf32>
    %349 = arith.addf %343, %348 : vector<2x128xf32>
    %c0_319 = arith.constant 0 : index
    %c0_320 = arith.constant 0 : index
    %c0_321 = arith.constant 0 : index
    %c0_322 = arith.constant 0 : index
    %350 = vector.load %arg3[%c0_319, %c0_320, %c0_321, %c0_322] : memref<1x8x2x128xf32, #tpu.memory_space<vmem>>, vector<1x1x2x128xf32>
    %351 = vector.shape_cast %350 : vector<1x1x2x128xf32> to vector<2x128xf32>
    %c0_323 = arith.constant 0 : index
    %c4_324 = arith.constant 4 : index
    %352 = memref.load %arg6[%c0_323, %c4_324] : memref<8x16xf32, #tpu.memory_space<smem>>
    %353 = vector.broadcast %352 : f32 to vector<2x128xf32>
    %354 = arith.mulf %351, %353 : vector<2x128xf32>
    %355 = arith.addf %349, %354 : vector<2x128xf32>
    %c0_325 = arith.constant 0 : index
    %c1_326 = arith.constant 1 : index
    %c0_327 = arith.constant 0 : index
    %c0_328 = arith.constant 0 : index
    %356 = vector.load %arg3[%c0_325, %c1_326, %c0_327, %c0_328] : memref<1x8x2x128xf32, #tpu.memory_space<vmem>>, vector<1x1x2x128xf32>
    %357 = vector.shape_cast %356 : vector<1x1x2x128xf32> to vector<2x128xf32>
    %c1_329 = arith.constant 1 : index
    %c4_330 = arith.constant 4 : index
    %358 = memref.load %arg6[%c1_329, %c4_330] : memref<8x16xf32, #tpu.memory_space<smem>>
    %359 = vector.broadcast %358 : f32 to vector<2x128xf32>
    %360 = arith.mulf %357, %359 : vector<2x128xf32>
    %361 = arith.addf %355, %360 : vector<2x128xf32>
    %c0_331 = arith.constant 0 : index
    %c2_332 = arith.constant 2 : index
    %c0_333 = arith.constant 0 : index
    %c0_334 = arith.constant 0 : index
    %362 = vector.load %arg3[%c0_331, %c2_332, %c0_333, %c0_334] : memref<1x8x2x128xf32, #tpu.memory_space<vmem>>, vector<1x1x2x128xf32>
    %363 = vector.shape_cast %362 : vector<1x1x2x128xf32> to vector<2x128xf32>
    %c2_335 = arith.constant 2 : index
    %c4_336 = arith.constant 4 : index
    %364 = memref.load %arg6[%c2_335, %c4_336] : memref<8x16xf32, #tpu.memory_space<smem>>
    %365 = vector.broadcast %364 : f32 to vector<2x128xf32>
    %366 = arith.mulf %363, %365 : vector<2x128xf32>
    %367 = arith.addf %361, %366 : vector<2x128xf32>
    %c0_337 = arith.constant 0 : index
    %c3_338 = arith.constant 3 : index
    %c0_339 = arith.constant 0 : index
    %c0_340 = arith.constant 0 : index
    %368 = vector.load %arg3[%c0_337, %c3_338, %c0_339, %c0_340] : memref<1x8x2x128xf32, #tpu.memory_space<vmem>>, vector<1x1x2x128xf32>
    %369 = vector.shape_cast %368 : vector<1x1x2x128xf32> to vector<2x128xf32>
    %c3_341 = arith.constant 3 : index
    %c4_342 = arith.constant 4 : index
    %370 = memref.load %arg6[%c3_341, %c4_342] : memref<8x16xf32, #tpu.memory_space<smem>>
    %371 = vector.broadcast %370 : f32 to vector<2x128xf32>
    %372 = arith.mulf %369, %371 : vector<2x128xf32>
    %373 = arith.addf %367, %372 : vector<2x128xf32>
    %c0_343 = arith.constant 0 : index
    %c4_344 = arith.constant 4 : index
    %c0_345 = arith.constant 0 : index
    %c0_346 = arith.constant 0 : index
    %374 = vector.load %arg3[%c0_343, %c4_344, %c0_345, %c0_346] : memref<1x8x2x128xf32, #tpu.memory_space<vmem>>, vector<1x1x2x128xf32>
    %375 = vector.shape_cast %374 : vector<1x1x2x128xf32> to vector<2x128xf32>
    %c4_347 = arith.constant 4 : index
    %c4_348 = arith.constant 4 : index
    %376 = memref.load %arg6[%c4_347, %c4_348] : memref<8x16xf32, #tpu.memory_space<smem>>
    %377 = vector.broadcast %376 : f32 to vector<2x128xf32>
    %378 = arith.mulf %375, %377 : vector<2x128xf32>
    %379 = arith.addf %373, %378 : vector<2x128xf32>
    %c0_349 = arith.constant 0 : index
    %c5_350 = arith.constant 5 : index
    %c0_351 = arith.constant 0 : index
    %c0_352 = arith.constant 0 : index
    %380 = vector.load %arg3[%c0_349, %c5_350, %c0_351, %c0_352] : memref<1x8x2x128xf32, #tpu.memory_space<vmem>>, vector<1x1x2x128xf32>
    %381 = vector.shape_cast %380 : vector<1x1x2x128xf32> to vector<2x128xf32>
    %c5_353 = arith.constant 5 : index
    %c4_354 = arith.constant 4 : index
    %382 = memref.load %arg6[%c5_353, %c4_354] : memref<8x16xf32, #tpu.memory_space<smem>>
    %383 = vector.broadcast %382 : f32 to vector<2x128xf32>
    %384 = arith.mulf %381, %383 : vector<2x128xf32>
    %385 = arith.addf %379, %384 : vector<2x128xf32>
    %c0_355 = arith.constant 0 : index
    %c6_356 = arith.constant 6 : index
    %c0_357 = arith.constant 0 : index
    %c0_358 = arith.constant 0 : index
    %386 = vector.load %arg3[%c0_355, %c6_356, %c0_357, %c0_358] : memref<1x8x2x128xf32, #tpu.memory_space<vmem>>, vector<1x1x2x128xf32>
    %387 = vector.shape_cast %386 : vector<1x1x2x128xf32> to vector<2x128xf32>
    %c6_359 = arith.constant 6 : index
    %c4_360 = arith.constant 4 : index
    %388 = memref.load %arg6[%c6_359, %c4_360] : memref<8x16xf32, #tpu.memory_space<smem>>
    %389 = vector.broadcast %388 : f32 to vector<2x128xf32>
    %390 = arith.mulf %387, %389 : vector<2x128xf32>
    %391 = arith.addf %385, %390 : vector<2x128xf32>
    %c0_361 = arith.constant 0 : index
    %c7_362 = arith.constant 7 : index
    %c0_363 = arith.constant 0 : index
    %c0_364 = arith.constant 0 : index
    %392 = vector.load %arg3[%c0_361, %c7_362, %c0_363, %c0_364] : memref<1x8x2x128xf32, #tpu.memory_space<vmem>>, vector<1x1x2x128xf32>
    %393 = vector.shape_cast %392 : vector<1x1x2x128xf32> to vector<2x128xf32>
    %c7_365 = arith.constant 7 : index
    %c4_366 = arith.constant 4 : index
    %394 = memref.load %arg6[%c7_365, %c4_366] : memref<8x16xf32, #tpu.memory_space<smem>>
    %395 = vector.broadcast %394 : f32 to vector<2x128xf32>
    %396 = arith.mulf %393, %395 : vector<2x128xf32>
    %397 = arith.addf %391, %396 : vector<2x128xf32>
    %c4_367 = arith.constant 4 : index
    %398 = memref.load %arg5[%c4_367] : memref<16xf32, #tpu.memory_space<smem>>
    %c4_368 = arith.constant 4 : index
    %399 = memref.load %arg7[%c4_368] : memref<16xf32, #tpu.memory_space<smem>>
    %400 = arith.addf %398, %399 : f32
    %401 = vector.broadcast %400 : f32 to vector<2x128xf32>
    %402 = arith.addf %397, %401 : vector<2x128xf32>
    %cst_369 = arith.constant 0.000000e+00 : f32
    %403 = vector.broadcast %cst_369 : f32 to vector<2x128xf32>
    %404 = arith.maximumf %402, %403 : vector<2x128xf32>
    %c4_370 = arith.constant 4 : index
    %405 = memref.load %arg8[%c4_370] : memref<16xf32, #tpu.memory_space<smem>>
    %406 = vector.broadcast %405 : f32 to vector<2x128xf32>
    %407 = arith.mulf %404, %406 : vector<2x128xf32>
    %408 = arith.addf %326, %407 : vector<2x128xf32>
    %c0_371 = arith.constant 0 : index
    %c0_372 = arith.constant 0 : index
    %c0_373 = arith.constant 0 : index
    %c0_374 = arith.constant 0 : index
    %409 = vector.load %arg2[%c0_371, %c0_372, %c0_373, %c0_374] : memref<1x4x2x128xf32, #tpu.memory_space<vmem>>, vector<1x1x2x128xf32>
    %410 = vector.shape_cast %409 : vector<1x1x2x128xf32> to vector<2x128xf32>
    %c0_375 = arith.constant 0 : index
    %c5_376 = arith.constant 5 : index
    %411 = memref.load %arg4[%c0_375, %c5_376] : memref<4x16xf32, #tpu.memory_space<smem>>
    %412 = vector.broadcast %411 : f32 to vector<2x128xf32>
    %413 = arith.mulf %410, %412 : vector<2x128xf32>
    %c0_377 = arith.constant 0 : index
    %c1_378 = arith.constant 1 : index
    %c0_379 = arith.constant 0 : index
    %c0_380 = arith.constant 0 : index
    %414 = vector.load %arg2[%c0_377, %c1_378, %c0_379, %c0_380] : memref<1x4x2x128xf32, #tpu.memory_space<vmem>>, vector<1x1x2x128xf32>
    %415 = vector.shape_cast %414 : vector<1x1x2x128xf32> to vector<2x128xf32>
    %c1_381 = arith.constant 1 : index
    %c5_382 = arith.constant 5 : index
    %416 = memref.load %arg4[%c1_381, %c5_382] : memref<4x16xf32, #tpu.memory_space<smem>>
    %417 = vector.broadcast %416 : f32 to vector<2x128xf32>
    %418 = arith.mulf %415, %417 : vector<2x128xf32>
    %419 = arith.addf %413, %418 : vector<2x128xf32>
    %c0_383 = arith.constant 0 : index
    %c2_384 = arith.constant 2 : index
    %c0_385 = arith.constant 0 : index
    %c0_386 = arith.constant 0 : index
    %420 = vector.load %arg2[%c0_383, %c2_384, %c0_385, %c0_386] : memref<1x4x2x128xf32, #tpu.memory_space<vmem>>, vector<1x1x2x128xf32>
    %421 = vector.shape_cast %420 : vector<1x1x2x128xf32> to vector<2x128xf32>
    %c2_387 = arith.constant 2 : index
    %c5_388 = arith.constant 5 : index
    %422 = memref.load %arg4[%c2_387, %c5_388] : memref<4x16xf32, #tpu.memory_space<smem>>
    %423 = vector.broadcast %422 : f32 to vector<2x128xf32>
    %424 = arith.mulf %421, %423 : vector<2x128xf32>
    %425 = arith.addf %419, %424 : vector<2x128xf32>
    %c0_389 = arith.constant 0 : index
    %c3_390 = arith.constant 3 : index
    %c0_391 = arith.constant 0 : index
    %c0_392 = arith.constant 0 : index
    %426 = vector.load %arg2[%c0_389, %c3_390, %c0_391, %c0_392] : memref<1x4x2x128xf32, #tpu.memory_space<vmem>>, vector<1x1x2x128xf32>
    %427 = vector.shape_cast %426 : vector<1x1x2x128xf32> to vector<2x128xf32>
    %c3_393 = arith.constant 3 : index
    %c5_394 = arith.constant 5 : index
    %428 = memref.load %arg4[%c3_393, %c5_394] : memref<4x16xf32, #tpu.memory_space<smem>>
    %429 = vector.broadcast %428 : f32 to vector<2x128xf32>
    %430 = arith.mulf %427, %429 : vector<2x128xf32>
    %431 = arith.addf %425, %430 : vector<2x128xf32>
    %c0_395 = arith.constant 0 : index
    %c0_396 = arith.constant 0 : index
    %c0_397 = arith.constant 0 : index
    %c0_398 = arith.constant 0 : index
    %432 = vector.load %arg3[%c0_395, %c0_396, %c0_397, %c0_398] : memref<1x8x2x128xf32, #tpu.memory_space<vmem>>, vector<1x1x2x128xf32>
    %433 = vector.shape_cast %432 : vector<1x1x2x128xf32> to vector<2x128xf32>
    %c0_399 = arith.constant 0 : index
    %c5_400 = arith.constant 5 : index
    %434 = memref.load %arg6[%c0_399, %c5_400] : memref<8x16xf32, #tpu.memory_space<smem>>
    %435 = vector.broadcast %434 : f32 to vector<2x128xf32>
    %436 = arith.mulf %433, %435 : vector<2x128xf32>
    %437 = arith.addf %431, %436 : vector<2x128xf32>
    %c0_401 = arith.constant 0 : index
    %c1_402 = arith.constant 1 : index
    %c0_403 = arith.constant 0 : index
    %c0_404 = arith.constant 0 : index
    %438 = vector.load %arg3[%c0_401, %c1_402, %c0_403, %c0_404] : memref<1x8x2x128xf32, #tpu.memory_space<vmem>>, vector<1x1x2x128xf32>
    %439 = vector.shape_cast %438 : vector<1x1x2x128xf32> to vector<2x128xf32>
    %c1_405 = arith.constant 1 : index
    %c5_406 = arith.constant 5 : index
    %440 = memref.load %arg6[%c1_405, %c5_406] : memref<8x16xf32, #tpu.memory_space<smem>>
    %441 = vector.broadcast %440 : f32 to vector<2x128xf32>
    %442 = arith.mulf %439, %441 : vector<2x128xf32>
    %443 = arith.addf %437, %442 : vector<2x128xf32>
    %c0_407 = arith.constant 0 : index
    %c2_408 = arith.constant 2 : index
    %c0_409 = arith.constant 0 : index
    %c0_410 = arith.constant 0 : index
    %444 = vector.load %arg3[%c0_407, %c2_408, %c0_409, %c0_410] : memref<1x8x2x128xf32, #tpu.memory_space<vmem>>, vector<1x1x2x128xf32>
    %445 = vector.shape_cast %444 : vector<1x1x2x128xf32> to vector<2x128xf32>
    %c2_411 = arith.constant 2 : index
    %c5_412 = arith.constant 5 : index
    %446 = memref.load %arg6[%c2_411, %c5_412] : memref<8x16xf32, #tpu.memory_space<smem>>
    %447 = vector.broadcast %446 : f32 to vector<2x128xf32>
    %448 = arith.mulf %445, %447 : vector<2x128xf32>
    %449 = arith.addf %443, %448 : vector<2x128xf32>
    %c0_413 = arith.constant 0 : index
    %c3_414 = arith.constant 3 : index
    %c0_415 = arith.constant 0 : index
    %c0_416 = arith.constant 0 : index
    %450 = vector.load %arg3[%c0_413, %c3_414, %c0_415, %c0_416] : memref<1x8x2x128xf32, #tpu.memory_space<vmem>>, vector<1x1x2x128xf32>
    %451 = vector.shape_cast %450 : vector<1x1x2x128xf32> to vector<2x128xf32>
    %c3_417 = arith.constant 3 : index
    %c5_418 = arith.constant 5 : index
    %452 = memref.load %arg6[%c3_417, %c5_418] : memref<8x16xf32, #tpu.memory_space<smem>>
    %453 = vector.broadcast %452 : f32 to vector<2x128xf32>
    %454 = arith.mulf %451, %453 : vector<2x128xf32>
    %455 = arith.addf %449, %454 : vector<2x128xf32>
    %c0_419 = arith.constant 0 : index
    %c4_420 = arith.constant 4 : index
    %c0_421 = arith.constant 0 : index
    %c0_422 = arith.constant 0 : index
    %456 = vector.load %arg3[%c0_419, %c4_420, %c0_421, %c0_422] : memref<1x8x2x128xf32, #tpu.memory_space<vmem>>, vector<1x1x2x128xf32>
    %457 = vector.shape_cast %456 : vector<1x1x2x128xf32> to vector<2x128xf32>
    %c4_423 = arith.constant 4 : index
    %c5_424 = arith.constant 5 : index
    %458 = memref.load %arg6[%c4_423, %c5_424] : memref<8x16xf32, #tpu.memory_space<smem>>
    %459 = vector.broadcast %458 : f32 to vector<2x128xf32>
    %460 = arith.mulf %457, %459 : vector<2x128xf32>
    %461 = arith.addf %455, %460 : vector<2x128xf32>
    %c0_425 = arith.constant 0 : index
    %c5_426 = arith.constant 5 : index
    %c0_427 = arith.constant 0 : index
    %c0_428 = arith.constant 0 : index
    %462 = vector.load %arg3[%c0_425, %c5_426, %c0_427, %c0_428] : memref<1x8x2x128xf32, #tpu.memory_space<vmem>>, vector<1x1x2x128xf32>
    %463 = vector.shape_cast %462 : vector<1x1x2x128xf32> to vector<2x128xf32>
    %c5_429 = arith.constant 5 : index
    %c5_430 = arith.constant 5 : index
    %464 = memref.load %arg6[%c5_429, %c5_430] : memref<8x16xf32, #tpu.memory_space<smem>>
    %465 = vector.broadcast %464 : f32 to vector<2x128xf32>
    %466 = arith.mulf %463, %465 : vector<2x128xf32>
    %467 = arith.addf %461, %466 : vector<2x128xf32>
    %c0_431 = arith.constant 0 : index
    %c6_432 = arith.constant 6 : index
    %c0_433 = arith.constant 0 : index
    %c0_434 = arith.constant 0 : index
    %468 = vector.load %arg3[%c0_431, %c6_432, %c0_433, %c0_434] : memref<1x8x2x128xf32, #tpu.memory_space<vmem>>, vector<1x1x2x128xf32>
    %469 = vector.shape_cast %468 : vector<1x1x2x128xf32> to vector<2x128xf32>
    %c6_435 = arith.constant 6 : index
    %c5_436 = arith.constant 5 : index
    %470 = memref.load %arg6[%c6_435, %c5_436] : memref<8x16xf32, #tpu.memory_space<smem>>
    %471 = vector.broadcast %470 : f32 to vector<2x128xf32>
    %472 = arith.mulf %469, %471 : vector<2x128xf32>
    %473 = arith.addf %467, %472 : vector<2x128xf32>
    %c0_437 = arith.constant 0 : index
    %c7_438 = arith.constant 7 : index
    %c0_439 = arith.constant 0 : index
    %c0_440 = arith.constant 0 : index
    %474 = vector.load %arg3[%c0_437, %c7_438, %c0_439, %c0_440] : memref<1x8x2x128xf32, #tpu.memory_space<vmem>>, vector<1x1x2x128xf32>
    %475 = vector.shape_cast %474 : vector<1x1x2x128xf32> to vector<2x128xf32>
    %c7_441 = arith.constant 7 : index
    %c5_442 = arith.constant 5 : index
    %476 = memref.load %arg6[%c7_441, %c5_442] : memref<8x16xf32, #tpu.memory_space<smem>>
    %477 = vector.broadcast %476 : f32 to vector<2x128xf32>
    %478 = arith.mulf %475, %477 : vector<2x128xf32>
    %479 = arith.addf %473, %478 : vector<2x128xf32>
    %c5_443 = arith.constant 5 : index
    %480 = memref.load %arg5[%c5_443] : memref<16xf32, #tpu.memory_space<smem>>
    %c5_444 = arith.constant 5 : index
    %481 = memref.load %arg7[%c5_444] : memref<16xf32, #tpu.memory_space<smem>>
    %482 = arith.addf %480, %481 : f32
    %483 = vector.broadcast %482 : f32 to vector<2x128xf32>
    %484 = arith.addf %479, %483 : vector<2x128xf32>
    %cst_445 = arith.constant 0.000000e+00 : f32
    %485 = vector.broadcast %cst_445 : f32 to vector<2x128xf32>
    %486 = arith.maximumf %484, %485 : vector<2x128xf32>
    %c5_446 = arith.constant 5 : index
    %487 = memref.load %arg8[%c5_446] : memref<16xf32, #tpu.memory_space<smem>>
    %488 = vector.broadcast %487 : f32 to vector<2x128xf32>
    %489 = arith.mulf %486, %488 : vector<2x128xf32>
    %490 = arith.addf %408, %489 : vector<2x128xf32>
    %c0_447 = arith.constant 0 : index
    %c0_448 = arith.constant 0 : index
    %c0_449 = arith.constant 0 : index
    %c0_450 = arith.constant 0 : index
    %491 = vector.load %arg2[%c0_447, %c0_448, %c0_449, %c0_450] : memref<1x4x2x128xf32, #tpu.memory_space<vmem>>, vector<1x1x2x128xf32>
    %492 = vector.shape_cast %491 : vector<1x1x2x128xf32> to vector<2x128xf32>
    %c0_451 = arith.constant 0 : index
    %c6_452 = arith.constant 6 : index
    %493 = memref.load %arg4[%c0_451, %c6_452] : memref<4x16xf32, #tpu.memory_space<smem>>
    %494 = vector.broadcast %493 : f32 to vector<2x128xf32>
    %495 = arith.mulf %492, %494 : vector<2x128xf32>
    %c0_453 = arith.constant 0 : index
    %c1_454 = arith.constant 1 : index
    %c0_455 = arith.constant 0 : index
    %c0_456 = arith.constant 0 : index
    %496 = vector.load %arg2[%c0_453, %c1_454, %c0_455, %c0_456] : memref<1x4x2x128xf32, #tpu.memory_space<vmem>>, vector<1x1x2x128xf32>
    %497 = vector.shape_cast %496 : vector<1x1x2x128xf32> to vector<2x128xf32>
    %c1_457 = arith.constant 1 : index
    %c6_458 = arith.constant 6 : index
    %498 = memref.load %arg4[%c1_457, %c6_458] : memref<4x16xf32, #tpu.memory_space<smem>>
    %499 = vector.broadcast %498 : f32 to vector<2x128xf32>
    %500 = arith.mulf %497, %499 : vector<2x128xf32>
    %501 = arith.addf %495, %500 : vector<2x128xf32>
    %c0_459 = arith.constant 0 : index
    %c2_460 = arith.constant 2 : index
    %c0_461 = arith.constant 0 : index
    %c0_462 = arith.constant 0 : index
    %502 = vector.load %arg2[%c0_459, %c2_460, %c0_461, %c0_462] : memref<1x4x2x128xf32, #tpu.memory_space<vmem>>, vector<1x1x2x128xf32>
    %503 = vector.shape_cast %502 : vector<1x1x2x128xf32> to vector<2x128xf32>
    %c2_463 = arith.constant 2 : index
    %c6_464 = arith.constant 6 : index
    %504 = memref.load %arg4[%c2_463, %c6_464] : memref<4x16xf32, #tpu.memory_space<smem>>
    %505 = vector.broadcast %504 : f32 to vector<2x128xf32>
    %506 = arith.mulf %503, %505 : vector<2x128xf32>
    %507 = arith.addf %501, %506 : vector<2x128xf32>
    %c0_465 = arith.constant 0 : index
    %c3_466 = arith.constant 3 : index
    %c0_467 = arith.constant 0 : index
    %c0_468 = arith.constant 0 : index
    %508 = vector.load %arg2[%c0_465, %c3_466, %c0_467, %c0_468] : memref<1x4x2x128xf32, #tpu.memory_space<vmem>>, vector<1x1x2x128xf32>
    %509 = vector.shape_cast %508 : vector<1x1x2x128xf32> to vector<2x128xf32>
    %c3_469 = arith.constant 3 : index
    %c6_470 = arith.constant 6 : index
    %510 = memref.load %arg4[%c3_469, %c6_470] : memref<4x16xf32, #tpu.memory_space<smem>>
    %511 = vector.broadcast %510 : f32 to vector<2x128xf32>
    %512 = arith.mulf %509, %511 : vector<2x128xf32>
    %513 = arith.addf %507, %512 : vector<2x128xf32>
    %c0_471 = arith.constant 0 : index
    %c0_472 = arith.constant 0 : index
    %c0_473 = arith.constant 0 : index
    %c0_474 = arith.constant 0 : index
    %514 = vector.load %arg3[%c0_471, %c0_472, %c0_473, %c0_474] : memref<1x8x2x128xf32, #tpu.memory_space<vmem>>, vector<1x1x2x128xf32>
    %515 = vector.shape_cast %514 : vector<1x1x2x128xf32> to vector<2x128xf32>
    %c0_475 = arith.constant 0 : index
    %c6_476 = arith.constant 6 : index
    %516 = memref.load %arg6[%c0_475, %c6_476] : memref<8x16xf32, #tpu.memory_space<smem>>
    %517 = vector.broadcast %516 : f32 to vector<2x128xf32>
    %518 = arith.mulf %515, %517 : vector<2x128xf32>
    %519 = arith.addf %513, %518 : vector<2x128xf32>
    %c0_477 = arith.constant 0 : index
    %c1_478 = arith.constant 1 : index
    %c0_479 = arith.constant 0 : index
    %c0_480 = arith.constant 0 : index
    %520 = vector.load %arg3[%c0_477, %c1_478, %c0_479, %c0_480] : memref<1x8x2x128xf32, #tpu.memory_space<vmem>>, vector<1x1x2x128xf32>
    %521 = vector.shape_cast %520 : vector<1x1x2x128xf32> to vector<2x128xf32>
    %c1_481 = arith.constant 1 : index
    %c6_482 = arith.constant 6 : index
    %522 = memref.load %arg6[%c1_481, %c6_482] : memref<8x16xf32, #tpu.memory_space<smem>>
    %523 = vector.broadcast %522 : f32 to vector<2x128xf32>
    %524 = arith.mulf %521, %523 : vector<2x128xf32>
    %525 = arith.addf %519, %524 : vector<2x128xf32>
    %c0_483 = arith.constant 0 : index
    %c2_484 = arith.constant 2 : index
    %c0_485 = arith.constant 0 : index
    %c0_486 = arith.constant 0 : index
    %526 = vector.load %arg3[%c0_483, %c2_484, %c0_485, %c0_486] : memref<1x8x2x128xf32, #tpu.memory_space<vmem>>, vector<1x1x2x128xf32>
    %527 = vector.shape_cast %526 : vector<1x1x2x128xf32> to vector<2x128xf32>
    %c2_487 = arith.constant 2 : index
    %c6_488 = arith.constant 6 : index
    %528 = memref.load %arg6[%c2_487, %c6_488] : memref<8x16xf32, #tpu.memory_space<smem>>
    %529 = vector.broadcast %528 : f32 to vector<2x128xf32>
    %530 = arith.mulf %527, %529 : vector<2x128xf32>
    %531 = arith.addf %525, %530 : vector<2x128xf32>
    %c0_489 = arith.constant 0 : index
    %c3_490 = arith.constant 3 : index
    %c0_491 = arith.constant 0 : index
    %c0_492 = arith.constant 0 : index
    %532 = vector.load %arg3[%c0_489, %c3_490, %c0_491, %c0_492] : memref<1x8x2x128xf32, #tpu.memory_space<vmem>>, vector<1x1x2x128xf32>
    %533 = vector.shape_cast %532 : vector<1x1x2x128xf32> to vector<2x128xf32>
    %c3_493 = arith.constant 3 : index
    %c6_494 = arith.constant 6 : index
    %534 = memref.load %arg6[%c3_493, %c6_494] : memref<8x16xf32, #tpu.memory_space<smem>>
    %535 = vector.broadcast %534 : f32 to vector<2x128xf32>
    %536 = arith.mulf %533, %535 : vector<2x128xf32>
    %537 = arith.addf %531, %536 : vector<2x128xf32>
    %c0_495 = arith.constant 0 : index
    %c4_496 = arith.constant 4 : index
    %c0_497 = arith.constant 0 : index
    %c0_498 = arith.constant 0 : index
    %538 = vector.load %arg3[%c0_495, %c4_496, %c0_497, %c0_498] : memref<1x8x2x128xf32, #tpu.memory_space<vmem>>, vector<1x1x2x128xf32>
    %539 = vector.shape_cast %538 : vector<1x1x2x128xf32> to vector<2x128xf32>
    %c4_499 = arith.constant 4 : index
    %c6_500 = arith.constant 6 : index
    %540 = memref.load %arg6[%c4_499, %c6_500] : memref<8x16xf32, #tpu.memory_space<smem>>
    %541 = vector.broadcast %540 : f32 to vector<2x128xf32>
    %542 = arith.mulf %539, %541 : vector<2x128xf32>
    %543 = arith.addf %537, %542 : vector<2x128xf32>
    %c0_501 = arith.constant 0 : index
    %c5_502 = arith.constant 5 : index
    %c0_503 = arith.constant 0 : index
    %c0_504 = arith.constant 0 : index
    %544 = vector.load %arg3[%c0_501, %c5_502, %c0_503, %c0_504] : memref<1x8x2x128xf32, #tpu.memory_space<vmem>>, vector<1x1x2x128xf32>
    %545 = vector.shape_cast %544 : vector<1x1x2x128xf32> to vector<2x128xf32>
    %c5_505 = arith.constant 5 : index
    %c6_506 = arith.constant 6 : index
    %546 = memref.load %arg6[%c5_505, %c6_506] : memref<8x16xf32, #tpu.memory_space<smem>>
    %547 = vector.broadcast %546 : f32 to vector<2x128xf32>
    %548 = arith.mulf %545, %547 : vector<2x128xf32>
    %549 = arith.addf %543, %548 : vector<2x128xf32>
    %c0_507 = arith.constant 0 : index
    %c6_508 = arith.constant 6 : index
    %c0_509 = arith.constant 0 : index
    %c0_510 = arith.constant 0 : index
    %550 = vector.load %arg3[%c0_507, %c6_508, %c0_509, %c0_510] : memref<1x8x2x128xf32, #tpu.memory_space<vmem>>, vector<1x1x2x128xf32>
    %551 = vector.shape_cast %550 : vector<1x1x2x128xf32> to vector<2x128xf32>
    %c6_511 = arith.constant 6 : index
    %c6_512 = arith.constant 6 : index
    %552 = memref.load %arg6[%c6_511, %c6_512] : memref<8x16xf32, #tpu.memory_space<smem>>
    %553 = vector.broadcast %552 : f32 to vector<2x128xf32>
    %554 = arith.mulf %551, %553 : vector<2x128xf32>
    %555 = arith.addf %549, %554 : vector<2x128xf32>
    %c0_513 = arith.constant 0 : index
    %c7_514 = arith.constant 7 : index
    %c0_515 = arith.constant 0 : index
    %c0_516 = arith.constant 0 : index
    %556 = vector.load %arg3[%c0_513, %c7_514, %c0_515, %c0_516] : memref<1x8x2x128xf32, #tpu.memory_space<vmem>>, vector<1x1x2x128xf32>
    %557 = vector.shape_cast %556 : vector<1x1x2x128xf32> to vector<2x128xf32>
    %c7_517 = arith.constant 7 : index
    %c6_518 = arith.constant 6 : index
    %558 = memref.load %arg6[%c7_517, %c6_518] : memref<8x16xf32, #tpu.memory_space<smem>>
    %559 = vector.broadcast %558 : f32 to vector<2x128xf32>
    %560 = arith.mulf %557, %559 : vector<2x128xf32>
    %561 = arith.addf %555, %560 : vector<2x128xf32>
    %c6_519 = arith.constant 6 : index
    %562 = memref.load %arg5[%c6_519] : memref<16xf32, #tpu.memory_space<smem>>
    %c6_520 = arith.constant 6 : index
    %563 = memref.load %arg7[%c6_520] : memref<16xf32, #tpu.memory_space<smem>>
    %564 = arith.addf %562, %563 : f32
    %565 = vector.broadcast %564 : f32 to vector<2x128xf32>
    %566 = arith.addf %561, %565 : vector<2x128xf32>
    %cst_521 = arith.constant 0.000000e+00 : f32
    %567 = vector.broadcast %cst_521 : f32 to vector<2x128xf32>
    %568 = arith.maximumf %566, %567 : vector<2x128xf32>
    %c6_522 = arith.constant 6 : index
    %569 = memref.load %arg8[%c6_522] : memref<16xf32, #tpu.memory_space<smem>>
    %570 = vector.broadcast %569 : f32 to vector<2x128xf32>
    %571 = arith.mulf %568, %570 : vector<2x128xf32>
    %572 = arith.addf %490, %571 : vector<2x128xf32>
    %c0_523 = arith.constant 0 : index
    %c0_524 = arith.constant 0 : index
    %c0_525 = arith.constant 0 : index
    %c0_526 = arith.constant 0 : index
    %573 = vector.load %arg2[%c0_523, %c0_524, %c0_525, %c0_526] : memref<1x4x2x128xf32, #tpu.memory_space<vmem>>, vector<1x1x2x128xf32>
    %574 = vector.shape_cast %573 : vector<1x1x2x128xf32> to vector<2x128xf32>
    %c0_527 = arith.constant 0 : index
    %c7_528 = arith.constant 7 : index
    %575 = memref.load %arg4[%c0_527, %c7_528] : memref<4x16xf32, #tpu.memory_space<smem>>
    %576 = vector.broadcast %575 : f32 to vector<2x128xf32>
    %577 = arith.mulf %574, %576 : vector<2x128xf32>
    %c0_529 = arith.constant 0 : index
    %c1_530 = arith.constant 1 : index
    %c0_531 = arith.constant 0 : index
    %c0_532 = arith.constant 0 : index
    %578 = vector.load %arg2[%c0_529, %c1_530, %c0_531, %c0_532] : memref<1x4x2x128xf32, #tpu.memory_space<vmem>>, vector<1x1x2x128xf32>
    %579 = vector.shape_cast %578 : vector<1x1x2x128xf32> to vector<2x128xf32>
    %c1_533 = arith.constant 1 : index
    %c7_534 = arith.constant 7 : index
    %580 = memref.load %arg4[%c1_533, %c7_534] : memref<4x16xf32, #tpu.memory_space<smem>>
    %581 = vector.broadcast %580 : f32 to vector<2x128xf32>
    %582 = arith.mulf %579, %581 : vector<2x128xf32>
    %583 = arith.addf %577, %582 : vector<2x128xf32>
    %c0_535 = arith.constant 0 : index
    %c2_536 = arith.constant 2 : index
    %c0_537 = arith.constant 0 : index
    %c0_538 = arith.constant 0 : index
    %584 = vector.load %arg2[%c0_535, %c2_536, %c0_537, %c0_538] : memref<1x4x2x128xf32, #tpu.memory_space<vmem>>, vector<1x1x2x128xf32>
    %585 = vector.shape_cast %584 : vector<1x1x2x128xf32> to vector<2x128xf32>
    %c2_539 = arith.constant 2 : index
    %c7_540 = arith.constant 7 : index
    %586 = memref.load %arg4[%c2_539, %c7_540] : memref<4x16xf32, #tpu.memory_space<smem>>
    %587 = vector.broadcast %586 : f32 to vector<2x128xf32>
    %588 = arith.mulf %585, %587 : vector<2x128xf32>
    %589 = arith.addf %583, %588 : vector<2x128xf32>
    %c0_541 = arith.constant 0 : index
    %c3_542 = arith.constant 3 : index
    %c0_543 = arith.constant 0 : index
    %c0_544 = arith.constant 0 : index
    %590 = vector.load %arg2[%c0_541, %c3_542, %c0_543, %c0_544] : memref<1x4x2x128xf32, #tpu.memory_space<vmem>>, vector<1x1x2x128xf32>
    %591 = vector.shape_cast %590 : vector<1x1x2x128xf32> to vector<2x128xf32>
    %c3_545 = arith.constant 3 : index
    %c7_546 = arith.constant 7 : index
    %592 = memref.load %arg4[%c3_545, %c7_546] : memref<4x16xf32, #tpu.memory_space<smem>>
    %593 = vector.broadcast %592 : f32 to vector<2x128xf32>
    %594 = arith.mulf %591, %593 : vector<2x128xf32>
    %595 = arith.addf %589, %594 : vector<2x128xf32>
    %c0_547 = arith.constant 0 : index
    %c0_548 = arith.constant 0 : index
    %c0_549 = arith.constant 0 : index
    %c0_550 = arith.constant 0 : index
    %596 = vector.load %arg3[%c0_547, %c0_548, %c0_549, %c0_550] : memref<1x8x2x128xf32, #tpu.memory_space<vmem>>, vector<1x1x2x128xf32>
    %597 = vector.shape_cast %596 : vector<1x1x2x128xf32> to vector<2x128xf32>
    %c0_551 = arith.constant 0 : index
    %c7_552 = arith.constant 7 : index
    %598 = memref.load %arg6[%c0_551, %c7_552] : memref<8x16xf32, #tpu.memory_space<smem>>
    %599 = vector.broadcast %598 : f32 to vector<2x128xf32>
    %600 = arith.mulf %597, %599 : vector<2x128xf32>
    %601 = arith.addf %595, %600 : vector<2x128xf32>
    %c0_553 = arith.constant 0 : index
    %c1_554 = arith.constant 1 : index
    %c0_555 = arith.constant 0 : index
    %c0_556 = arith.constant 0 : index
    %602 = vector.load %arg3[%c0_553, %c1_554, %c0_555, %c0_556] : memref<1x8x2x128xf32, #tpu.memory_space<vmem>>, vector<1x1x2x128xf32>
    %603 = vector.shape_cast %602 : vector<1x1x2x128xf32> to vector<2x128xf32>
    %c1_557 = arith.constant 1 : index
    %c7_558 = arith.constant 7 : index
    %604 = memref.load %arg6[%c1_557, %c7_558] : memref<8x16xf32, #tpu.memory_space<smem>>
    %605 = vector.broadcast %604 : f32 to vector<2x128xf32>
    %606 = arith.mulf %603, %605 : vector<2x128xf32>
    %607 = arith.addf %601, %606 : vector<2x128xf32>
    %c0_559 = arith.constant 0 : index
    %c2_560 = arith.constant 2 : index
    %c0_561 = arith.constant 0 : index
    %c0_562 = arith.constant 0 : index
    %608 = vector.load %arg3[%c0_559, %c2_560, %c0_561, %c0_562] : memref<1x8x2x128xf32, #tpu.memory_space<vmem>>, vector<1x1x2x128xf32>
    %609 = vector.shape_cast %608 : vector<1x1x2x128xf32> to vector<2x128xf32>
    %c2_563 = arith.constant 2 : index
    %c7_564 = arith.constant 7 : index
    %610 = memref.load %arg6[%c2_563, %c7_564] : memref<8x16xf32, #tpu.memory_space<smem>>
    %611 = vector.broadcast %610 : f32 to vector<2x128xf32>
    %612 = arith.mulf %609, %611 : vector<2x128xf32>
    %613 = arith.addf %607, %612 : vector<2x128xf32>
    %c0_565 = arith.constant 0 : index
    %c3_566 = arith.constant 3 : index
    %c0_567 = arith.constant 0 : index
    %c0_568 = arith.constant 0 : index
    %614 = vector.load %arg3[%c0_565, %c3_566, %c0_567, %c0_568] : memref<1x8x2x128xf32, #tpu.memory_space<vmem>>, vector<1x1x2x128xf32>
    %615 = vector.shape_cast %614 : vector<1x1x2x128xf32> to vector<2x128xf32>
    %c3_569 = arith.constant 3 : index
    %c7_570 = arith.constant 7 : index
    %616 = memref.load %arg6[%c3_569, %c7_570] : memref<8x16xf32, #tpu.memory_space<smem>>
    %617 = vector.broadcast %616 : f32 to vector<2x128xf32>
    %618 = arith.mulf %615, %617 : vector<2x128xf32>
    %619 = arith.addf %613, %618 : vector<2x128xf32>
    %c0_571 = arith.constant 0 : index
    %c4_572 = arith.constant 4 : index
    %c0_573 = arith.constant 0 : index
    %c0_574 = arith.constant 0 : index
    %620 = vector.load %arg3[%c0_571, %c4_572, %c0_573, %c0_574] : memref<1x8x2x128xf32, #tpu.memory_space<vmem>>, vector<1x1x2x128xf32>
    %621 = vector.shape_cast %620 : vector<1x1x2x128xf32> to vector<2x128xf32>
    %c4_575 = arith.constant 4 : index
    %c7_576 = arith.constant 7 : index
    %622 = memref.load %arg6[%c4_575, %c7_576] : memref<8x16xf32, #tpu.memory_space<smem>>
    %623 = vector.broadcast %622 : f32 to vector<2x128xf32>
    %624 = arith.mulf %621, %623 : vector<2x128xf32>
    %625 = arith.addf %619, %624 : vector<2x128xf32>
    %c0_577 = arith.constant 0 : index
    %c5_578 = arith.constant 5 : index
    %c0_579 = arith.constant 0 : index
    %c0_580 = arith.constant 0 : index
    %626 = vector.load %arg3[%c0_577, %c5_578, %c0_579, %c0_580] : memref<1x8x2x128xf32, #tpu.memory_space<vmem>>, vector<1x1x2x128xf32>
    %627 = vector.shape_cast %626 : vector<1x1x2x128xf32> to vector<2x128xf32>
    %c5_581 = arith.constant 5 : index
    %c7_582 = arith.constant 7 : index
    %628 = memref.load %arg6[%c5_581, %c7_582] : memref<8x16xf32, #tpu.memory_space<smem>>
    %629 = vector.broadcast %628 : f32 to vector<2x128xf32>
    %630 = arith.mulf %627, %629 : vector<2x128xf32>
    %631 = arith.addf %625, %630 : vector<2x128xf32>
    %c0_583 = arith.constant 0 : index
    %c6_584 = arith.constant 6 : index
    %c0_585 = arith.constant 0 : index
    %c0_586 = arith.constant 0 : index
    %632 = vector.load %arg3[%c0_583, %c6_584, %c0_585, %c0_586] : memref<1x8x2x128xf32, #tpu.memory_space<vmem>>, vector<1x1x2x128xf32>
    %633 = vector.shape_cast %632 : vector<1x1x2x128xf32> to vector<2x128xf32>
    %c6_587 = arith.constant 6 : index
    %c7_588 = arith.constant 7 : index
    %634 = memref.load %arg6[%c6_587, %c7_588] : memref<8x16xf32, #tpu.memory_space<smem>>
    %635 = vector.broadcast %634 : f32 to vector<2x128xf32>
    %636 = arith.mulf %633, %635 : vector<2x128xf32>
    %637 = arith.addf %631, %636 : vector<2x128xf32>
    %c0_589 = arith.constant 0 : index
    %c7_590 = arith.constant 7 : index
    %c0_591 = arith.constant 0 : index
    %c0_592 = arith.constant 0 : index
    %638 = vector.load %arg3[%c0_589, %c7_590, %c0_591, %c0_592] : memref<1x8x2x128xf32, #tpu.memory_space<vmem>>, vector<1x1x2x128xf32>
    %639 = vector.shape_cast %638 : vector<1x1x2x128xf32> to vector<2x128xf32>
    %c7_593 = arith.constant 7 : index
    %c7_594 = arith.constant 7 : index
    %640 = memref.load %arg6[%c7_593, %c7_594] : memref<8x16xf32, #tpu.memory_space<smem>>
    %641 = vector.broadcast %640 : f32 to vector<2x128xf32>
    %642 = arith.mulf %639, %641 : vector<2x128xf32>
    %643 = arith.addf %637, %642 : vector<2x128xf32>
    %c7_595 = arith.constant 7 : index
    %644 = memref.load %arg5[%c7_595] : memref<16xf32, #tpu.memory_space<smem>>
    %c7_596 = arith.constant 7 : index
    %645 = memref.load %arg7[%c7_596] : memref<16xf32, #tpu.memory_space<smem>>
    %646 = arith.addf %644, %645 : f32
    %647 = vector.broadcast %646 : f32 to vector<2x128xf32>
    %648 = arith.addf %643, %647 : vector<2x128xf32>
    %cst_597 = arith.constant 0.000000e+00 : f32
    %649 = vector.broadcast %cst_597 : f32 to vector<2x128xf32>
    %650 = arith.maximumf %648, %649 : vector<2x128xf32>
    %c7_598 = arith.constant 7 : index
    %651 = memref.load %arg8[%c7_598] : memref<16xf32, #tpu.memory_space<smem>>
    %652 = vector.broadcast %651 : f32 to vector<2x128xf32>
    %653 = arith.mulf %650, %652 : vector<2x128xf32>
    %654 = arith.addf %572, %653 : vector<2x128xf32>
    %c0_599 = arith.constant 0 : index
    %c0_600 = arith.constant 0 : index
    %c0_601 = arith.constant 0 : index
    %c0_602 = arith.constant 0 : index
    %655 = vector.load %arg2[%c0_599, %c0_600, %c0_601, %c0_602] : memref<1x4x2x128xf32, #tpu.memory_space<vmem>>, vector<1x1x2x128xf32>
    %656 = vector.shape_cast %655 : vector<1x1x2x128xf32> to vector<2x128xf32>
    %c0_603 = arith.constant 0 : index
    %c8 = arith.constant 8 : index
    %657 = memref.load %arg4[%c0_603, %c8] : memref<4x16xf32, #tpu.memory_space<smem>>
    %658 = vector.broadcast %657 : f32 to vector<2x128xf32>
    %659 = arith.mulf %656, %658 : vector<2x128xf32>
    %c0_604 = arith.constant 0 : index
    %c1_605 = arith.constant 1 : index
    %c0_606 = arith.constant 0 : index
    %c0_607 = arith.constant 0 : index
    %660 = vector.load %arg2[%c0_604, %c1_605, %c0_606, %c0_607] : memref<1x4x2x128xf32, #tpu.memory_space<vmem>>, vector<1x1x2x128xf32>
    %661 = vector.shape_cast %660 : vector<1x1x2x128xf32> to vector<2x128xf32>
    %c1_608 = arith.constant 1 : index
    %c8_609 = arith.constant 8 : index
    %662 = memref.load %arg4[%c1_608, %c8_609] : memref<4x16xf32, #tpu.memory_space<smem>>
    %663 = vector.broadcast %662 : f32 to vector<2x128xf32>
    %664 = arith.mulf %661, %663 : vector<2x128xf32>
    %665 = arith.addf %659, %664 : vector<2x128xf32>
    %c0_610 = arith.constant 0 : index
    %c2_611 = arith.constant 2 : index
    %c0_612 = arith.constant 0 : index
    %c0_613 = arith.constant 0 : index
    %666 = vector.load %arg2[%c0_610, %c2_611, %c0_612, %c0_613] : memref<1x4x2x128xf32, #tpu.memory_space<vmem>>, vector<1x1x2x128xf32>
    %667 = vector.shape_cast %666 : vector<1x1x2x128xf32> to vector<2x128xf32>
    %c2_614 = arith.constant 2 : index
    %c8_615 = arith.constant 8 : index
    %668 = memref.load %arg4[%c2_614, %c8_615] : memref<4x16xf32, #tpu.memory_space<smem>>
    %669 = vector.broadcast %668 : f32 to vector<2x128xf32>
    %670 = arith.mulf %667, %669 : vector<2x128xf32>
    %671 = arith.addf %665, %670 : vector<2x128xf32>
    %c0_616 = arith.constant 0 : index
    %c3_617 = arith.constant 3 : index
    %c0_618 = arith.constant 0 : index
    %c0_619 = arith.constant 0 : index
    %672 = vector.load %arg2[%c0_616, %c3_617, %c0_618, %c0_619] : memref<1x4x2x128xf32, #tpu.memory_space<vmem>>, vector<1x1x2x128xf32>
    %673 = vector.shape_cast %672 : vector<1x1x2x128xf32> to vector<2x128xf32>
    %c3_620 = arith.constant 3 : index
    %c8_621 = arith.constant 8 : index
    %674 = memref.load %arg4[%c3_620, %c8_621] : memref<4x16xf32, #tpu.memory_space<smem>>
    %675 = vector.broadcast %674 : f32 to vector<2x128xf32>
    %676 = arith.mulf %673, %675 : vector<2x128xf32>
    %677 = arith.addf %671, %676 : vector<2x128xf32>
    %c0_622 = arith.constant 0 : index
    %c0_623 = arith.constant 0 : index
    %c0_624 = arith.constant 0 : index
    %c0_625 = arith.constant 0 : index
    %678 = vector.load %arg3[%c0_622, %c0_623, %c0_624, %c0_625] : memref<1x8x2x128xf32, #tpu.memory_space<vmem>>, vector<1x1x2x128xf32>
    %679 = vector.shape_cast %678 : vector<1x1x2x128xf32> to vector<2x128xf32>
    %c0_626 = arith.constant 0 : index
    %c8_627 = arith.constant 8 : index
    %680 = memref.load %arg6[%c0_626, %c8_627] : memref<8x16xf32, #tpu.memory_space<smem>>
    %681 = vector.broadcast %680 : f32 to vector<2x128xf32>
    %682 = arith.mulf %679, %681 : vector<2x128xf32>
    %683 = arith.addf %677, %682 : vector<2x128xf32>
    %c0_628 = arith.constant 0 : index
    %c1_629 = arith.constant 1 : index
    %c0_630 = arith.constant 0 : index
    %c0_631 = arith.constant 0 : index
    %684 = vector.load %arg3[%c0_628, %c1_629, %c0_630, %c0_631] : memref<1x8x2x128xf32, #tpu.memory_space<vmem>>, vector<1x1x2x128xf32>
    %685 = vector.shape_cast %684 : vector<1x1x2x128xf32> to vector<2x128xf32>
    %c1_632 = arith.constant 1 : index
    %c8_633 = arith.constant 8 : index
    %686 = memref.load %arg6[%c1_632, %c8_633] : memref<8x16xf32, #tpu.memory_space<smem>>
    %687 = vector.broadcast %686 : f32 to vector<2x128xf32>
    %688 = arith.mulf %685, %687 : vector<2x128xf32>
    %689 = arith.addf %683, %688 : vector<2x128xf32>
    %c0_634 = arith.constant 0 : index
    %c2_635 = arith.constant 2 : index
    %c0_636 = arith.constant 0 : index
    %c0_637 = arith.constant 0 : index
    %690 = vector.load %arg3[%c0_634, %c2_635, %c0_636, %c0_637] : memref<1x8x2x128xf32, #tpu.memory_space<vmem>>, vector<1x1x2x128xf32>
    %691 = vector.shape_cast %690 : vector<1x1x2x128xf32> to vector<2x128xf32>
    %c2_638 = arith.constant 2 : index
    %c8_639 = arith.constant 8 : index
    %692 = memref.load %arg6[%c2_638, %c8_639] : memref<8x16xf32, #tpu.memory_space<smem>>
    %693 = vector.broadcast %692 : f32 to vector<2x128xf32>
    %694 = arith.mulf %691, %693 : vector<2x128xf32>
    %695 = arith.addf %689, %694 : vector<2x128xf32>
    %c0_640 = arith.constant 0 : index
    %c3_641 = arith.constant 3 : index
    %c0_642 = arith.constant 0 : index
    %c0_643 = arith.constant 0 : index
    %696 = vector.load %arg3[%c0_640, %c3_641, %c0_642, %c0_643] : memref<1x8x2x128xf32, #tpu.memory_space<vmem>>, vector<1x1x2x128xf32>
    %697 = vector.shape_cast %696 : vector<1x1x2x128xf32> to vector<2x128xf32>
    %c3_644 = arith.constant 3 : index
    %c8_645 = arith.constant 8 : index
    %698 = memref.load %arg6[%c3_644, %c8_645] : memref<8x16xf32, #tpu.memory_space<smem>>
    %699 = vector.broadcast %698 : f32 to vector<2x128xf32>
    %700 = arith.mulf %697, %699 : vector<2x128xf32>
    %701 = arith.addf %695, %700 : vector<2x128xf32>
    %c0_646 = arith.constant 0 : index
    %c4_647 = arith.constant 4 : index
    %c0_648 = arith.constant 0 : index
    %c0_649 = arith.constant 0 : index
    %702 = vector.load %arg3[%c0_646, %c4_647, %c0_648, %c0_649] : memref<1x8x2x128xf32, #tpu.memory_space<vmem>>, vector<1x1x2x128xf32>
    %703 = vector.shape_cast %702 : vector<1x1x2x128xf32> to vector<2x128xf32>
    %c4_650 = arith.constant 4 : index
    %c8_651 = arith.constant 8 : index
    %704 = memref.load %arg6[%c4_650, %c8_651] : memref<8x16xf32, #tpu.memory_space<smem>>
    %705 = vector.broadcast %704 : f32 to vector<2x128xf32>
    %706 = arith.mulf %703, %705 : vector<2x128xf32>
    %707 = arith.addf %701, %706 : vector<2x128xf32>
    %c0_652 = arith.constant 0 : index
    %c5_653 = arith.constant 5 : index
    %c0_654 = arith.constant 0 : index
    %c0_655 = arith.constant 0 : index
    %708 = vector.load %arg3[%c0_652, %c5_653, %c0_654, %c0_655] : memref<1x8x2x128xf32, #tpu.memory_space<vmem>>, vector<1x1x2x128xf32>
    %709 = vector.shape_cast %708 : vector<1x1x2x128xf32> to vector<2x128xf32>
    %c5_656 = arith.constant 5 : index
    %c8_657 = arith.constant 8 : index
    %710 = memref.load %arg6[%c5_656, %c8_657] : memref<8x16xf32, #tpu.memory_space<smem>>
    %711 = vector.broadcast %710 : f32 to vector<2x128xf32>
    %712 = arith.mulf %709, %711 : vector<2x128xf32>
    %713 = arith.addf %707, %712 : vector<2x128xf32>
    %c0_658 = arith.constant 0 : index
    %c6_659 = arith.constant 6 : index
    %c0_660 = arith.constant 0 : index
    %c0_661 = arith.constant 0 : index
    %714 = vector.load %arg3[%c0_658, %c6_659, %c0_660, %c0_661] : memref<1x8x2x128xf32, #tpu.memory_space<vmem>>, vector<1x1x2x128xf32>
    %715 = vector.shape_cast %714 : vector<1x1x2x128xf32> to vector<2x128xf32>
    %c6_662 = arith.constant 6 : index
    %c8_663 = arith.constant 8 : index
    %716 = memref.load %arg6[%c6_662, %c8_663] : memref<8x16xf32, #tpu.memory_space<smem>>
    %717 = vector.broadcast %716 : f32 to vector<2x128xf32>
    %718 = arith.mulf %715, %717 : vector<2x128xf32>
    %719 = arith.addf %713, %718 : vector<2x128xf32>
    %c0_664 = arith.constant 0 : index
    %c7_665 = arith.constant 7 : index
    %c0_666 = arith.constant 0 : index
    %c0_667 = arith.constant 0 : index
    %720 = vector.load %arg3[%c0_664, %c7_665, %c0_666, %c0_667] : memref<1x8x2x128xf32, #tpu.memory_space<vmem>>, vector<1x1x2x128xf32>
    %721 = vector.shape_cast %720 : vector<1x1x2x128xf32> to vector<2x128xf32>
    %c7_668 = arith.constant 7 : index
    %c8_669 = arith.constant 8 : index
    %722 = memref.load %arg6[%c7_668, %c8_669] : memref<8x16xf32, #tpu.memory_space<smem>>
    %723 = vector.broadcast %722 : f32 to vector<2x128xf32>
    %724 = arith.mulf %721, %723 : vector<2x128xf32>
    %725 = arith.addf %719, %724 : vector<2x128xf32>
    %c8_670 = arith.constant 8 : index
    %726 = memref.load %arg5[%c8_670] : memref<16xf32, #tpu.memory_space<smem>>
    %c8_671 = arith.constant 8 : index
    %727 = memref.load %arg7[%c8_671] : memref<16xf32, #tpu.memory_space<smem>>
    %728 = arith.addf %726, %727 : f32
    %729 = vector.broadcast %728 : f32 to vector<2x128xf32>
    %730 = arith.addf %725, %729 : vector<2x128xf32>
    %cst_672 = arith.constant 0.000000e+00 : f32
    %731 = vector.broadcast %cst_672 : f32 to vector<2x128xf32>
    %732 = arith.maximumf %730, %731 : vector<2x128xf32>
    %c8_673 = arith.constant 8 : index
    %733 = memref.load %arg8[%c8_673] : memref<16xf32, #tpu.memory_space<smem>>
    %734 = vector.broadcast %733 : f32 to vector<2x128xf32>
    %735 = arith.mulf %732, %734 : vector<2x128xf32>
    %736 = arith.addf %654, %735 : vector<2x128xf32>
    %c0_674 = arith.constant 0 : index
    %c0_675 = arith.constant 0 : index
    %c0_676 = arith.constant 0 : index
    %c0_677 = arith.constant 0 : index
    %737 = vector.load %arg2[%c0_674, %c0_675, %c0_676, %c0_677] : memref<1x4x2x128xf32, #tpu.memory_space<vmem>>, vector<1x1x2x128xf32>
    %738 = vector.shape_cast %737 : vector<1x1x2x128xf32> to vector<2x128xf32>
    %c0_678 = arith.constant 0 : index
    %c9 = arith.constant 9 : index
    %739 = memref.load %arg4[%c0_678, %c9] : memref<4x16xf32, #tpu.memory_space<smem>>
    %740 = vector.broadcast %739 : f32 to vector<2x128xf32>
    %741 = arith.mulf %738, %740 : vector<2x128xf32>
    %c0_679 = arith.constant 0 : index
    %c1_680 = arith.constant 1 : index
    %c0_681 = arith.constant 0 : index
    %c0_682 = arith.constant 0 : index
    %742 = vector.load %arg2[%c0_679, %c1_680, %c0_681, %c0_682] : memref<1x4x2x128xf32, #tpu.memory_space<vmem>>, vector<1x1x2x128xf32>
    %743 = vector.shape_cast %742 : vector<1x1x2x128xf32> to vector<2x128xf32>
    %c1_683 = arith.constant 1 : index
    %c9_684 = arith.constant 9 : index
    %744 = memref.load %arg4[%c1_683, %c9_684] : memref<4x16xf32, #tpu.memory_space<smem>>
    %745 = vector.broadcast %744 : f32 to vector<2x128xf32>
    %746 = arith.mulf %743, %745 : vector<2x128xf32>
    %747 = arith.addf %741, %746 : vector<2x128xf32>
    %c0_685 = arith.constant 0 : index
    %c2_686 = arith.constant 2 : index
    %c0_687 = arith.constant 0 : index
    %c0_688 = arith.constant 0 : index
    %748 = vector.load %arg2[%c0_685, %c2_686, %c0_687, %c0_688] : memref<1x4x2x128xf32, #tpu.memory_space<vmem>>, vector<1x1x2x128xf32>
    %749 = vector.shape_cast %748 : vector<1x1x2x128xf32> to vector<2x128xf32>
    %c2_689 = arith.constant 2 : index
    %c9_690 = arith.constant 9 : index
    %750 = memref.load %arg4[%c2_689, %c9_690] : memref<4x16xf32, #tpu.memory_space<smem>>
    %751 = vector.broadcast %750 : f32 to vector<2x128xf32>
    %752 = arith.mulf %749, %751 : vector<2x128xf32>
    %753 = arith.addf %747, %752 : vector<2x128xf32>
    %c0_691 = arith.constant 0 : index
    %c3_692 = arith.constant 3 : index
    %c0_693 = arith.constant 0 : index
    %c0_694 = arith.constant 0 : index
    %754 = vector.load %arg2[%c0_691, %c3_692, %c0_693, %c0_694] : memref<1x4x2x128xf32, #tpu.memory_space<vmem>>, vector<1x1x2x128xf32>
    %755 = vector.shape_cast %754 : vector<1x1x2x128xf32> to vector<2x128xf32>
    %c3_695 = arith.constant 3 : index
    %c9_696 = arith.constant 9 : index
    %756 = memref.load %arg4[%c3_695, %c9_696] : memref<4x16xf32, #tpu.memory_space<smem>>
    %757 = vector.broadcast %756 : f32 to vector<2x128xf32>
    %758 = arith.mulf %755, %757 : vector<2x128xf32>
    %759 = arith.addf %753, %758 : vector<2x128xf32>
    %c0_697 = arith.constant 0 : index
    %c0_698 = arith.constant 0 : index
    %c0_699 = arith.constant 0 : index
    %c0_700 = arith.constant 0 : index
    %760 = vector.load %arg3[%c0_697, %c0_698, %c0_699, %c0_700] : memref<1x8x2x128xf32, #tpu.memory_space<vmem>>, vector<1x1x2x128xf32>
    %761 = vector.shape_cast %760 : vector<1x1x2x128xf32> to vector<2x128xf32>
    %c0_701 = arith.constant 0 : index
    %c9_702 = arith.constant 9 : index
    %762 = memref.load %arg6[%c0_701, %c9_702] : memref<8x16xf32, #tpu.memory_space<smem>>
    %763 = vector.broadcast %762 : f32 to vector<2x128xf32>
    %764 = arith.mulf %761, %763 : vector<2x128xf32>
    %765 = arith.addf %759, %764 : vector<2x128xf32>
    %c0_703 = arith.constant 0 : index
    %c1_704 = arith.constant 1 : index
    %c0_705 = arith.constant 0 : index
    %c0_706 = arith.constant 0 : index
    %766 = vector.load %arg3[%c0_703, %c1_704, %c0_705, %c0_706] : memref<1x8x2x128xf32, #tpu.memory_space<vmem>>, vector<1x1x2x128xf32>
    %767 = vector.shape_cast %766 : vector<1x1x2x128xf32> to vector<2x128xf32>
    %c1_707 = arith.constant 1 : index
    %c9_708 = arith.constant 9 : index
    %768 = memref.load %arg6[%c1_707, %c9_708] : memref<8x16xf32, #tpu.memory_space<smem>>
    %769 = vector.broadcast %768 : f32 to vector<2x128xf32>
    %770 = arith.mulf %767, %769 : vector<2x128xf32>
    %771 = arith.addf %765, %770 : vector<2x128xf32>
    %c0_709 = arith.constant 0 : index
    %c2_710 = arith.constant 2 : index
    %c0_711 = arith.constant 0 : index
    %c0_712 = arith.constant 0 : index
    %772 = vector.load %arg3[%c0_709, %c2_710, %c0_711, %c0_712] : memref<1x8x2x128xf32, #tpu.memory_space<vmem>>, vector<1x1x2x128xf32>
    %773 = vector.shape_cast %772 : vector<1x1x2x128xf32> to vector<2x128xf32>
    %c2_713 = arith.constant 2 : index
    %c9_714 = arith.constant 9 : index
    %774 = memref.load %arg6[%c2_713, %c9_714] : memref<8x16xf32, #tpu.memory_space<smem>>
    %775 = vector.broadcast %774 : f32 to vector<2x128xf32>
    %776 = arith.mulf %773, %775 : vector<2x128xf32>
    %777 = arith.addf %771, %776 : vector<2x128xf32>
    %c0_715 = arith.constant 0 : index
    %c3_716 = arith.constant 3 : index
    %c0_717 = arith.constant 0 : index
    %c0_718 = arith.constant 0 : index
    %778 = vector.load %arg3[%c0_715, %c3_716, %c0_717, %c0_718] : memref<1x8x2x128xf32, #tpu.memory_space<vmem>>, vector<1x1x2x128xf32>
    %779 = vector.shape_cast %778 : vector<1x1x2x128xf32> to vector<2x128xf32>
    %c3_719 = arith.constant 3 : index
    %c9_720 = arith.constant 9 : index
    %780 = memref.load %arg6[%c3_719, %c9_720] : memref<8x16xf32, #tpu.memory_space<smem>>
    %781 = vector.broadcast %780 : f32 to vector<2x128xf32>
    %782 = arith.mulf %779, %781 : vector<2x128xf32>
    %783 = arith.addf %777, %782 : vector<2x128xf32>
    %c0_721 = arith.constant 0 : index
    %c4_722 = arith.constant 4 : index
    %c0_723 = arith.constant 0 : index
    %c0_724 = arith.constant 0 : index
    %784 = vector.load %arg3[%c0_721, %c4_722, %c0_723, %c0_724] : memref<1x8x2x128xf32, #tpu.memory_space<vmem>>, vector<1x1x2x128xf32>
    %785 = vector.shape_cast %784 : vector<1x1x2x128xf32> to vector<2x128xf32>
    %c4_725 = arith.constant 4 : index
    %c9_726 = arith.constant 9 : index
    %786 = memref.load %arg6[%c4_725, %c9_726] : memref<8x16xf32, #tpu.memory_space<smem>>
    %787 = vector.broadcast %786 : f32 to vector<2x128xf32>
    %788 = arith.mulf %785, %787 : vector<2x128xf32>
    %789 = arith.addf %783, %788 : vector<2x128xf32>
    %c0_727 = arith.constant 0 : index
    %c5_728 = arith.constant 5 : index
    %c0_729 = arith.constant 0 : index
    %c0_730 = arith.constant 0 : index
    %790 = vector.load %arg3[%c0_727, %c5_728, %c0_729, %c0_730] : memref<1x8x2x128xf32, #tpu.memory_space<vmem>>, vector<1x1x2x128xf32>
    %791 = vector.shape_cast %790 : vector<1x1x2x128xf32> to vector<2x128xf32>
    %c5_731 = arith.constant 5 : index
    %c9_732 = arith.constant 9 : index
    %792 = memref.load %arg6[%c5_731, %c9_732] : memref<8x16xf32, #tpu.memory_space<smem>>
    %793 = vector.broadcast %792 : f32 to vector<2x128xf32>
    %794 = arith.mulf %791, %793 : vector<2x128xf32>
    %795 = arith.addf %789, %794 : vector<2x128xf32>
    %c0_733 = arith.constant 0 : index
    %c6_734 = arith.constant 6 : index
    %c0_735 = arith.constant 0 : index
    %c0_736 = arith.constant 0 : index
    %796 = vector.load %arg3[%c0_733, %c6_734, %c0_735, %c0_736] : memref<1x8x2x128xf32, #tpu.memory_space<vmem>>, vector<1x1x2x128xf32>
    %797 = vector.shape_cast %796 : vector<1x1x2x128xf32> to vector<2x128xf32>
    %c6_737 = arith.constant 6 : index
    %c9_738 = arith.constant 9 : index
    %798 = memref.load %arg6[%c6_737, %c9_738] : memref<8x16xf32, #tpu.memory_space<smem>>
    %799 = vector.broadcast %798 : f32 to vector<2x128xf32>
    %800 = arith.mulf %797, %799 : vector<2x128xf32>
    %801 = arith.addf %795, %800 : vector<2x128xf32>
    %c0_739 = arith.constant 0 : index
    %c7_740 = arith.constant 7 : index
    %c0_741 = arith.constant 0 : index
    %c0_742 = arith.constant 0 : index
    %802 = vector.load %arg3[%c0_739, %c7_740, %c0_741, %c0_742] : memref<1x8x2x128xf32, #tpu.memory_space<vmem>>, vector<1x1x2x128xf32>
    %803 = vector.shape_cast %802 : vector<1x1x2x128xf32> to vector<2x128xf32>
    %c7_743 = arith.constant 7 : index
    %c9_744 = arith.constant 9 : index
    %804 = memref.load %arg6[%c7_743, %c9_744] : memref<8x16xf32, #tpu.memory_space<smem>>
    %805 = vector.broadcast %804 : f32 to vector<2x128xf32>
    %806 = arith.mulf %803, %805 : vector<2x128xf32>
    %807 = arith.addf %801, %806 : vector<2x128xf32>
    %c9_745 = arith.constant 9 : index
    %808 = memref.load %arg5[%c9_745] : memref<16xf32, #tpu.memory_space<smem>>
    %c9_746 = arith.constant 9 : index
    %809 = memref.load %arg7[%c9_746] : memref<16xf32, #tpu.memory_space<smem>>
    %810 = arith.addf %808, %809 : f32
    %811 = vector.broadcast %810 : f32 to vector<2x128xf32>
    %812 = arith.addf %807, %811 : vector<2x128xf32>
    %cst_747 = arith.constant 0.000000e+00 : f32
    %813 = vector.broadcast %cst_747 : f32 to vector<2x128xf32>
    %814 = arith.maximumf %812, %813 : vector<2x128xf32>
    %c9_748 = arith.constant 9 : index
    %815 = memref.load %arg8[%c9_748] : memref<16xf32, #tpu.memory_space<smem>>
    %816 = vector.broadcast %815 : f32 to vector<2x128xf32>
    %817 = arith.mulf %814, %816 : vector<2x128xf32>
    %818 = arith.addf %736, %817 : vector<2x128xf32>
    %c0_749 = arith.constant 0 : index
    %c0_750 = arith.constant 0 : index
    %c0_751 = arith.constant 0 : index
    %c0_752 = arith.constant 0 : index
    %819 = vector.load %arg2[%c0_749, %c0_750, %c0_751, %c0_752] : memref<1x4x2x128xf32, #tpu.memory_space<vmem>>, vector<1x1x2x128xf32>
    %820 = vector.shape_cast %819 : vector<1x1x2x128xf32> to vector<2x128xf32>
    %c0_753 = arith.constant 0 : index
    %c10 = arith.constant 10 : index
    %821 = memref.load %arg4[%c0_753, %c10] : memref<4x16xf32, #tpu.memory_space<smem>>
    %822 = vector.broadcast %821 : f32 to vector<2x128xf32>
    %823 = arith.mulf %820, %822 : vector<2x128xf32>
    %c0_754 = arith.constant 0 : index
    %c1_755 = arith.constant 1 : index
    %c0_756 = arith.constant 0 : index
    %c0_757 = arith.constant 0 : index
    %824 = vector.load %arg2[%c0_754, %c1_755, %c0_756, %c0_757] : memref<1x4x2x128xf32, #tpu.memory_space<vmem>>, vector<1x1x2x128xf32>
    %825 = vector.shape_cast %824 : vector<1x1x2x128xf32> to vector<2x128xf32>
    %c1_758 = arith.constant 1 : index
    %c10_759 = arith.constant 10 : index
    %826 = memref.load %arg4[%c1_758, %c10_759] : memref<4x16xf32, #tpu.memory_space<smem>>
    %827 = vector.broadcast %826 : f32 to vector<2x128xf32>
    %828 = arith.mulf %825, %827 : vector<2x128xf32>
    %829 = arith.addf %823, %828 : vector<2x128xf32>
    %c0_760 = arith.constant 0 : index
    %c2_761 = arith.constant 2 : index
    %c0_762 = arith.constant 0 : index
    %c0_763 = arith.constant 0 : index
    %830 = vector.load %arg2[%c0_760, %c2_761, %c0_762, %c0_763] : memref<1x4x2x128xf32, #tpu.memory_space<vmem>>, vector<1x1x2x128xf32>
    %831 = vector.shape_cast %830 : vector<1x1x2x128xf32> to vector<2x128xf32>
    %c2_764 = arith.constant 2 : index
    %c10_765 = arith.constant 10 : index
    %832 = memref.load %arg4[%c2_764, %c10_765] : memref<4x16xf32, #tpu.memory_space<smem>>
    %833 = vector.broadcast %832 : f32 to vector<2x128xf32>
    %834 = arith.mulf %831, %833 : vector<2x128xf32>
    %835 = arith.addf %829, %834 : vector<2x128xf32>
    %c0_766 = arith.constant 0 : index
    %c3_767 = arith.constant 3 : index
    %c0_768 = arith.constant 0 : index
    %c0_769 = arith.constant 0 : index
    %836 = vector.load %arg2[%c0_766, %c3_767, %c0_768, %c0_769] : memref<1x4x2x128xf32, #tpu.memory_space<vmem>>, vector<1x1x2x128xf32>
    %837 = vector.shape_cast %836 : vector<1x1x2x128xf32> to vector<2x128xf32>
    %c3_770 = arith.constant 3 : index
    %c10_771 = arith.constant 10 : index
    %838 = memref.load %arg4[%c3_770, %c10_771] : memref<4x16xf32, #tpu.memory_space<smem>>
    %839 = vector.broadcast %838 : f32 to vector<2x128xf32>
    %840 = arith.mulf %837, %839 : vector<2x128xf32>
    %841 = arith.addf %835, %840 : vector<2x128xf32>
    %c0_772 = arith.constant 0 : index
    %c0_773 = arith.constant 0 : index
    %c0_774 = arith.constant 0 : index
    %c0_775 = arith.constant 0 : index
    %842 = vector.load %arg3[%c0_772, %c0_773, %c0_774, %c0_775] : memref<1x8x2x128xf32, #tpu.memory_space<vmem>>, vector<1x1x2x128xf32>
    %843 = vector.shape_cast %842 : vector<1x1x2x128xf32> to vector<2x128xf32>
    %c0_776 = arith.constant 0 : index
    %c10_777 = arith.constant 10 : index
    %844 = memref.load %arg6[%c0_776, %c10_777] : memref<8x16xf32, #tpu.memory_space<smem>>
    %845 = vector.broadcast %844 : f32 to vector<2x128xf32>
    %846 = arith.mulf %843, %845 : vector<2x128xf32>
    %847 = arith.addf %841, %846 : vector<2x128xf32>
    %c0_778 = arith.constant 0 : index
    %c1_779 = arith.constant 1 : index
    %c0_780 = arith.constant 0 : index
    %c0_781 = arith.constant 0 : index
    %848 = vector.load %arg3[%c0_778, %c1_779, %c0_780, %c0_781] : memref<1x8x2x128xf32, #tpu.memory_space<vmem>>, vector<1x1x2x128xf32>
    %849 = vector.shape_cast %848 : vector<1x1x2x128xf32> to vector<2x128xf32>
    %c1_782 = arith.constant 1 : index
    %c10_783 = arith.constant 10 : index
    %850 = memref.load %arg6[%c1_782, %c10_783] : memref<8x16xf32, #tpu.memory_space<smem>>
    %851 = vector.broadcast %850 : f32 to vector<2x128xf32>
    %852 = arith.mulf %849, %851 : vector<2x128xf32>
    %853 = arith.addf %847, %852 : vector<2x128xf32>
    %c0_784 = arith.constant 0 : index
    %c2_785 = arith.constant 2 : index
    %c0_786 = arith.constant 0 : index
    %c0_787 = arith.constant 0 : index
    %854 = vector.load %arg3[%c0_784, %c2_785, %c0_786, %c0_787] : memref<1x8x2x128xf32, #tpu.memory_space<vmem>>, vector<1x1x2x128xf32>
    %855 = vector.shape_cast %854 : vector<1x1x2x128xf32> to vector<2x128xf32>
    %c2_788 = arith.constant 2 : index
    %c10_789 = arith.constant 10 : index
    %856 = memref.load %arg6[%c2_788, %c10_789] : memref<8x16xf32, #tpu.memory_space<smem>>
    %857 = vector.broadcast %856 : f32 to vector<2x128xf32>
    %858 = arith.mulf %855, %857 : vector<2x128xf32>
    %859 = arith.addf %853, %858 : vector<2x128xf32>
    %c0_790 = arith.constant 0 : index
    %c3_791 = arith.constant 3 : index
    %c0_792 = arith.constant 0 : index
    %c0_793 = arith.constant 0 : index
    %860 = vector.load %arg3[%c0_790, %c3_791, %c0_792, %c0_793] : memref<1x8x2x128xf32, #tpu.memory_space<vmem>>, vector<1x1x2x128xf32>
    %861 = vector.shape_cast %860 : vector<1x1x2x128xf32> to vector<2x128xf32>
    %c3_794 = arith.constant 3 : index
    %c10_795 = arith.constant 10 : index
    %862 = memref.load %arg6[%c3_794, %c10_795] : memref<8x16xf32, #tpu.memory_space<smem>>
    %863 = vector.broadcast %862 : f32 to vector<2x128xf32>
    %864 = arith.mulf %861, %863 : vector<2x128xf32>
    %865 = arith.addf %859, %864 : vector<2x128xf32>
    %c0_796 = arith.constant 0 : index
    %c4_797 = arith.constant 4 : index
    %c0_798 = arith.constant 0 : index
    %c0_799 = arith.constant 0 : index
    %866 = vector.load %arg3[%c0_796, %c4_797, %c0_798, %c0_799] : memref<1x8x2x128xf32, #tpu.memory_space<vmem>>, vector<1x1x2x128xf32>
    %867 = vector.shape_cast %866 : vector<1x1x2x128xf32> to vector<2x128xf32>
    %c4_800 = arith.constant 4 : index
    %c10_801 = arith.constant 10 : index
    %868 = memref.load %arg6[%c4_800, %c10_801] : memref<8x16xf32, #tpu.memory_space<smem>>
    %869 = vector.broadcast %868 : f32 to vector<2x128xf32>
    %870 = arith.mulf %867, %869 : vector<2x128xf32>
    %871 = arith.addf %865, %870 : vector<2x128xf32>
    %c0_802 = arith.constant 0 : index
    %c5_803 = arith.constant 5 : index
    %c0_804 = arith.constant 0 : index
    %c0_805 = arith.constant 0 : index
    %872 = vector.load %arg3[%c0_802, %c5_803, %c0_804, %c0_805] : memref<1x8x2x128xf32, #tpu.memory_space<vmem>>, vector<1x1x2x128xf32>
    %873 = vector.shape_cast %872 : vector<1x1x2x128xf32> to vector<2x128xf32>
    %c5_806 = arith.constant 5 : index
    %c10_807 = arith.constant 10 : index
    %874 = memref.load %arg6[%c5_806, %c10_807] : memref<8x16xf32, #tpu.memory_space<smem>>
    %875 = vector.broadcast %874 : f32 to vector<2x128xf32>
    %876 = arith.mulf %873, %875 : vector<2x128xf32>
    %877 = arith.addf %871, %876 : vector<2x128xf32>
    %c0_808 = arith.constant 0 : index
    %c6_809 = arith.constant 6 : index
    %c0_810 = arith.constant 0 : index
    %c0_811 = arith.constant 0 : index
    %878 = vector.load %arg3[%c0_808, %c6_809, %c0_810, %c0_811] : memref<1x8x2x128xf32, #tpu.memory_space<vmem>>, vector<1x1x2x128xf32>
    %879 = vector.shape_cast %878 : vector<1x1x2x128xf32> to vector<2x128xf32>
    %c6_812 = arith.constant 6 : index
    %c10_813 = arith.constant 10 : index
    %880 = memref.load %arg6[%c6_812, %c10_813] : memref<8x16xf32, #tpu.memory_space<smem>>
    %881 = vector.broadcast %880 : f32 to vector<2x128xf32>
    %882 = arith.mulf %879, %881 : vector<2x128xf32>
    %883 = arith.addf %877, %882 : vector<2x128xf32>
    %c0_814 = arith.constant 0 : index
    %c7_815 = arith.constant 7 : index
    %c0_816 = arith.constant 0 : index
    %c0_817 = arith.constant 0 : index
    %884 = vector.load %arg3[%c0_814, %c7_815, %c0_816, %c0_817] : memref<1x8x2x128xf32, #tpu.memory_space<vmem>>, vector<1x1x2x128xf32>
    %885 = vector.shape_cast %884 : vector<1x1x2x128xf32> to vector<2x128xf32>
    %c7_818 = arith.constant 7 : index
    %c10_819 = arith.constant 10 : index
    %886 = memref.load %arg6[%c7_818, %c10_819] : memref<8x16xf32, #tpu.memory_space<smem>>
    %887 = vector.broadcast %886 : f32 to vector<2x128xf32>
    %888 = arith.mulf %885, %887 : vector<2x128xf32>
    %889 = arith.addf %883, %888 : vector<2x128xf32>
    %c10_820 = arith.constant 10 : index
    %890 = memref.load %arg5[%c10_820] : memref<16xf32, #tpu.memory_space<smem>>
    %c10_821 = arith.constant 10 : index
    %891 = memref.load %arg7[%c10_821] : memref<16xf32, #tpu.memory_space<smem>>
    %892 = arith.addf %890, %891 : f32
    %893 = vector.broadcast %892 : f32 to vector<2x128xf32>
    %894 = arith.addf %889, %893 : vector<2x128xf32>
    %cst_822 = arith.constant 0.000000e+00 : f32
    %895 = vector.broadcast %cst_822 : f32 to vector<2x128xf32>
    %896 = arith.maximumf %894, %895 : vector<2x128xf32>
    %c10_823 = arith.constant 10 : index
    %897 = memref.load %arg8[%c10_823] : memref<16xf32, #tpu.memory_space<smem>>
    %898 = vector.broadcast %897 : f32 to vector<2x128xf32>
    %899 = arith.mulf %896, %898 : vector<2x128xf32>
    %900 = arith.addf %818, %899 : vector<2x128xf32>
    %c0_824 = arith.constant 0 : index
    %c0_825 = arith.constant 0 : index
    %c0_826 = arith.constant 0 : index
    %c0_827 = arith.constant 0 : index
    %901 = vector.load %arg2[%c0_824, %c0_825, %c0_826, %c0_827] : memref<1x4x2x128xf32, #tpu.memory_space<vmem>>, vector<1x1x2x128xf32>
    %902 = vector.shape_cast %901 : vector<1x1x2x128xf32> to vector<2x128xf32>
    %c0_828 = arith.constant 0 : index
    %c11 = arith.constant 11 : index
    %903 = memref.load %arg4[%c0_828, %c11] : memref<4x16xf32, #tpu.memory_space<smem>>
    %904 = vector.broadcast %903 : f32 to vector<2x128xf32>
    %905 = arith.mulf %902, %904 : vector<2x128xf32>
    %c0_829 = arith.constant 0 : index
    %c1_830 = arith.constant 1 : index
    %c0_831 = arith.constant 0 : index
    %c0_832 = arith.constant 0 : index
    %906 = vector.load %arg2[%c0_829, %c1_830, %c0_831, %c0_832] : memref<1x4x2x128xf32, #tpu.memory_space<vmem>>, vector<1x1x2x128xf32>
    %907 = vector.shape_cast %906 : vector<1x1x2x128xf32> to vector<2x128xf32>
    %c1_833 = arith.constant 1 : index
    %c11_834 = arith.constant 11 : index
    %908 = memref.load %arg4[%c1_833, %c11_834] : memref<4x16xf32, #tpu.memory_space<smem>>
    %909 = vector.broadcast %908 : f32 to vector<2x128xf32>
    %910 = arith.mulf %907, %909 : vector<2x128xf32>
    %911 = arith.addf %905, %910 : vector<2x128xf32>
    %c0_835 = arith.constant 0 : index
    %c2_836 = arith.constant 2 : index
    %c0_837 = arith.constant 0 : index
    %c0_838 = arith.constant 0 : index
    %912 = vector.load %arg2[%c0_835, %c2_836, %c0_837, %c0_838] : memref<1x4x2x128xf32, #tpu.memory_space<vmem>>, vector<1x1x2x128xf32>
    %913 = vector.shape_cast %912 : vector<1x1x2x128xf32> to vector<2x128xf32>
    %c2_839 = arith.constant 2 : index
    %c11_840 = arith.constant 11 : index
    %914 = memref.load %arg4[%c2_839, %c11_840] : memref<4x16xf32, #tpu.memory_space<smem>>
    %915 = vector.broadcast %914 : f32 to vector<2x128xf32>
    %916 = arith.mulf %913, %915 : vector<2x128xf32>
    %917 = arith.addf %911, %916 : vector<2x128xf32>
    %c0_841 = arith.constant 0 : index
    %c3_842 = arith.constant 3 : index
    %c0_843 = arith.constant 0 : index
    %c0_844 = arith.constant 0 : index
    %918 = vector.load %arg2[%c0_841, %c3_842, %c0_843, %c0_844] : memref<1x4x2x128xf32, #tpu.memory_space<vmem>>, vector<1x1x2x128xf32>
    %919 = vector.shape_cast %918 : vector<1x1x2x128xf32> to vector<2x128xf32>
    %c3_845 = arith.constant 3 : index
    %c11_846 = arith.constant 11 : index
    %920 = memref.load %arg4[%c3_845, %c11_846] : memref<4x16xf32, #tpu.memory_space<smem>>
    %921 = vector.broadcast %920 : f32 to vector<2x128xf32>
    %922 = arith.mulf %919, %921 : vector<2x128xf32>
    %923 = arith.addf %917, %922 : vector<2x128xf32>
    %c0_847 = arith.constant 0 : index
    %c0_848 = arith.constant 0 : index
    %c0_849 = arith.constant 0 : index
    %c0_850 = arith.constant 0 : index
    %924 = vector.load %arg3[%c0_847, %c0_848, %c0_849, %c0_850] : memref<1x8x2x128xf32, #tpu.memory_space<vmem>>, vector<1x1x2x128xf32>
    %925 = vector.shape_cast %924 : vector<1x1x2x128xf32> to vector<2x128xf32>
    %c0_851 = arith.constant 0 : index
    %c11_852 = arith.constant 11 : index
    %926 = memref.load %arg6[%c0_851, %c11_852] : memref<8x16xf32, #tpu.memory_space<smem>>
    %927 = vector.broadcast %926 : f32 to vector<2x128xf32>
    %928 = arith.mulf %925, %927 : vector<2x128xf32>
    %929 = arith.addf %923, %928 : vector<2x128xf32>
    %c0_853 = arith.constant 0 : index
    %c1_854 = arith.constant 1 : index
    %c0_855 = arith.constant 0 : index
    %c0_856 = arith.constant 0 : index
    %930 = vector.load %arg3[%c0_853, %c1_854, %c0_855, %c0_856] : memref<1x8x2x128xf32, #tpu.memory_space<vmem>>, vector<1x1x2x128xf32>
    %931 = vector.shape_cast %930 : vector<1x1x2x128xf32> to vector<2x128xf32>
    %c1_857 = arith.constant 1 : index
    %c11_858 = arith.constant 11 : index
    %932 = memref.load %arg6[%c1_857, %c11_858] : memref<8x16xf32, #tpu.memory_space<smem>>
    %933 = vector.broadcast %932 : f32 to vector<2x128xf32>
    %934 = arith.mulf %931, %933 : vector<2x128xf32>
    %935 = arith.addf %929, %934 : vector<2x128xf32>
    %c0_859 = arith.constant 0 : index
    %c2_860 = arith.constant 2 : index
    %c0_861 = arith.constant 0 : index
    %c0_862 = arith.constant 0 : index
    %936 = vector.load %arg3[%c0_859, %c2_860, %c0_861, %c0_862] : memref<1x8x2x128xf32, #tpu.memory_space<vmem>>, vector<1x1x2x128xf32>
    %937 = vector.shape_cast %936 : vector<1x1x2x128xf32> to vector<2x128xf32>
    %c2_863 = arith.constant 2 : index
    %c11_864 = arith.constant 11 : index
    %938 = memref.load %arg6[%c2_863, %c11_864] : memref<8x16xf32, #tpu.memory_space<smem>>
    %939 = vector.broadcast %938 : f32 to vector<2x128xf32>
    %940 = arith.mulf %937, %939 : vector<2x128xf32>
    %941 = arith.addf %935, %940 : vector<2x128xf32>
    %c0_865 = arith.constant 0 : index
    %c3_866 = arith.constant 3 : index
    %c0_867 = arith.constant 0 : index
    %c0_868 = arith.constant 0 : index
    %942 = vector.load %arg3[%c0_865, %c3_866, %c0_867, %c0_868] : memref<1x8x2x128xf32, #tpu.memory_space<vmem>>, vector<1x1x2x128xf32>
    %943 = vector.shape_cast %942 : vector<1x1x2x128xf32> to vector<2x128xf32>
    %c3_869 = arith.constant 3 : index
    %c11_870 = arith.constant 11 : index
    %944 = memref.load %arg6[%c3_869, %c11_870] : memref<8x16xf32, #tpu.memory_space<smem>>
    %945 = vector.broadcast %944 : f32 to vector<2x128xf32>
    %946 = arith.mulf %943, %945 : vector<2x128xf32>
    %947 = arith.addf %941, %946 : vector<2x128xf32>
    %c0_871 = arith.constant 0 : index
    %c4_872 = arith.constant 4 : index
    %c0_873 = arith.constant 0 : index
    %c0_874 = arith.constant 0 : index
    %948 = vector.load %arg3[%c0_871, %c4_872, %c0_873, %c0_874] : memref<1x8x2x128xf32, #tpu.memory_space<vmem>>, vector<1x1x2x128xf32>
    %949 = vector.shape_cast %948 : vector<1x1x2x128xf32> to vector<2x128xf32>
    %c4_875 = arith.constant 4 : index
    %c11_876 = arith.constant 11 : index
    %950 = memref.load %arg6[%c4_875, %c11_876] : memref<8x16xf32, #tpu.memory_space<smem>>
    %951 = vector.broadcast %950 : f32 to vector<2x128xf32>
    %952 = arith.mulf %949, %951 : vector<2x128xf32>
    %953 = arith.addf %947, %952 : vector<2x128xf32>
    %c0_877 = arith.constant 0 : index
    %c5_878 = arith.constant 5 : index
    %c0_879 = arith.constant 0 : index
    %c0_880 = arith.constant 0 : index
    %954 = vector.load %arg3[%c0_877, %c5_878, %c0_879, %c0_880] : memref<1x8x2x128xf32, #tpu.memory_space<vmem>>, vector<1x1x2x128xf32>
    %955 = vector.shape_cast %954 : vector<1x1x2x128xf32> to vector<2x128xf32>
    %c5_881 = arith.constant 5 : index
    %c11_882 = arith.constant 11 : index
    %956 = memref.load %arg6[%c5_881, %c11_882] : memref<8x16xf32, #tpu.memory_space<smem>>
    %957 = vector.broadcast %956 : f32 to vector<2x128xf32>
    %958 = arith.mulf %955, %957 : vector<2x128xf32>
    %959 = arith.addf %953, %958 : vector<2x128xf32>
    %c0_883 = arith.constant 0 : index
    %c6_884 = arith.constant 6 : index
    %c0_885 = arith.constant 0 : index
    %c0_886 = arith.constant 0 : index
    %960 = vector.load %arg3[%c0_883, %c6_884, %c0_885, %c0_886] : memref<1x8x2x128xf32, #tpu.memory_space<vmem>>, vector<1x1x2x128xf32>
    %961 = vector.shape_cast %960 : vector<1x1x2x128xf32> to vector<2x128xf32>
    %c6_887 = arith.constant 6 : index
    %c11_888 = arith.constant 11 : index
    %962 = memref.load %arg6[%c6_887, %c11_888] : memref<8x16xf32, #tpu.memory_space<smem>>
    %963 = vector.broadcast %962 : f32 to vector<2x128xf32>
    %964 = arith.mulf %961, %963 : vector<2x128xf32>
    %965 = arith.addf %959, %964 : vector<2x128xf32>
    %c0_889 = arith.constant 0 : index
    %c7_890 = arith.constant 7 : index
    %c0_891 = arith.constant 0 : index
    %c0_892 = arith.constant 0 : index
    %966 = vector.load %arg3[%c0_889, %c7_890, %c0_891, %c0_892] : memref<1x8x2x128xf32, #tpu.memory_space<vmem>>, vector<1x1x2x128xf32>
    %967 = vector.shape_cast %966 : vector<1x1x2x128xf32> to vector<2x128xf32>
    %c7_893 = arith.constant 7 : index
    %c11_894 = arith.constant 11 : index
    %968 = memref.load %arg6[%c7_893, %c11_894] : memref<8x16xf32, #tpu.memory_space<smem>>
    %969 = vector.broadcast %968 : f32 to vector<2x128xf32>
    %970 = arith.mulf %967, %969 : vector<2x128xf32>
    %971 = arith.addf %965, %970 : vector<2x128xf32>
    %c11_895 = arith.constant 11 : index
    %972 = memref.load %arg5[%c11_895] : memref<16xf32, #tpu.memory_space<smem>>
    %c11_896 = arith.constant 11 : index
    %973 = memref.load %arg7[%c11_896] : memref<16xf32, #tpu.memory_space<smem>>
    %974 = arith.addf %972, %973 : f32
    %975 = vector.broadcast %974 : f32 to vector<2x128xf32>
    %976 = arith.addf %971, %975 : vector<2x128xf32>
    %cst_897 = arith.constant 0.000000e+00 : f32
    %977 = vector.broadcast %cst_897 : f32 to vector<2x128xf32>
    %978 = arith.maximumf %976, %977 : vector<2x128xf32>
    %c11_898 = arith.constant 11 : index
    %979 = memref.load %arg8[%c11_898] : memref<16xf32, #tpu.memory_space<smem>>
    %980 = vector.broadcast %979 : f32 to vector<2x128xf32>
    %981 = arith.mulf %978, %980 : vector<2x128xf32>
    %982 = arith.addf %900, %981 : vector<2x128xf32>
    %c0_899 = arith.constant 0 : index
    %c0_900 = arith.constant 0 : index
    %c0_901 = arith.constant 0 : index
    %c0_902 = arith.constant 0 : index
    %983 = vector.load %arg2[%c0_899, %c0_900, %c0_901, %c0_902] : memref<1x4x2x128xf32, #tpu.memory_space<vmem>>, vector<1x1x2x128xf32>
    %984 = vector.shape_cast %983 : vector<1x1x2x128xf32> to vector<2x128xf32>
    %c0_903 = arith.constant 0 : index
    %c12 = arith.constant 12 : index
    %985 = memref.load %arg4[%c0_903, %c12] : memref<4x16xf32, #tpu.memory_space<smem>>
    %986 = vector.broadcast %985 : f32 to vector<2x128xf32>
    %987 = arith.mulf %984, %986 : vector<2x128xf32>
    %c0_904 = arith.constant 0 : index
    %c1_905 = arith.constant 1 : index
    %c0_906 = arith.constant 0 : index
    %c0_907 = arith.constant 0 : index
    %988 = vector.load %arg2[%c0_904, %c1_905, %c0_906, %c0_907] : memref<1x4x2x128xf32, #tpu.memory_space<vmem>>, vector<1x1x2x128xf32>
    %989 = vector.shape_cast %988 : vector<1x1x2x128xf32> to vector<2x128xf32>
    %c1_908 = arith.constant 1 : index
    %c12_909 = arith.constant 12 : index
    %990 = memref.load %arg4[%c1_908, %c12_909] : memref<4x16xf32, #tpu.memory_space<smem>>
    %991 = vector.broadcast %990 : f32 to vector<2x128xf32>
    %992 = arith.mulf %989, %991 : vector<2x128xf32>
    %993 = arith.addf %987, %992 : vector<2x128xf32>
    %c0_910 = arith.constant 0 : index
    %c2_911 = arith.constant 2 : index
    %c0_912 = arith.constant 0 : index
    %c0_913 = arith.constant 0 : index
    %994 = vector.load %arg2[%c0_910, %c2_911, %c0_912, %c0_913] : memref<1x4x2x128xf32, #tpu.memory_space<vmem>>, vector<1x1x2x128xf32>
    %995 = vector.shape_cast %994 : vector<1x1x2x128xf32> to vector<2x128xf32>
    %c2_914 = arith.constant 2 : index
    %c12_915 = arith.constant 12 : index
    %996 = memref.load %arg4[%c2_914, %c12_915] : memref<4x16xf32, #tpu.memory_space<smem>>
    %997 = vector.broadcast %996 : f32 to vector<2x128xf32>
    %998 = arith.mulf %995, %997 : vector<2x128xf32>
    %999 = arith.addf %993, %998 : vector<2x128xf32>
    %c0_916 = arith.constant 0 : index
    %c3_917 = arith.constant 3 : index
    %c0_918 = arith.constant 0 : index
    %c0_919 = arith.constant 0 : index
    %1000 = vector.load %arg2[%c0_916, %c3_917, %c0_918, %c0_919] : memref<1x4x2x128xf32, #tpu.memory_space<vmem>>, vector<1x1x2x128xf32>
    %1001 = vector.shape_cast %1000 : vector<1x1x2x128xf32> to vector<2x128xf32>
    %c3_920 = arith.constant 3 : index
    %c12_921 = arith.constant 12 : index
    %1002 = memref.load %arg4[%c3_920, %c12_921] : memref<4x16xf32, #tpu.memory_space<smem>>
    %1003 = vector.broadcast %1002 : f32 to vector<2x128xf32>
    %1004 = arith.mulf %1001, %1003 : vector<2x128xf32>
    %1005 = arith.addf %999, %1004 : vector<2x128xf32>
    %c0_922 = arith.constant 0 : index
    %c0_923 = arith.constant 0 : index
    %c0_924 = arith.constant 0 : index
    %c0_925 = arith.constant 0 : index
    %1006 = vector.load %arg3[%c0_922, %c0_923, %c0_924, %c0_925] : memref<1x8x2x128xf32, #tpu.memory_space<vmem>>, vector<1x1x2x128xf32>
    %1007 = vector.shape_cast %1006 : vector<1x1x2x128xf32> to vector<2x128xf32>
    %c0_926 = arith.constant 0 : index
    %c12_927 = arith.constant 12 : index
    %1008 = memref.load %arg6[%c0_926, %c12_927] : memref<8x16xf32, #tpu.memory_space<smem>>
    %1009 = vector.broadcast %1008 : f32 to vector<2x128xf32>
    %1010 = arith.mulf %1007, %1009 : vector<2x128xf32>
    %1011 = arith.addf %1005, %1010 : vector<2x128xf32>
    %c0_928 = arith.constant 0 : index
    %c1_929 = arith.constant 1 : index
    %c0_930 = arith.constant 0 : index
    %c0_931 = arith.constant 0 : index
    %1012 = vector.load %arg3[%c0_928, %c1_929, %c0_930, %c0_931] : memref<1x8x2x128xf32, #tpu.memory_space<vmem>>, vector<1x1x2x128xf32>
    %1013 = vector.shape_cast %1012 : vector<1x1x2x128xf32> to vector<2x128xf32>
    %c1_932 = arith.constant 1 : index
    %c12_933 = arith.constant 12 : index
    %1014 = memref.load %arg6[%c1_932, %c12_933] : memref<8x16xf32, #tpu.memory_space<smem>>
    %1015 = vector.broadcast %1014 : f32 to vector<2x128xf32>
    %1016 = arith.mulf %1013, %1015 : vector<2x128xf32>
    %1017 = arith.addf %1011, %1016 : vector<2x128xf32>
    %c0_934 = arith.constant 0 : index
    %c2_935 = arith.constant 2 : index
    %c0_936 = arith.constant 0 : index
    %c0_937 = arith.constant 0 : index
    %1018 = vector.load %arg3[%c0_934, %c2_935, %c0_936, %c0_937] : memref<1x8x2x128xf32, #tpu.memory_space<vmem>>, vector<1x1x2x128xf32>
    %1019 = vector.shape_cast %1018 : vector<1x1x2x128xf32> to vector<2x128xf32>
    %c2_938 = arith.constant 2 : index
    %c12_939 = arith.constant 12 : index
    %1020 = memref.load %arg6[%c2_938, %c12_939] : memref<8x16xf32, #tpu.memory_space<smem>>
    %1021 = vector.broadcast %1020 : f32 to vector<2x128xf32>
    %1022 = arith.mulf %1019, %1021 : vector<2x128xf32>
    %1023 = arith.addf %1017, %1022 : vector<2x128xf32>
    %c0_940 = arith.constant 0 : index
    %c3_941 = arith.constant 3 : index
    %c0_942 = arith.constant 0 : index
    %c0_943 = arith.constant 0 : index
    %1024 = vector.load %arg3[%c0_940, %c3_941, %c0_942, %c0_943] : memref<1x8x2x128xf32, #tpu.memory_space<vmem>>, vector<1x1x2x128xf32>
    %1025 = vector.shape_cast %1024 : vector<1x1x2x128xf32> to vector<2x128xf32>
    %c3_944 = arith.constant 3 : index
    %c12_945 = arith.constant 12 : index
    %1026 = memref.load %arg6[%c3_944, %c12_945] : memref<8x16xf32, #tpu.memory_space<smem>>
    %1027 = vector.broadcast %1026 : f32 to vector<2x128xf32>
    %1028 = arith.mulf %1025, %1027 : vector<2x128xf32>
    %1029 = arith.addf %1023, %1028 : vector<2x128xf32>
    %c0_946 = arith.constant 0 : index
    %c4_947 = arith.constant 4 : index
    %c0_948 = arith.constant 0 : index
    %c0_949 = arith.constant 0 : index
    %1030 = vector.load %arg3[%c0_946, %c4_947, %c0_948, %c0_949] : memref<1x8x2x128xf32, #tpu.memory_space<vmem>>, vector<1x1x2x128xf32>
    %1031 = vector.shape_cast %1030 : vector<1x1x2x128xf32> to vector<2x128xf32>
    %c4_950 = arith.constant 4 : index
    %c12_951 = arith.constant 12 : index
    %1032 = memref.load %arg6[%c4_950, %c12_951] : memref<8x16xf32, #tpu.memory_space<smem>>
    %1033 = vector.broadcast %1032 : f32 to vector<2x128xf32>
    %1034 = arith.mulf %1031, %1033 : vector<2x128xf32>
    %1035 = arith.addf %1029, %1034 : vector<2x128xf32>
    %c0_952 = arith.constant 0 : index
    %c5_953 = arith.constant 5 : index
    %c0_954 = arith.constant 0 : index
    %c0_955 = arith.constant 0 : index
    %1036 = vector.load %arg3[%c0_952, %c5_953, %c0_954, %c0_955] : memref<1x8x2x128xf32, #tpu.memory_space<vmem>>, vector<1x1x2x128xf32>
    %1037 = vector.shape_cast %1036 : vector<1x1x2x128xf32> to vector<2x128xf32>
    %c5_956 = arith.constant 5 : index
    %c12_957 = arith.constant 12 : index
    %1038 = memref.load %arg6[%c5_956, %c12_957] : memref<8x16xf32, #tpu.memory_space<smem>>
    %1039 = vector.broadcast %1038 : f32 to vector<2x128xf32>
    %1040 = arith.mulf %1037, %1039 : vector<2x128xf32>
    %1041 = arith.addf %1035, %1040 : vector<2x128xf32>
    %c0_958 = arith.constant 0 : index
    %c6_959 = arith.constant 6 : index
    %c0_960 = arith.constant 0 : index
    %c0_961 = arith.constant 0 : index
    %1042 = vector.load %arg3[%c0_958, %c6_959, %c0_960, %c0_961] : memref<1x8x2x128xf32, #tpu.memory_space<vmem>>, vector<1x1x2x128xf32>
    %1043 = vector.shape_cast %1042 : vector<1x1x2x128xf32> to vector<2x128xf32>
    %c6_962 = arith.constant 6 : index
    %c12_963 = arith.constant 12 : index
    %1044 = memref.load %arg6[%c6_962, %c12_963] : memref<8x16xf32, #tpu.memory_space<smem>>
    %1045 = vector.broadcast %1044 : f32 to vector<2x128xf32>
    %1046 = arith.mulf %1043, %1045 : vector<2x128xf32>
    %1047 = arith.addf %1041, %1046 : vector<2x128xf32>
    %c0_964 = arith.constant 0 : index
    %c7_965 = arith.constant 7 : index
    %c0_966 = arith.constant 0 : index
    %c0_967 = arith.constant 0 : index
    %1048 = vector.load %arg3[%c0_964, %c7_965, %c0_966, %c0_967] : memref<1x8x2x128xf32, #tpu.memory_space<vmem>>, vector<1x1x2x128xf32>
    %1049 = vector.shape_cast %1048 : vector<1x1x2x128xf32> to vector<2x128xf32>
    %c7_968 = arith.constant 7 : index
    %c12_969 = arith.constant 12 : index
    %1050 = memref.load %arg6[%c7_968, %c12_969] : memref<8x16xf32, #tpu.memory_space<smem>>
    %1051 = vector.broadcast %1050 : f32 to vector<2x128xf32>
    %1052 = arith.mulf %1049, %1051 : vector<2x128xf32>
    %1053 = arith.addf %1047, %1052 : vector<2x128xf32>
    %c12_970 = arith.constant 12 : index
    %1054 = memref.load %arg5[%c12_970] : memref<16xf32, #tpu.memory_space<smem>>
    %c12_971 = arith.constant 12 : index
    %1055 = memref.load %arg7[%c12_971] : memref<16xf32, #tpu.memory_space<smem>>
    %1056 = arith.addf %1054, %1055 : f32
    %1057 = vector.broadcast %1056 : f32 to vector<2x128xf32>
    %1058 = arith.addf %1053, %1057 : vector<2x128xf32>
    %cst_972 = arith.constant 0.000000e+00 : f32
    %1059 = vector.broadcast %cst_972 : f32 to vector<2x128xf32>
    %1060 = arith.maximumf %1058, %1059 : vector<2x128xf32>
    %c12_973 = arith.constant 12 : index
    %1061 = memref.load %arg8[%c12_973] : memref<16xf32, #tpu.memory_space<smem>>
    %1062 = vector.broadcast %1061 : f32 to vector<2x128xf32>
    %1063 = arith.mulf %1060, %1062 : vector<2x128xf32>
    %1064 = arith.addf %982, %1063 : vector<2x128xf32>
    %c0_974 = arith.constant 0 : index
    %c0_975 = arith.constant 0 : index
    %c0_976 = arith.constant 0 : index
    %c0_977 = arith.constant 0 : index
    %1065 = vector.load %arg2[%c0_974, %c0_975, %c0_976, %c0_977] : memref<1x4x2x128xf32, #tpu.memory_space<vmem>>, vector<1x1x2x128xf32>
    %1066 = vector.shape_cast %1065 : vector<1x1x2x128xf32> to vector<2x128xf32>
    %c0_978 = arith.constant 0 : index
    %c13 = arith.constant 13 : index
    %1067 = memref.load %arg4[%c0_978, %c13] : memref<4x16xf32, #tpu.memory_space<smem>>
    %1068 = vector.broadcast %1067 : f32 to vector<2x128xf32>
    %1069 = arith.mulf %1066, %1068 : vector<2x128xf32>
    %c0_979 = arith.constant 0 : index
    %c1_980 = arith.constant 1 : index
    %c0_981 = arith.constant 0 : index
    %c0_982 = arith.constant 0 : index
    %1070 = vector.load %arg2[%c0_979, %c1_980, %c0_981, %c0_982] : memref<1x4x2x128xf32, #tpu.memory_space<vmem>>, vector<1x1x2x128xf32>
    %1071 = vector.shape_cast %1070 : vector<1x1x2x128xf32> to vector<2x128xf32>
    %c1_983 = arith.constant 1 : index
    %c13_984 = arith.constant 13 : index
    %1072 = memref.load %arg4[%c1_983, %c13_984] : memref<4x16xf32, #tpu.memory_space<smem>>
    %1073 = vector.broadcast %1072 : f32 to vector<2x128xf32>
    %1074 = arith.mulf %1071, %1073 : vector<2x128xf32>
    %1075 = arith.addf %1069, %1074 : vector<2x128xf32>
    %c0_985 = arith.constant 0 : index
    %c2_986 = arith.constant 2 : index
    %c0_987 = arith.constant 0 : index
    %c0_988 = arith.constant 0 : index
    %1076 = vector.load %arg2[%c0_985, %c2_986, %c0_987, %c0_988] : memref<1x4x2x128xf32, #tpu.memory_space<vmem>>, vector<1x1x2x128xf32>
    %1077 = vector.shape_cast %1076 : vector<1x1x2x128xf32> to vector<2x128xf32>
    %c2_989 = arith.constant 2 : index
    %c13_990 = arith.constant 13 : index
    %1078 = memref.load %arg4[%c2_989, %c13_990] : memref<4x16xf32, #tpu.memory_space<smem>>
    %1079 = vector.broadcast %1078 : f32 to vector<2x128xf32>
    %1080 = arith.mulf %1077, %1079 : vector<2x128xf32>
    %1081 = arith.addf %1075, %1080 : vector<2x128xf32>
    %c0_991 = arith.constant 0 : index
    %c3_992 = arith.constant 3 : index
    %c0_993 = arith.constant 0 : index
    %c0_994 = arith.constant 0 : index
    %1082 = vector.load %arg2[%c0_991, %c3_992, %c0_993, %c0_994] : memref<1x4x2x128xf32, #tpu.memory_space<vmem>>, vector<1x1x2x128xf32>
    %1083 = vector.shape_cast %1082 : vector<1x1x2x128xf32> to vector<2x128xf32>
    %c3_995 = arith.constant 3 : index
    %c13_996 = arith.constant 13 : index
    %1084 = memref.load %arg4[%c3_995, %c13_996] : memref<4x16xf32, #tpu.memory_space<smem>>
    %1085 = vector.broadcast %1084 : f32 to vector<2x128xf32>
    %1086 = arith.mulf %1083, %1085 : vector<2x128xf32>
    %1087 = arith.addf %1081, %1086 : vector<2x128xf32>
    %c0_997 = arith.constant 0 : index
    %c0_998 = arith.constant 0 : index
    %c0_999 = arith.constant 0 : index
    %c0_1000 = arith.constant 0 : index
    %1088 = vector.load %arg3[%c0_997, %c0_998, %c0_999, %c0_1000] : memref<1x8x2x128xf32, #tpu.memory_space<vmem>>, vector<1x1x2x128xf32>
    %1089 = vector.shape_cast %1088 : vector<1x1x2x128xf32> to vector<2x128xf32>
    %c0_1001 = arith.constant 0 : index
    %c13_1002 = arith.constant 13 : index
    %1090 = memref.load %arg6[%c0_1001, %c13_1002] : memref<8x16xf32, #tpu.memory_space<smem>>
    %1091 = vector.broadcast %1090 : f32 to vector<2x128xf32>
    %1092 = arith.mulf %1089, %1091 : vector<2x128xf32>
    %1093 = arith.addf %1087, %1092 : vector<2x128xf32>
    %c0_1003 = arith.constant 0 : index
    %c1_1004 = arith.constant 1 : index
    %c0_1005 = arith.constant 0 : index
    %c0_1006 = arith.constant 0 : index
    %1094 = vector.load %arg3[%c0_1003, %c1_1004, %c0_1005, %c0_1006] : memref<1x8x2x128xf32, #tpu.memory_space<vmem>>, vector<1x1x2x128xf32>
    %1095 = vector.shape_cast %1094 : vector<1x1x2x128xf32> to vector<2x128xf32>
    %c1_1007 = arith.constant 1 : index
    %c13_1008 = arith.constant 13 : index
    %1096 = memref.load %arg6[%c1_1007, %c13_1008] : memref<8x16xf32, #tpu.memory_space<smem>>
    %1097 = vector.broadcast %1096 : f32 to vector<2x128xf32>
    %1098 = arith.mulf %1095, %1097 : vector<2x128xf32>
    %1099 = arith.addf %1093, %1098 : vector<2x128xf32>
    %c0_1009 = arith.constant 0 : index
    %c2_1010 = arith.constant 2 : index
    %c0_1011 = arith.constant 0 : index
    %c0_1012 = arith.constant 0 : index
    %1100 = vector.load %arg3[%c0_1009, %c2_1010, %c0_1011, %c0_1012] : memref<1x8x2x128xf32, #tpu.memory_space<vmem>>, vector<1x1x2x128xf32>
    %1101 = vector.shape_cast %1100 : vector<1x1x2x128xf32> to vector<2x128xf32>
    %c2_1013 = arith.constant 2 : index
    %c13_1014 = arith.constant 13 : index
    %1102 = memref.load %arg6[%c2_1013, %c13_1014] : memref<8x16xf32, #tpu.memory_space<smem>>
    %1103 = vector.broadcast %1102 : f32 to vector<2x128xf32>
    %1104 = arith.mulf %1101, %1103 : vector<2x128xf32>
    %1105 = arith.addf %1099, %1104 : vector<2x128xf32>
    %c0_1015 = arith.constant 0 : index
    %c3_1016 = arith.constant 3 : index
    %c0_1017 = arith.constant 0 : index
    %c0_1018 = arith.constant 0 : index
    %1106 = vector.load %arg3[%c0_1015, %c3_1016, %c0_1017, %c0_1018] : memref<1x8x2x128xf32, #tpu.memory_space<vmem>>, vector<1x1x2x128xf32>
    %1107 = vector.shape_cast %1106 : vector<1x1x2x128xf32> to vector<2x128xf32>
    %c3_1019 = arith.constant 3 : index
    %c13_1020 = arith.constant 13 : index
    %1108 = memref.load %arg6[%c3_1019, %c13_1020] : memref<8x16xf32, #tpu.memory_space<smem>>
    %1109 = vector.broadcast %1108 : f32 to vector<2x128xf32>
    %1110 = arith.mulf %1107, %1109 : vector<2x128xf32>
    %1111 = arith.addf %1105, %1110 : vector<2x128xf32>
    %c0_1021 = arith.constant 0 : index
    %c4_1022 = arith.constant 4 : index
    %c0_1023 = arith.constant 0 : index
    %c0_1024 = arith.constant 0 : index
    %1112 = vector.load %arg3[%c0_1021, %c4_1022, %c0_1023, %c0_1024] : memref<1x8x2x128xf32, #tpu.memory_space<vmem>>, vector<1x1x2x128xf32>
    %1113 = vector.shape_cast %1112 : vector<1x1x2x128xf32> to vector<2x128xf32>
    %c4_1025 = arith.constant 4 : index
    %c13_1026 = arith.constant 13 : index
    %1114 = memref.load %arg6[%c4_1025, %c13_1026] : memref<8x16xf32, #tpu.memory_space<smem>>
    %1115 = vector.broadcast %1114 : f32 to vector<2x128xf32>
    %1116 = arith.mulf %1113, %1115 : vector<2x128xf32>
    %1117 = arith.addf %1111, %1116 : vector<2x128xf32>
    %c0_1027 = arith.constant 0 : index
    %c5_1028 = arith.constant 5 : index
    %c0_1029 = arith.constant 0 : index
    %c0_1030 = arith.constant 0 : index
    %1118 = vector.load %arg3[%c0_1027, %c5_1028, %c0_1029, %c0_1030] : memref<1x8x2x128xf32, #tpu.memory_space<vmem>>, vector<1x1x2x128xf32>
    %1119 = vector.shape_cast %1118 : vector<1x1x2x128xf32> to vector<2x128xf32>
    %c5_1031 = arith.constant 5 : index
    %c13_1032 = arith.constant 13 : index
    %1120 = memref.load %arg6[%c5_1031, %c13_1032] : memref<8x16xf32, #tpu.memory_space<smem>>
    %1121 = vector.broadcast %1120 : f32 to vector<2x128xf32>
    %1122 = arith.mulf %1119, %1121 : vector<2x128xf32>
    %1123 = arith.addf %1117, %1122 : vector<2x128xf32>
    %c0_1033 = arith.constant 0 : index
    %c6_1034 = arith.constant 6 : index
    %c0_1035 = arith.constant 0 : index
    %c0_1036 = arith.constant 0 : index
    %1124 = vector.load %arg3[%c0_1033, %c6_1034, %c0_1035, %c0_1036] : memref<1x8x2x128xf32, #tpu.memory_space<vmem>>, vector<1x1x2x128xf32>
    %1125 = vector.shape_cast %1124 : vector<1x1x2x128xf32> to vector<2x128xf32>
    %c6_1037 = arith.constant 6 : index
    %c13_1038 = arith.constant 13 : index
    %1126 = memref.load %arg6[%c6_1037, %c13_1038] : memref<8x16xf32, #tpu.memory_space<smem>>
    %1127 = vector.broadcast %1126 : f32 to vector<2x128xf32>
    %1128 = arith.mulf %1125, %1127 : vector<2x128xf32>
    %1129 = arith.addf %1123, %1128 : vector<2x128xf32>
    %c0_1039 = arith.constant 0 : index
    %c7_1040 = arith.constant 7 : index
    %c0_1041 = arith.constant 0 : index
    %c0_1042 = arith.constant 0 : index
    %1130 = vector.load %arg3[%c0_1039, %c7_1040, %c0_1041, %c0_1042] : memref<1x8x2x128xf32, #tpu.memory_space<vmem>>, vector<1x1x2x128xf32>
    %1131 = vector.shape_cast %1130 : vector<1x1x2x128xf32> to vector<2x128xf32>
    %c7_1043 = arith.constant 7 : index
    %c13_1044 = arith.constant 13 : index
    %1132 = memref.load %arg6[%c7_1043, %c13_1044] : memref<8x16xf32, #tpu.memory_space<smem>>
    %1133 = vector.broadcast %1132 : f32 to vector<2x128xf32>
    %1134 = arith.mulf %1131, %1133 : vector<2x128xf32>
    %1135 = arith.addf %1129, %1134 : vector<2x128xf32>
    %c13_1045 = arith.constant 13 : index
    %1136 = memref.load %arg5[%c13_1045] : memref<16xf32, #tpu.memory_space<smem>>
    %c13_1046 = arith.constant 13 : index
    %1137 = memref.load %arg7[%c13_1046] : memref<16xf32, #tpu.memory_space<smem>>
    %1138 = arith.addf %1136, %1137 : f32
    %1139 = vector.broadcast %1138 : f32 to vector<2x128xf32>
    %1140 = arith.addf %1135, %1139 : vector<2x128xf32>
    %cst_1047 = arith.constant 0.000000e+00 : f32
    %1141 = vector.broadcast %cst_1047 : f32 to vector<2x128xf32>
    %1142 = arith.maximumf %1140, %1141 : vector<2x128xf32>
    %c13_1048 = arith.constant 13 : index
    %1143 = memref.load %arg8[%c13_1048] : memref<16xf32, #tpu.memory_space<smem>>
    %1144 = vector.broadcast %1143 : f32 to vector<2x128xf32>
    %1145 = arith.mulf %1142, %1144 : vector<2x128xf32>
    %1146 = arith.addf %1064, %1145 : vector<2x128xf32>
    %c0_1049 = arith.constant 0 : index
    %c0_1050 = arith.constant 0 : index
    %c0_1051 = arith.constant 0 : index
    %c0_1052 = arith.constant 0 : index
    %1147 = vector.load %arg2[%c0_1049, %c0_1050, %c0_1051, %c0_1052] : memref<1x4x2x128xf32, #tpu.memory_space<vmem>>, vector<1x1x2x128xf32>
    %1148 = vector.shape_cast %1147 : vector<1x1x2x128xf32> to vector<2x128xf32>
    %c0_1053 = arith.constant 0 : index
    %c14 = arith.constant 14 : index
    %1149 = memref.load %arg4[%c0_1053, %c14] : memref<4x16xf32, #tpu.memory_space<smem>>
    %1150 = vector.broadcast %1149 : f32 to vector<2x128xf32>
    %1151 = arith.mulf %1148, %1150 : vector<2x128xf32>
    %c0_1054 = arith.constant 0 : index
    %c1_1055 = arith.constant 1 : index
    %c0_1056 = arith.constant 0 : index
    %c0_1057 = arith.constant 0 : index
    %1152 = vector.load %arg2[%c0_1054, %c1_1055, %c0_1056, %c0_1057] : memref<1x4x2x128xf32, #tpu.memory_space<vmem>>, vector<1x1x2x128xf32>
    %1153 = vector.shape_cast %1152 : vector<1x1x2x128xf32> to vector<2x128xf32>
    %c1_1058 = arith.constant 1 : index
    %c14_1059 = arith.constant 14 : index
    %1154 = memref.load %arg4[%c1_1058, %c14_1059] : memref<4x16xf32, #tpu.memory_space<smem>>
    %1155 = vector.broadcast %1154 : f32 to vector<2x128xf32>
    %1156 = arith.mulf %1153, %1155 : vector<2x128xf32>
    %1157 = arith.addf %1151, %1156 : vector<2x128xf32>
    %c0_1060 = arith.constant 0 : index
    %c2_1061 = arith.constant 2 : index
    %c0_1062 = arith.constant 0 : index
    %c0_1063 = arith.constant 0 : index
    %1158 = vector.load %arg2[%c0_1060, %c2_1061, %c0_1062, %c0_1063] : memref<1x4x2x128xf32, #tpu.memory_space<vmem>>, vector<1x1x2x128xf32>
    %1159 = vector.shape_cast %1158 : vector<1x1x2x128xf32> to vector<2x128xf32>
    %c2_1064 = arith.constant 2 : index
    %c14_1065 = arith.constant 14 : index
    %1160 = memref.load %arg4[%c2_1064, %c14_1065] : memref<4x16xf32, #tpu.memory_space<smem>>
    %1161 = vector.broadcast %1160 : f32 to vector<2x128xf32>
    %1162 = arith.mulf %1159, %1161 : vector<2x128xf32>
    %1163 = arith.addf %1157, %1162 : vector<2x128xf32>
    %c0_1066 = arith.constant 0 : index
    %c3_1067 = arith.constant 3 : index
    %c0_1068 = arith.constant 0 : index
    %c0_1069 = arith.constant 0 : index
    %1164 = vector.load %arg2[%c0_1066, %c3_1067, %c0_1068, %c0_1069] : memref<1x4x2x128xf32, #tpu.memory_space<vmem>>, vector<1x1x2x128xf32>
    %1165 = vector.shape_cast %1164 : vector<1x1x2x128xf32> to vector<2x128xf32>
    %c3_1070 = arith.constant 3 : index
    %c14_1071 = arith.constant 14 : index
    %1166 = memref.load %arg4[%c3_1070, %c14_1071] : memref<4x16xf32, #tpu.memory_space<smem>>
    %1167 = vector.broadcast %1166 : f32 to vector<2x128xf32>
    %1168 = arith.mulf %1165, %1167 : vector<2x128xf32>
    %1169 = arith.addf %1163, %1168 : vector<2x128xf32>
    %c0_1072 = arith.constant 0 : index
    %c0_1073 = arith.constant 0 : index
    %c0_1074 = arith.constant 0 : index
    %c0_1075 = arith.constant 0 : index
    %1170 = vector.load %arg3[%c0_1072, %c0_1073, %c0_1074, %c0_1075] : memref<1x8x2x128xf32, #tpu.memory_space<vmem>>, vector<1x1x2x128xf32>
    %1171 = vector.shape_cast %1170 : vector<1x1x2x128xf32> to vector<2x128xf32>
    %c0_1076 = arith.constant 0 : index
    %c14_1077 = arith.constant 14 : index
    %1172 = memref.load %arg6[%c0_1076, %c14_1077] : memref<8x16xf32, #tpu.memory_space<smem>>
    %1173 = vector.broadcast %1172 : f32 to vector<2x128xf32>
    %1174 = arith.mulf %1171, %1173 : vector<2x128xf32>
    %1175 = arith.addf %1169, %1174 : vector<2x128xf32>
    %c0_1078 = arith.constant 0 : index
    %c1_1079 = arith.constant 1 : index
    %c0_1080 = arith.constant 0 : index
    %c0_1081 = arith.constant 0 : index
    %1176 = vector.load %arg3[%c0_1078, %c1_1079, %c0_1080, %c0_1081] : memref<1x8x2x128xf32, #tpu.memory_space<vmem>>, vector<1x1x2x128xf32>
    %1177 = vector.shape_cast %1176 : vector<1x1x2x128xf32> to vector<2x128xf32>
    %c1_1082 = arith.constant 1 : index
    %c14_1083 = arith.constant 14 : index
    %1178 = memref.load %arg6[%c1_1082, %c14_1083] : memref<8x16xf32, #tpu.memory_space<smem>>
    %1179 = vector.broadcast %1178 : f32 to vector<2x128xf32>
    %1180 = arith.mulf %1177, %1179 : vector<2x128xf32>
    %1181 = arith.addf %1175, %1180 : vector<2x128xf32>
    %c0_1084 = arith.constant 0 : index
    %c2_1085 = arith.constant 2 : index
    %c0_1086 = arith.constant 0 : index
    %c0_1087 = arith.constant 0 : index
    %1182 = vector.load %arg3[%c0_1084, %c2_1085, %c0_1086, %c0_1087] : memref<1x8x2x128xf32, #tpu.memory_space<vmem>>, vector<1x1x2x128xf32>
    %1183 = vector.shape_cast %1182 : vector<1x1x2x128xf32> to vector<2x128xf32>
    %c2_1088 = arith.constant 2 : index
    %c14_1089 = arith.constant 14 : index
    %1184 = memref.load %arg6[%c2_1088, %c14_1089] : memref<8x16xf32, #tpu.memory_space<smem>>
    %1185 = vector.broadcast %1184 : f32 to vector<2x128xf32>
    %1186 = arith.mulf %1183, %1185 : vector<2x128xf32>
    %1187 = arith.addf %1181, %1186 : vector<2x128xf32>
    %c0_1090 = arith.constant 0 : index
    %c3_1091 = arith.constant 3 : index
    %c0_1092 = arith.constant 0 : index
    %c0_1093 = arith.constant 0 : index
    %1188 = vector.load %arg3[%c0_1090, %c3_1091, %c0_1092, %c0_1093] : memref<1x8x2x128xf32, #tpu.memory_space<vmem>>, vector<1x1x2x128xf32>
    %1189 = vector.shape_cast %1188 : vector<1x1x2x128xf32> to vector<2x128xf32>
    %c3_1094 = arith.constant 3 : index
    %c14_1095 = arith.constant 14 : index
    %1190 = memref.load %arg6[%c3_1094, %c14_1095] : memref<8x16xf32, #tpu.memory_space<smem>>
    %1191 = vector.broadcast %1190 : f32 to vector<2x128xf32>
    %1192 = arith.mulf %1189, %1191 : vector<2x128xf32>
    %1193 = arith.addf %1187, %1192 : vector<2x128xf32>
    %c0_1096 = arith.constant 0 : index
    %c4_1097 = arith.constant 4 : index
    %c0_1098 = arith.constant 0 : index
    %c0_1099 = arith.constant 0 : index
    %1194 = vector.load %arg3[%c0_1096, %c4_1097, %c0_1098, %c0_1099] : memref<1x8x2x128xf32, #tpu.memory_space<vmem>>, vector<1x1x2x128xf32>
    %1195 = vector.shape_cast %1194 : vector<1x1x2x128xf32> to vector<2x128xf32>
    %c4_1100 = arith.constant 4 : index
    %c14_1101 = arith.constant 14 : index
    %1196 = memref.load %arg6[%c4_1100, %c14_1101] : memref<8x16xf32, #tpu.memory_space<smem>>
    %1197 = vector.broadcast %1196 : f32 to vector<2x128xf32>
    %1198 = arith.mulf %1195, %1197 : vector<2x128xf32>
    %1199 = arith.addf %1193, %1198 : vector<2x128xf32>
    %c0_1102 = arith.constant 0 : index
    %c5_1103 = arith.constant 5 : index
    %c0_1104 = arith.constant 0 : index
    %c0_1105 = arith.constant 0 : index
    %1200 = vector.load %arg3[%c0_1102, %c5_1103, %c0_1104, %c0_1105] : memref<1x8x2x128xf32, #tpu.memory_space<vmem>>, vector<1x1x2x128xf32>
    %1201 = vector.shape_cast %1200 : vector<1x1x2x128xf32> to vector<2x128xf32>
    %c5_1106 = arith.constant 5 : index
    %c14_1107 = arith.constant 14 : index
    %1202 = memref.load %arg6[%c5_1106, %c14_1107] : memref<8x16xf32, #tpu.memory_space<smem>>
    %1203 = vector.broadcast %1202 : f32 to vector<2x128xf32>
    %1204 = arith.mulf %1201, %1203 : vector<2x128xf32>
    %1205 = arith.addf %1199, %1204 : vector<2x128xf32>
    %c0_1108 = arith.constant 0 : index
    %c6_1109 = arith.constant 6 : index
    %c0_1110 = arith.constant 0 : index
    %c0_1111 = arith.constant 0 : index
    %1206 = vector.load %arg3[%c0_1108, %c6_1109, %c0_1110, %c0_1111] : memref<1x8x2x128xf32, #tpu.memory_space<vmem>>, vector<1x1x2x128xf32>
    %1207 = vector.shape_cast %1206 : vector<1x1x2x128xf32> to vector<2x128xf32>
    %c6_1112 = arith.constant 6 : index
    %c14_1113 = arith.constant 14 : index
    %1208 = memref.load %arg6[%c6_1112, %c14_1113] : memref<8x16xf32, #tpu.memory_space<smem>>
    %1209 = vector.broadcast %1208 : f32 to vector<2x128xf32>
    %1210 = arith.mulf %1207, %1209 : vector<2x128xf32>
    %1211 = arith.addf %1205, %1210 : vector<2x128xf32>
    %c0_1114 = arith.constant 0 : index
    %c7_1115 = arith.constant 7 : index
    %c0_1116 = arith.constant 0 : index
    %c0_1117 = arith.constant 0 : index
    %1212 = vector.load %arg3[%c0_1114, %c7_1115, %c0_1116, %c0_1117] : memref<1x8x2x128xf32, #tpu.memory_space<vmem>>, vector<1x1x2x128xf32>
    %1213 = vector.shape_cast %1212 : vector<1x1x2x128xf32> to vector<2x128xf32>
    %c7_1118 = arith.constant 7 : index
    %c14_1119 = arith.constant 14 : index
    %1214 = memref.load %arg6[%c7_1118, %c14_1119] : memref<8x16xf32, #tpu.memory_space<smem>>
    %1215 = vector.broadcast %1214 : f32 to vector<2x128xf32>
    %1216 = arith.mulf %1213, %1215 : vector<2x128xf32>
    %1217 = arith.addf %1211, %1216 : vector<2x128xf32>
    %c14_1120 = arith.constant 14 : index
    %1218 = memref.load %arg5[%c14_1120] : memref<16xf32, #tpu.memory_space<smem>>
    %c14_1121 = arith.constant 14 : index
    %1219 = memref.load %arg7[%c14_1121] : memref<16xf32, #tpu.memory_space<smem>>
    %1220 = arith.addf %1218, %1219 : f32
    %1221 = vector.broadcast %1220 : f32 to vector<2x128xf32>
    %1222 = arith.addf %1217, %1221 : vector<2x128xf32>
    %cst_1122 = arith.constant 0.000000e+00 : f32
    %1223 = vector.broadcast %cst_1122 : f32 to vector<2x128xf32>
    %1224 = arith.maximumf %1222, %1223 : vector<2x128xf32>
    %c14_1123 = arith.constant 14 : index
    %1225 = memref.load %arg8[%c14_1123] : memref<16xf32, #tpu.memory_space<smem>>
    %1226 = vector.broadcast %1225 : f32 to vector<2x128xf32>
    %1227 = arith.mulf %1224, %1226 : vector<2x128xf32>
    %1228 = arith.addf %1146, %1227 : vector<2x128xf32>
    %c0_1124 = arith.constant 0 : index
    %c0_1125 = arith.constant 0 : index
    %c0_1126 = arith.constant 0 : index
    %c0_1127 = arith.constant 0 : index
    %1229 = vector.load %arg2[%c0_1124, %c0_1125, %c0_1126, %c0_1127] : memref<1x4x2x128xf32, #tpu.memory_space<vmem>>, vector<1x1x2x128xf32>
    %1230 = vector.shape_cast %1229 : vector<1x1x2x128xf32> to vector<2x128xf32>
    %c0_1128 = arith.constant 0 : index
    %c15 = arith.constant 15 : index
    %1231 = memref.load %arg4[%c0_1128, %c15] : memref<4x16xf32, #tpu.memory_space<smem>>
    %1232 = vector.broadcast %1231 : f32 to vector<2x128xf32>
    %1233 = arith.mulf %1230, %1232 : vector<2x128xf32>
    %c0_1129 = arith.constant 0 : index
    %c1_1130 = arith.constant 1 : index
    %c0_1131 = arith.constant 0 : index
    %c0_1132 = arith.constant 0 : index
    %1234 = vector.load %arg2[%c0_1129, %c1_1130, %c0_1131, %c0_1132] : memref<1x4x2x128xf32, #tpu.memory_space<vmem>>, vector<1x1x2x128xf32>
    %1235 = vector.shape_cast %1234 : vector<1x1x2x128xf32> to vector<2x128xf32>
    %c1_1133 = arith.constant 1 : index
    %c15_1134 = arith.constant 15 : index
    %1236 = memref.load %arg4[%c1_1133, %c15_1134] : memref<4x16xf32, #tpu.memory_space<smem>>
    %1237 = vector.broadcast %1236 : f32 to vector<2x128xf32>
    %1238 = arith.mulf %1235, %1237 : vector<2x128xf32>
    %1239 = arith.addf %1233, %1238 : vector<2x128xf32>
    %c0_1135 = arith.constant 0 : index
    %c2_1136 = arith.constant 2 : index
    %c0_1137 = arith.constant 0 : index
    %c0_1138 = arith.constant 0 : index
    %1240 = vector.load %arg2[%c0_1135, %c2_1136, %c0_1137, %c0_1138] : memref<1x4x2x128xf32, #tpu.memory_space<vmem>>, vector<1x1x2x128xf32>
    %1241 = vector.shape_cast %1240 : vector<1x1x2x128xf32> to vector<2x128xf32>
    %c2_1139 = arith.constant 2 : index
    %c15_1140 = arith.constant 15 : index
    %1242 = memref.load %arg4[%c2_1139, %c15_1140] : memref<4x16xf32, #tpu.memory_space<smem>>
    %1243 = vector.broadcast %1242 : f32 to vector<2x128xf32>
    %1244 = arith.mulf %1241, %1243 : vector<2x128xf32>
    %1245 = arith.addf %1239, %1244 : vector<2x128xf32>
    %c0_1141 = arith.constant 0 : index
    %c3_1142 = arith.constant 3 : index
    %c0_1143 = arith.constant 0 : index
    %c0_1144 = arith.constant 0 : index
    %1246 = vector.load %arg2[%c0_1141, %c3_1142, %c0_1143, %c0_1144] : memref<1x4x2x128xf32, #tpu.memory_space<vmem>>, vector<1x1x2x128xf32>
    %1247 = vector.shape_cast %1246 : vector<1x1x2x128xf32> to vector<2x128xf32>
    %c3_1145 = arith.constant 3 : index
    %c15_1146 = arith.constant 15 : index
    %1248 = memref.load %arg4[%c3_1145, %c15_1146] : memref<4x16xf32, #tpu.memory_space<smem>>
    %1249 = vector.broadcast %1248 : f32 to vector<2x128xf32>
    %1250 = arith.mulf %1247, %1249 : vector<2x128xf32>
    %1251 = arith.addf %1245, %1250 : vector<2x128xf32>
    %c0_1147 = arith.constant 0 : index
    %c0_1148 = arith.constant 0 : index
    %c0_1149 = arith.constant 0 : index
    %c0_1150 = arith.constant 0 : index
    %1252 = vector.load %arg3[%c0_1147, %c0_1148, %c0_1149, %c0_1150] : memref<1x8x2x128xf32, #tpu.memory_space<vmem>>, vector<1x1x2x128xf32>
    %1253 = vector.shape_cast %1252 : vector<1x1x2x128xf32> to vector<2x128xf32>
    %c0_1151 = arith.constant 0 : index
    %c15_1152 = arith.constant 15 : index
    %1254 = memref.load %arg6[%c0_1151, %c15_1152] : memref<8x16xf32, #tpu.memory_space<smem>>
    %1255 = vector.broadcast %1254 : f32 to vector<2x128xf32>
    %1256 = arith.mulf %1253, %1255 : vector<2x128xf32>
    %1257 = arith.addf %1251, %1256 : vector<2x128xf32>
    %c0_1153 = arith.constant 0 : index
    %c1_1154 = arith.constant 1 : index
    %c0_1155 = arith.constant 0 : index
    %c0_1156 = arith.constant 0 : index
    %1258 = vector.load %arg3[%c0_1153, %c1_1154, %c0_1155, %c0_1156] : memref<1x8x2x128xf32, #tpu.memory_space<vmem>>, vector<1x1x2x128xf32>
    %1259 = vector.shape_cast %1258 : vector<1x1x2x128xf32> to vector<2x128xf32>
    %c1_1157 = arith.constant 1 : index
    %c15_1158 = arith.constant 15 : index
    %1260 = memref.load %arg6[%c1_1157, %c15_1158] : memref<8x16xf32, #tpu.memory_space<smem>>
    %1261 = vector.broadcast %1260 : f32 to vector<2x128xf32>
    %1262 = arith.mulf %1259, %1261 : vector<2x128xf32>
    %1263 = arith.addf %1257, %1262 : vector<2x128xf32>
    %c0_1159 = arith.constant 0 : index
    %c2_1160 = arith.constant 2 : index
    %c0_1161 = arith.constant 0 : index
    %c0_1162 = arith.constant 0 : index
    %1264 = vector.load %arg3[%c0_1159, %c2_1160, %c0_1161, %c0_1162] : memref<1x8x2x128xf32, #tpu.memory_space<vmem>>, vector<1x1x2x128xf32>
    %1265 = vector.shape_cast %1264 : vector<1x1x2x128xf32> to vector<2x128xf32>
    %c2_1163 = arith.constant 2 : index
    %c15_1164 = arith.constant 15 : index
    %1266 = memref.load %arg6[%c2_1163, %c15_1164] : memref<8x16xf32, #tpu.memory_space<smem>>
    %1267 = vector.broadcast %1266 : f32 to vector<2x128xf32>
    %1268 = arith.mulf %1265, %1267 : vector<2x128xf32>
    %1269 = arith.addf %1263, %1268 : vector<2x128xf32>
    %c0_1165 = arith.constant 0 : index
    %c3_1166 = arith.constant 3 : index
    %c0_1167 = arith.constant 0 : index
    %c0_1168 = arith.constant 0 : index
    %1270 = vector.load %arg3[%c0_1165, %c3_1166, %c0_1167, %c0_1168] : memref<1x8x2x128xf32, #tpu.memory_space<vmem>>, vector<1x1x2x128xf32>
    %1271 = vector.shape_cast %1270 : vector<1x1x2x128xf32> to vector<2x128xf32>
    %c3_1169 = arith.constant 3 : index
    %c15_1170 = arith.constant 15 : index
    %1272 = memref.load %arg6[%c3_1169, %c15_1170] : memref<8x16xf32, #tpu.memory_space<smem>>
    %1273 = vector.broadcast %1272 : f32 to vector<2x128xf32>
    %1274 = arith.mulf %1271, %1273 : vector<2x128xf32>
    %1275 = arith.addf %1269, %1274 : vector<2x128xf32>
    %c0_1171 = arith.constant 0 : index
    %c4_1172 = arith.constant 4 : index
    %c0_1173 = arith.constant 0 : index
    %c0_1174 = arith.constant 0 : index
    %1276 = vector.load %arg3[%c0_1171, %c4_1172, %c0_1173, %c0_1174] : memref<1x8x2x128xf32, #tpu.memory_space<vmem>>, vector<1x1x2x128xf32>
    %1277 = vector.shape_cast %1276 : vector<1x1x2x128xf32> to vector<2x128xf32>
    %c4_1175 = arith.constant 4 : index
    %c15_1176 = arith.constant 15 : index
    %1278 = memref.load %arg6[%c4_1175, %c15_1176] : memref<8x16xf32, #tpu.memory_space<smem>>
    %1279 = vector.broadcast %1278 : f32 to vector<2x128xf32>
    %1280 = arith.mulf %1277, %1279 : vector<2x128xf32>
    %1281 = arith.addf %1275, %1280 : vector<2x128xf32>
    %c0_1177 = arith.constant 0 : index
    %c5_1178 = arith.constant 5 : index
    %c0_1179 = arith.constant 0 : index
    %c0_1180 = arith.constant 0 : index
    %1282 = vector.load %arg3[%c0_1177, %c5_1178, %c0_1179, %c0_1180] : memref<1x8x2x128xf32, #tpu.memory_space<vmem>>, vector<1x1x2x128xf32>
    %1283 = vector.shape_cast %1282 : vector<1x1x2x128xf32> to vector<2x128xf32>
    %c5_1181 = arith.constant 5 : index
    %c15_1182 = arith.constant 15 : index
    %1284 = memref.load %arg6[%c5_1181, %c15_1182] : memref<8x16xf32, #tpu.memory_space<smem>>
    %1285 = vector.broadcast %1284 : f32 to vector<2x128xf32>
    %1286 = arith.mulf %1283, %1285 : vector<2x128xf32>
    %1287 = arith.addf %1281, %1286 : vector<2x128xf32>
    %c0_1183 = arith.constant 0 : index
    %c6_1184 = arith.constant 6 : index
    %c0_1185 = arith.constant 0 : index
    %c0_1186 = arith.constant 0 : index
    %1288 = vector.load %arg3[%c0_1183, %c6_1184, %c0_1185, %c0_1186] : memref<1x8x2x128xf32, #tpu.memory_space<vmem>>, vector<1x1x2x128xf32>
    %1289 = vector.shape_cast %1288 : vector<1x1x2x128xf32> to vector<2x128xf32>
    %c6_1187 = arith.constant 6 : index
    %c15_1188 = arith.constant 15 : index
    %1290 = memref.load %arg6[%c6_1187, %c15_1188] : memref<8x16xf32, #tpu.memory_space<smem>>
    %1291 = vector.broadcast %1290 : f32 to vector<2x128xf32>
    %1292 = arith.mulf %1289, %1291 : vector<2x128xf32>
    %1293 = arith.addf %1287, %1292 : vector<2x128xf32>
    %c0_1189 = arith.constant 0 : index
    %c7_1190 = arith.constant 7 : index
    %c0_1191 = arith.constant 0 : index
    %c0_1192 = arith.constant 0 : index
    %1294 = vector.load %arg3[%c0_1189, %c7_1190, %c0_1191, %c0_1192] : memref<1x8x2x128xf32, #tpu.memory_space<vmem>>, vector<1x1x2x128xf32>
    %1295 = vector.shape_cast %1294 : vector<1x1x2x128xf32> to vector<2x128xf32>
    %c7_1193 = arith.constant 7 : index
    %c15_1194 = arith.constant 15 : index
    %1296 = memref.load %arg6[%c7_1193, %c15_1194] : memref<8x16xf32, #tpu.memory_space<smem>>
    %1297 = vector.broadcast %1296 : f32 to vector<2x128xf32>
    %1298 = arith.mulf %1295, %1297 : vector<2x128xf32>
    %1299 = arith.addf %1293, %1298 : vector<2x128xf32>
    %c15_1195 = arith.constant 15 : index
    %1300 = memref.load %arg5[%c15_1195] : memref<16xf32, #tpu.memory_space<smem>>
    %c15_1196 = arith.constant 15 : index
    %1301 = memref.load %arg7[%c15_1196] : memref<16xf32, #tpu.memory_space<smem>>
    %1302 = arith.addf %1300, %1301 : f32
    %1303 = vector.broadcast %1302 : f32 to vector<2x128xf32>
    %1304 = arith.addf %1299, %1303 : vector<2x128xf32>
    %cst_1197 = arith.constant 0.000000e+00 : f32
    %1305 = vector.broadcast %cst_1197 : f32 to vector<2x128xf32>
    %1306 = arith.maximumf %1304, %1305 : vector<2x128xf32>
    %c15_1198 = arith.constant 15 : index
    %1307 = memref.load %arg8[%c15_1198] : memref<16xf32, #tpu.memory_space<smem>>
    %1308 = vector.broadcast %1307 : f32 to vector<2x128xf32>
    %1309 = arith.mulf %1306, %1308 : vector<2x128xf32>
    %1310 = arith.addf %1228, %1309 : vector<2x128xf32>
    %c0_1199 = arith.constant 0 : index
    %1311 = memref.load %arg9[%c0_1199] : memref<1xf32, #tpu.memory_space<smem>>
    %1312 = vector.broadcast %1311 : f32 to vector<2x128xf32>
    %1313 = arith.addf %1310, %1312 : vector<2x128xf32>
    %1314 = arith.negf %1313 : vector<2x128xf32>
    %1315 = math.exp %1314 : vector<2x128xf32>
    %cst_1200 = arith.constant 1.000000e+00 : f32
    %1316 = vector.broadcast %cst_1200 : f32 to vector<2x128xf32>
    %1317 = arith.addf %1316, %1315 : vector<2x128xf32>
    %1318 = arith.divf %1316, %1317 : vector<2x128xf32>
    %c0_1201 = arith.constant 0 : index
    %c0_1202 = arith.constant 0 : index
    %c0_1203 = arith.constant 0 : index
    %c0_1204 = arith.constant 0 : index
    %1319 = vector.load %arg2[%c0_1201, %c0_1202, %c0_1203, %c0_1204] : memref<1x4x2x128xf32, #tpu.memory_space<vmem>>, vector<1x4x2x128xf32>
    %1320 = vector.shape_cast %1319 : vector<1x4x2x128xf32> to vector<4x2x128xf32>
    %1321 = vector.shape_cast %1318 : vector<2x128xf32> to vector<1x2x128xf32>
    %1322 = vector.broadcast %1321 : vector<1x2x128xf32> to vector<4x2x128xf32>
    %1323 = arith.mulf %1320, %1322 : vector<4x2x128xf32>
    %c0_1205 = arith.constant 0 : index
    %c0_1206 = arith.constant 0 : index
    %c0_1207 = arith.constant 0 : index
    %c0_1208 = arith.constant 0 : index
    %1324 = vector.load %arg10[%c0_1205, %c0_1206, %c0_1207, %c0_1208] : memref<1x4x2x128xf32, #tpu.memory_space<vmem>>, vector<1x4x2x128xf32>
    %1325 = vector.shape_cast %1324 : vector<1x4x2x128xf32> to vector<4x2x128xf32>
    %1326 = vector.shape_cast %1323 : vector<4x2x128xf32> to vector<1x4x2x128xf32>
    tpu.vector_store %arg10[%c0_1205, %c0_1206, %c0_1207, %c0_1208], %1326 {strides = array<i32>} : memref<1x4x2x128xf32, #tpu.memory_space<vmem>>, vector<1x4x2x128xf32>,
    return
  }
  func.func @transform_0(%arg0: i32, %arg1: i32) -> (i32, i32, i32, i32) {
    %c0_i32 = arith.constant 0 : i32
    %c0_i32_0 = arith.constant 0 : i32
    %c0_i32_1 = arith.constant 0 : i32
    return %arg0, %c0_i32, %arg1, %c0_i32_0 : i32, i32, i32, i32
  }
  func.func @transform_1(%arg0: i32, %arg1: i32) -> (i32, i32, i32, i32) {
    %c0_i32 = arith.constant 0 : i32
    %c0_i32_0 = arith.constant 0 : i32
    %c0_i32_1 = arith.constant 0 : i32
    return %arg0, %c0_i32, %arg1, %c0_i32_0 : i32, i32, i32, i32
  }
  func.func @transform_2(%arg0: i32, %arg1: i32) -> (i32, i32) {
    %c0_i32 = arith.constant 0 : i32
    %c0_i32_0 = arith.constant 0 : i32
    %c0_i32_1 = arith.constant 0 : i32
    return %c0_i32, %c0_i32_0 : i32, i32
  }
  func.func @transform_3(%arg0: i32, %arg1: i32) -> i32 {
    %c0_i32 = arith.constant 0 : i32
    %c0_i32_0 = arith.constant 0 : i32
    return %c0_i32 : i32
  }
  func.func @transform_4(%arg0: i32, %arg1: i32) -> (i32, i32) {
    %c0_i32 = arith.constant 0 : i32
    %c0_i32_0 = arith.constant 0 : i32
    %c0_i32_1 = arith.constant 0 : i32
    return %c0_i32, %c0_i32_0 : i32, i32
  }
  func.func @transform_5(%arg0: i32, %arg1: i32) -> i32 {
    %c0_i32 = arith.constant 0 : i32
    %c0_i32_0 = arith.constant 0 : i32
    return %c0_i32 : i32
  }
  func.func @transform_6(%arg0: i32, %arg1: i32) -> i32 {
    %c0_i32 = arith.constant 0 : i32
    %c0_i32_0 = arith.constant 0 : i32
    return %c0_i32 : i32
  }
  func.func @transform_7(%arg0: i32, %arg1: i32) -> i32 {
    %c0_i32 = arith.constant 0 : i32
    %c0_i32_0 = arith.constant 0 : i32
    return %c0_i32 : i32
  }
  func.func @transform_8(%arg0: i32, %arg1: i32) -> (i32, i32, i32, i32) {
    %c0_i32 = arith.constant 0 : i32
    %c0_i32_0 = arith.constant 0 : i32
    %c0_i32_1 = arith.constant 0 : i32
    return %arg0, %c0_i32, %arg1, %c0_i32_0 : i32, i32, i32, i32
  }
}

</mosaic_0001>

<llo_original>
// kernel: tpu_custom_call.1
$region0: #{tpu_custom_call.1}
  #allocation0 [shape = 'u32[]', space=smem, size = 0x4, offset = 0x4, fixed_abs, tag = 'smem constant byte address 0x4 - core index']
  #allocation1 [shape = 'u32[144,128]{1,0:T(1,128)}', space=vmem, size = 0x12000, scoped, tag = 'internal scratch']
  #allocation2 [shape = 'f32[1]{0:T(128)S(6)}', space=smem, size = 0x200, scoped, tag = 'scoped memory for tpu_custom_call.1']
  %s0 = inlined_call_operand.hbm [shape: f32[2,4,2,128], index: 0, kind: input, shape index: {}]
  %s1 = inlined_call_operand.hbm [shape: f32[2,8,2,128], index: 1, kind: input, shape index: {}]
  %s2 = inlined_call_operand.vmem [shape: f32[4,16], index: 2, kind: input, shape index: {}]
  %s3 = inlined_call_operand.vmem [shape: f32[16], index: 3, kind: input, shape index: {}]
  %s4 = inlined_call_operand.vmem [shape: f32[8,16], index: 4, kind: input, shape index: {}]
  %s5 = inlined_call_operand.vmem [shape: f32[16], index: 5, kind: input, shape index: {}]
  %s6 = inlined_call_operand.vmem [shape: f32[16], index: 6, kind: input, shape index: {}]
  %s7 = inlined_call_operand.<no memory space> [shape: f32[1], index: 7, kind: input, shape index: {}]
  %s8 = inlined_call_operand.hbm [shape: f32[2,4,2,128], index: 8, kind: output, shape index: {}]
  %s9 = sld [smem:[#allocation0]]
  $region93: #{tpu_custom_call.1} parent=0
    _
  %s11 = ssub.s32 1, %s9
  %s12 = scalar_select 0, %s11, %s9
  %13 = sst [smem:[#allocation2]] %s7
  $region1: #{tpu_custom_call.1} parent=0
    #allocation3 [shape = 'u8[8192]{0}', space=vmem, size = 0x2000, scoped, tag = 'input window, operand 0']
    #allocation4 [shape = 's32[2]{0}', space=sflag, size = 0x8, scoped, tag = 'scoped memory for tpu_custom_call.1']
    #allocation5 [shape = 's32[2]{0}', space=sflag, size = 0x8, scoped, tag = 'scoped memory for tpu_custom_call.1']
    #allocation6 [shape = 's32[2]{0}', space=sflag, size = 0x8, scoped, tag = 'scoped memory for tpu_custom_call.1']
    #allocation7 [shape = 'u8[16384]{0}', space=vmem, size = 0x4000, scoped, tag = 'input window, operand 1']
    #allocation8 [shape = 's32[2]{0}', space=sflag, size = 0x8, scoped, tag = 'scoped memory for tpu_custom_call.1']
    #allocation9 [shape = 'u8[2048]{0}', space=smem, size = 0x800, scoped, tag = 'input window, operand 2, single buffered']
    #allocation10 [shape = 'u8[512]{0}', space=smem, size = 0x200, scoped, tag = 'input window, operand 3, single buffered']
    #allocation11 [shape = 's32[1]{0}', space=sflag, size = 0x4, scoped, tag = 'scoped memory for tpu_custom_call.1']
    #allocation12 [shape = 'u8[4096]{0}', space=smem, size = 0x1000, scoped, tag = 'input window, operand 4, single buffered']
    #allocation13 [shape = 'u8[512]{0}', space=smem, size = 0x200, scoped, tag = 'input window, operand 5, single buffered']
    #allocation14 [shape = 's32[1]{0}', space=sflag, size = 0x4, scoped, tag = 'scoped memory for tpu_custom_call.1']
    #allocation15 [shape = 'u8[512]{0}', space=smem, size = 0x200, scoped, tag = 'input window, operand 6, single buffered']
    #allocation16 [shape = 'u8[8192]{0}', space=vmem, size = 0x2000, scoped, tag = 'output window, operand 0']
    %14 = vsyncpa [#allocation4], 0
    %s15 = scalar_lea.sflag [#allocation4], 1
    %16 = vsyncpa %s15, 0
    %17 = vsyncpa [#allocation8], 0
    %s18 = scalar_lea.sflag [#allocation8], 1
    %19 = vsyncpa %s18, 0
    %20 = vsyncpa [#allocation6], 0
    %21 = vsyncpa [#allocation11], 0
    %22 = vsyncpa [#allocation14], 0
    %23 = vsyncpa [#allocation5], 0
    %s24 = scalar_lea.sflag [#allocation5], 1
    %25 = vsyncpa %s24, 0
    loop: start=0, step=1, limit=4
    $region2: #{tpu_custom_call.1} parent=1 // loop_pre_header
      _
    $region3: #{tpu_custom_call.1} parent=1 // loop_header
      %s27 = sphi 0, %s31
      %p28 = scmp.ge.s32.totalorder %s27, 4
      %s34 = sphi 0, %s46
      %s35 = sphi 0, %s42
      %s36 = sphi 0, %s34
      %s37 = sphi 0, %s35
      %s38 = sphi 0, %s36
      %s39 = sphi 0, %s37
      %s51 = sphi 0, %s53
      %s54 = sphi 0, %s51
      %s55 = sphi 0, %s54
      %s71 = sphi 0, %s55
      %s79 = sphi 0, %s81
      %s82 = sphi 0, %s79
      %s83 = sphi 0, %s82
      %s99 = sphi 0, %s83
      %s103 = sphi 0, %s103
      %s105 = sphi 0, %s103
      %s106 = sphi 0, %s105
      %s120 = sphi 0, %s106
      %s124 = sphi 0, %s124
      %s126 = sphi 0, %s124
      %s127 = sphi 0, %s126
      %s141 = sphi 0, %s127
      %s145 = sphi 0, %s145
      %s147 = sphi 0, %s145
      %s148 = sphi 0, %s147
      %s162 = sphi 0, %s148
      %s166 = sphi 0, %s166
      %s168 = sphi 0, %s166
      %s169 = sphi 0, %s168
      %s183 = sphi 0, %s169
      %s187 = sphi 0, %s187
      %s189 = sphi 0, %s187
      %s190 = sphi 0, %s189
      %s204 = sphi 0, %s190
      %s208 = sphi 0, %s208
      %s210 = sphi 0, %s208
      %s211 = sphi 0, %s210
      %s225 = sphi 0, %s211
      %s233 = sphi 0, %s235
      %s236 = sphi 0, %s233
      %s237 = sphi 0, %s236
      %s253 = sphi 0, %s237
    $region4: #{tpu_custom_call.1} parent=1 // loop_header_branch
      %30 = sbr.rel (%p28) target = $region8
    $region5: #{tpu_custom_call.1} parent=1 // loop_body
      %s32 = ssub.s32 %s27, 1
      %s33 = ssub.s32 %s27, 2
      %s40 = sadd.s32 1, %s35
      %p41 = scmp.ge.s32.totalorder %s40, 1
      %s42 = scalar_select %p41, 0, %s40
      %s43 = sadd.s32 1, %s34
      %s44 = scalar_select %p41, %s43, %s34
      %p45 = scmp.ge.s32.totalorder %s44, 2
      %s46 = scalar_select %p45, 0, %s44
      %s47 = ssub.s32 %s34, %s46
      %s48 = ssub.s32 %s35, %s42
      %s49 = sor.u32 %s47, %s48
      %p50 = scmp.eq.s32.totalorder %s49, 0
      %s52 = sadd.s32 %s51, 1
      %s53 = scalar_select %p50, %s51, %s52
      %p56 = pneg %p50
      %p57 = scmp.eq.s32.totalorder %s27, 1
      %p58 = por %p56, %p57
      %p59 = scmp.ne.s32.totalorder %s51, %s54
      %p60 = scmp.eq.s32.totalorder %s27, 0
      %p61 = por %p59, %p60
      %p62 = scmp.ne.s32.totalorder %s51, %s54
      %p63 = scmp.eq.s32.totalorder %s32, 1
      %p64 = por %p62, %p63
      %p65 = scmp.ne.s32.totalorder %s54, %s55
      %p66 = scmp.eq.s32.totalorder %s32, 0
      %p67 = por %p65, %p66
      %p68 = scmp.ne.s32.totalorder %s54, %s55
      %p69 = scmp.eq.s32.totalorder %s33, 1
      %p70 = por %p68, %p69
      %p72 = scmp.ne.s32.totalorder %s55, %s71
      %p73 = scmp.eq.s32.totalorder %s33, 0
      %p74 = por %p72, %p73
      %s75 = ssub.s32 %s34, %s46
      %s76 = ssub.s32 %s35, %s42
      %s77 = sor.u32 %s75, %s76
      %p78 = scmp.eq.s32.totalorder %s77, 0
      %s80 = sadd.s32 %s79, 1
      %s81 = scalar_select %p78, %s79, %s80
      %p84 = pneg %p78
      %p85 = scmp.eq.s32.totalorder %s27, 1
      %p86 = por %p84, %p85
      %p87 = scmp.ne.s32.totalorder %s79, %s82
      %p88 = scmp.eq.s32.totalorder %s27, 0
      %p89 = por %p87, %p88
      %p90 = scmp.ne.s32.totalorder %s79, %s82
      %p91 = scmp.eq.s32.totalorder %s32, 1
      %p92 = por %p90, %p91
      %p93 = scmp.ne.s32.totalorder %s82, %s83
      %p94 = scmp.eq.s32.totalorder %s32, 0
      %p95 = por %p93, %p94
      %p96 = scmp.ne.s32.totalorder %s82, %s83
      %p97 = scmp.eq.s32.totalorder %s33, 1
      %p98 = por %p96, %p97
      %p100 = scmp.ne.s32.totalorder %s83, %s99
      %p101 = scmp.eq.s32.totalorder %s33, 0
      %p102 = por %p100, %p101
      %s104 = sadd.s32 %s103, 1
      %p107 = scmp.eq.s32.totalorder %s27, 1
      %p108 = scmp.ne.s32.totalorder %s103, %s105
      %p109 = scmp.eq.s32.totalorder %s27, 0
      %p110 = por %p108, %p109
      %p111 = scmp.ne.s32.totalorder %s103, %s105
      %p112 = scmp.eq.s32.totalorder %s32, 1
      %p113 = por %p111, %p112
      %p114 = scmp.ne.s32.totalorder %s105, %s106
      %p115 = scmp.eq.s32.totalorder %s32, 0
      %p116 = por %p114, %p115
      %p117 = scmp.ne.s32.totalorder %s105, %s106
      %p118 = scmp.eq.s32.totalorder %s33, 1
      %p119 = por %p117, %p118
      %p121 = scmp.ne.s32.totalorder %s106, %s120
      %p122 = scmp.eq.s32.totalorder %s33, 0
      %p123 = por %p121, %p122
      %s125 = sadd.s32 %s124, 1
      %p128 = scmp.eq.s32.totalorder %s27, 1
      %p129 = scmp.ne.s32.totalorder %s124, %s126
      %p130 = scmp.eq.s32.totalorder %s27, 0
      %p131 = por %p129, %p130
      %p132 = scmp.ne.s32.totalorder %s124, %s126
      %p133 = scmp.eq.s32.totalorder %s32, 1
      %p134 = por %p132, %p133
      %p135 = scmp.ne.s32.totalorder %s126, %s127
      %p136 = scmp.eq.s32.totalorder %s32, 0
      %p137 = por %p135, %p136
      %p138 = scmp.ne.s32.totalorder %s126, %s127
      %p139 = scmp.eq.s32.totalorder %s33, 1
      %p140 = por %p138, %p139
      %p142 = scmp.ne.s32.totalorder %s127, %s141
      %p143 = scmp.eq.s32.totalorder %s33, 0
      %p144 = por %p142, %p143
      %s146 = sadd.s32 %s145, 1
      %p149 = scmp.eq.s32.totalorder %s27, 1
      %p150 = scmp.ne.s32.totalorder %s145, %s147
      %p151 = scmp.eq.s32.totalorder %s27, 0
      %p152 = por %p150, %p151
      %p153 = scmp.ne.s32.totalorder %s145, %s147
      %p154 = scmp.eq.s32.totalorder %s32, 1
      %p155 = por %p153, %p154
      %p156 = scmp.ne.s32.totalorder %s147, %s148
      %p157 = scmp.eq.s32.totalorder %s32, 0
      %p158 = por %p156, %p157
      %p159 = scmp.ne.s32.totalorder %s147, %s148
      %p160 = scmp.eq.s32.totalorder %s33, 1
      %p161 = por %p159, %p160
      %p163 = scmp.ne.s32.totalorder %s148, %s162
      %p164 = scmp.eq.s32.totalorder %s33, 0
      %p165 = por %p163, %p164
      %s167 = sadd.s32 %s166, 1
      %p170 = scmp.eq.s32.totalorder %s27, 1
      %p171 = scmp.ne.s32.totalorder %s166, %s168
      %p172 = scmp.eq.s32.totalorder %s27, 0
      %p173 = por %p171, %p172
      %p174 = scmp.ne.s32.totalorder %s166, %s168
      %p175 = scmp.eq.s32.totalorder %s32, 1
      %p176 = por %p174, %p175
      %p177 = scmp.ne.s32.totalorder %s168, %s169
      %p178 = scmp.eq.s32.totalorder %s32, 0
      %p179 = por %p177, %p178
      %p180 = scmp.ne.s32.totalorder %s168, %s169
      %p181 = scmp.eq.s32.totalorder %s33, 1
      %p182 = por %p180, %p181
      %p184 = scmp.ne.s32.totalorder %s169, %s183
      %p185 = scmp.eq.s32.totalorder %s33, 0
      %p186 = por %p184, %p185
      %s188 = sadd.s32 %s187, 1
      %p191 = scmp.eq.s32.totalorder %s27, 1
      %p192 = scmp.ne.s32.totalorder %s187, %s189
      %p193 = scmp.eq.s32.totalorder %s27, 0
      %p194 = por %p192, %p193
      %p195 = scmp.ne.s32.totalorder %s187, %s189
      %p196 = scmp.eq.s32.totalorder %s32, 1
      %p197 = por %p195, %p196
      %p198 = scmp.ne.s32.totalorder %s189, %s190
      %p199 = scmp.eq.s32.totalorder %s32, 0
      %p200 = por %p198, %p199
      %p201 = scmp.ne.s32.totalorder %s189, %s190
      %p202 = scmp.eq.s32.totalorder %s33, 1
      %p203 = por %p201, %p202
      %p205 = scmp.ne.s32.totalorder %s190, %s204
      %p206 = scmp.eq.s32.totalorder %s33, 0
      %p207 = por %p205, %p206
      %s209 = sadd.s32 %s208, 1
      %p212 = scmp.eq.s32.totalorder %s27, 1
      %p213 = scmp.ne.s32.totalorder %s208, %s210
      %p214 = scmp.eq.s32.totalorder %s27, 0
      %p215 = por %p213, %p214
      %p216 = scmp.ne.s32.totalorder %s208, %s210
      %p217 = scmp.eq.s32.totalorder %s32, 1
      %p218 = por %p216, %p217
      %p219 = scmp.ne.s32.totalorder %s210, %s211
      %p220 = scmp.eq.s32.totalorder %s32, 0
      %p221 = por %p219, %p220
      %p222 = scmp.ne.s32.totalorder %s210, %s211
      %p223 = scmp.eq.s32.totalorder %s33, 1
      %p224 = por %p222, %p223
      %p226 = scmp.ne.s32.totalorder %s211, %s225
      %p227 = scmp.eq.s32.totalorder %s33, 0
      %p228 = por %p226, %p227
      %s229 = ssub.s32 %s34, %s46
      %s230 = ssub.s32 %s35, %s42
      %s231 = sor.u32 %s229, %s230
      %p232 = scmp.eq.s32.totalorder %s231, 0
      %s234 = sadd.s32 %s233, 1
      %s235 = scalar_select %p232, %s233, %s234
      %p238 = pneg %p232
      %p239 = scmp.eq.s32.totalorder %s27, 1
      %p240 = por %p238, %p239
      %p241 = scmp.ne.s32.totalorder %s233, %s236
      %p242 = scmp.eq.s32.totalorder %s27, 0
      %p243 = por %p241, %p242
      %p244 = scmp.ne.s32.totalorder %s233, %s236
      %p245 = scmp.eq.s32.totalorder %s32, 1
      %p246 = por %p244, %p245
      %p247 = scmp.ne.s32.totalorder %s236, %s237
      %p248 = scmp.eq.s32.totalorder %s32, 0
      %p249 = por %p247, %p248
      %p250 = scmp.ne.s32.totalorder %s236, %s237
      %p251 = scmp.eq.s32.totalorder %s33, 1
      %p252 = por %p250, %p251
      %p254 = scmp.ne.s32.totalorder %s237, %s253
      %p255 = scmp.eq.s32.totalorder %s33, 0
      %p256 = por %p254, %p255
      %p257 = scmp.le.s32.totalorder 1, %s27
      %p258 = scmp.lt.s32.totalorder %s27, 3
      %p259 = pnand %p257, %p258
      %p260 = pneg %p259
      // Predicated region
      $region9: #{tpu_custom_call.1} parent=5 // pred_check
        _
      $region10: #{tpu_custom_call.1} parent=5 // pred_check_branch
        %262 = sbr.rel (%p259) target = $region12
      $region11: #{tpu_custom_call.1} parent=5 // pred_region
        %s263 = ssub.s32 %s27, 1
        // Predicated region
        $region13: #{tpu_custom_call.1} parent=11 // pred_check
          %p264 = pneg %p116
        $region14: #{tpu_custom_call.1} parent=11 // pred_check_branch
          %266 = sbr.rel (%p264) target = $region16
        $region15: #{tpu_custom_call.1} parent=11 // pred_region
          %s268 = ssub.s32 64, 64
          %269 = vsyncadd [#allocation6], %s268
          %s271 = sshll.u32 %s2, 4
          %s272 = int_to_ptr.vmem [resolvable:$true] %s271
          %274 = dma.vmem_to_smem %s272, 64, [#allocation9], [#allocation6]
        $region16: #{tpu_custom_call.1} parent=11 // pred_fallthru
          _
        // Predicated region
        $region17: #{tpu_custom_call.1} parent=11 // pred_check
          %p275 = pneg %p137
        $region18: #{tpu_custom_call.1} parent=11 // pred_check_branch
          %277 = sbr.rel (%p275) target = $region20
        $region19: #{tpu_custom_call.1} parent=11 // pred_region
          %s279 = ssub.s32 16, 16
          %280 = vsyncadd [#allocation11], %s279
          %s282 = sshll.u32 %s3, 4
          %s283 = int_to_ptr.vmem [resolvable:$true] %s282
          %285 = dma.vmem_to_smem %s283, 16, [#allocation10], [#allocation11]
        $region20: #{tpu_custom_call.1} parent=11 // pred_fallthru
          _
        // Predicated region
        $region21: #{tpu_custom_call.1} parent=11 // pred_check
          %p286 = pneg %p158
        $region22: #{tpu_custom_call.1} parent=11 // pred_check_branch
          %288 = sbr.rel (%p286) target = $region24
        $region23: #{tpu_custom_call.1} parent=11 // pred_region
          %s290 = ssub.s32 128, 128
          %291 = vsyncadd [#allocation11], %s290
          %s293 = sshll.u32 %s4, 4
          %s294 = int_to_ptr.vmem [resolvable:$true] %s293
          %296 = dma.vmem_to_smem %s294, 128, [#allocation12], [#allocation11]
        $region24: #{tpu_custom_call.1} parent=11 // pred_fallthru
          _
        // Predicated region
        $region25: #{tpu_custom_call.1} parent=11 // pred_check
          %p297 = pneg %p179
        $region26: #{tpu_custom_call.1} parent=11 // pred_check_branch
          %299 = sbr.rel (%p297) target = $region28
        $region27: #{tpu_custom_call.1} parent=11 // pred_region
          %s301 = ssub.s32 16, 16
          %302 = vsyncadd [#allocation14], %s301
          %s304 = sshll.u32 %s5, 4
          %s305 = int_to_ptr.vmem [resolvable:$true] %s304
          %307 = dma.vmem_to_smem %s305, 16, [#allocation13], [#allocation14]
        $region28: #{tpu_custom_call.1} parent=11 // pred_fallthru
          _
        // Predicated region
        $region29: #{tpu_custom_call.1} parent=11 // pred_check
          %p308 = pneg %p200
        $region30: #{tpu_custom_call.1} parent=11 // pred_check_branch
          %310 = sbr.rel (%p308) target = $region32
        $region31: #{tpu_custom_call.1} parent=11 // pred_region
          %s312 = ssub.s32 16, 16
          %313 = vsyncadd [#allocation14], %s312
          %s315 = sshll.u32 %s6, 4
          %s316 = int_to_ptr.vmem [resolvable:$true] %s315
          %318 = dma.vmem_to_smem %s316, 16, [#allocation15], [#allocation14]
        $region32: #{tpu_custom_call.1} parent=11 // pred_fallthru
          _
        // Predicated region
        $region33: #{tpu_custom_call.1} parent=11 // pred_check
          %p319 = pneg %p221
        $region34: #{tpu_custom_call.1} parent=11 // pred_check_branch
          %321 = sbr.rel (%p319) target = $region36
        $region35: #{tpu_custom_call.1} parent=11 // pred_region
          _
        $region36: #{tpu_custom_call.1} parent=11 // pred_fallthru
          _
      $region12: #{tpu_custom_call.1} parent=5 // pred_fallthru
        _
      %p322 = scmp.lt.s32.totalorder %s27, 2
      // Predicated region
      $region37: #{tpu_custom_call.1} parent=5 // pred_check
        %p323 = pneg %p322
      $region38: #{tpu_custom_call.1} parent=5 // pred_check_branch
        %325 = sbr.rel (%p323) target = $region40
      $region39: #{tpu_custom_call.1} parent=5 // pred_region
        // Predicated region
        $region41: #{tpu_custom_call.1} parent=39 // pred_check
          %p326 = pneg %p61
        $region42: #{tpu_custom_call.1} parent=39 // pred_check_branch
          %328 = sbr.rel (%p326) target = $region44
        $region43: #{tpu_custom_call.1} parent=39 // pred_region
          %s329 = sand.u32 %s51, 1
          %s330 = scalar_lea.sflag [#allocation4], %s329
          %s331 = sand.u32 %s51, 1
          %s332 = smul.addr %s331, 8
          %s333 = scalar_lea.vmem [#allocation3], %s332
          %s335 = ssub.s32 128, 128
          %336 = vsyncadd %s330, %s335
          %s337 = smul.addr %s34, 4
          %s338 = sadd.s32 %s35, %s337
          %s339 = smul.addr %s338, 32
          %s340 = scalar_lea.hbm %s0, %s339
          %s341 = sshll.u32 %s333, 4
          %s342 = int_to_ptr.vmem [resolvable:$true] %s341
          %347 = dma.hbm_to_vmem [thread:$0]  %s340, 128, %s342, %s330, 32, 32, 2
        $region44: #{tpu_custom_call.1} parent=39 // pred_fallthru
          _
        // Predicated region
        $region45: #{tpu_custom_call.1} parent=39 // pred_check
          %p348 = pneg %p89
        $region46: #{tpu_custom_call.1} parent=39 // pred_check_branch
          %350 = sbr.rel (%p348) target = $region48
        $region47: #{tpu_custom_call.1} parent=39 // pred_region
          %s351 = sand.u32 %s79, 1
          %s352 = scalar_lea.sflag [#allocation8], %s351
          %s353 = sand.u32 %s79, 1
          %s354 = smul.addr %s353, 16
          %s355 = scalar_lea.vmem [#allocation7], %s354
          %s357 = ssub.s32 256, 256
          %358 = vsyncadd %s352, %s357
          %s359 = smul.addr %s34, 8
          %s360 = sadd.s32 %s35, %s359
          %s361 = smul.addr %s360, 32
          %s362 = scalar_lea.hbm %s1, %s361
          %s363 = sshll.u32 %s355, 4
          %s364 = int_to_ptr.vmem [resolvable:$true] %s363
          %369 = dma.hbm_to_vmem [thread:$0]  %s362, 256, %s364, %s352, 32, 32, 2
        $region48: #{tpu_custom_call.1} parent=39 // pred_fallthru
          _
      $region40: #{tpu_custom_call.1} parent=5 // pred_fallthru
        _
      %p370 = scmp.le.s32.totalorder 1, %s27
      %p371 = scmp.lt.s32.totalorder %s27, 3
      %p372 = pnand %p370, %p371
      %p373 = pneg %p372
      // Predicated region
      $region49: #{tpu_custom_call.1} parent=5 // pred_check
        _
      $region50: #{tpu_custom_call.1} parent=5 // pred_check_branch
        %375 = sbr.rel (%p372) target = $region52
      $region51: #{tpu_custom_call.1} parent=5 // pred_region
        %s376 = ssub.s32 %s27, 1
        %s377 = sand.u32 %s54, 1
        %s378 = scalar_lea.sflag [#allocation4], %s377
        %s379 = sand.u32 %s54, 1
        %s380 = smul.addr %s379, 8
        %s381 = scalar_lea.vmem [#allocation3], %s380
        // Predicated region
        $region53: #{tpu_custom_call.1} parent=51 // pred_check
          %p382 = pneg %p67
        $region54: #{tpu_custom_call.1} parent=51 // pred_check_branch
          %384 = sbr.rel (%p382) target = $region56
        $region55: #{tpu_custom_call.1} parent=51 // pred_region
          %385 = dma.done %s378, 128
        $region56: #{tpu_custom_call.1} parent=51 // pred_fallthru
          _
        %s386 = sand.u32 %s82, 1
        %s387 = scalar_lea.sflag [#allocation8], %s386
        %s388 = sand.u32 %s82, 1
        %s389 = smul.addr %s388, 16
        %s390 = scalar_lea.vmem [#allocation7], %s389
        // Predicated region
        $region57: #{tpu_custom_call.1} parent=51 // pred_check
          %p391 = pneg %p95
        $region58: #{tpu_custom_call.1} parent=51 // pred_check_branch
          %393 = sbr.rel (%p391) target = $region60
        $region59: #{tpu_custom_call.1} parent=51 // pred_region
          %394 = dma.done %s387, 256
        $region60: #{tpu_custom_call.1} parent=51 // pred_fallthru
          _
        // Predicated region
        $region61: #{tpu_custom_call.1} parent=51 // pred_check
          %p395 = pneg %p116
        $region62: #{tpu_custom_call.1} parent=51 // pred_check_branch
          %397 = sbr.rel (%p395) target = $region64
        $region63: #{tpu_custom_call.1} parent=51 // pred_region
          %398 = dma.done [#allocation6], 64
        $region64: #{tpu_custom_call.1} parent=51 // pred_fallthru
          _
        // Predicated region
        $region65: #{tpu_custom_call.1} parent=51 // pred_check
          %p399 = pneg %p137
        $region66: #{tpu_custom_call.1} parent=51 // pred_check_branch
          %401 = sbr.rel (%p399) target = $region68
        $region67: #{tpu_custom_call.1} parent=51 // pred_region
          %402 = dma.done [#allocation11], 16
        $region68: #{tpu_custom_call.1} parent=51 // pred_fallthru
          _
        // Predicated region
        $region69: #{tpu_custom_call.1} parent=51 // pred_check
          %p403 = pneg %p158
        $region70: #{tpu_custom_call.1} parent=51 // pred_check_branch
          %405 = sbr.rel (%p403) target = $region72
        $region71: #{tpu_custom_call.1} parent=51 // pred_region
          %406 = dma.done [#allocation11], 128
        $region72: #{tpu_custom_call.1} parent=51 // pred_fallthru
          _
        // Predicated region
        $region73: #{tpu_custom_call.1} parent=51 // pred_check
          %p407 = pneg %p179
        $region74: #{tpu_custom_call.1} parent=51 // pred_check_branch
          %409 = sbr.rel (%p407) target = $region76
        $region75: #{tpu_custom_call.1} parent=51 // pred_region
          %410 = dma.done [#allocation14], 16
        $region76: #{tpu_custom_call.1} parent=51 // pred_fallthru
          _
        // Predicated region
        $region77: #{tpu_custom_call.1} parent=51 // pred_check
          %p411 = pneg %p200
        $region78: #{tpu_custom_call.1} parent=51 // pred_check_branch
          %413 = sbr.rel (%p411) target = $region80
        $region79: #{tpu_custom_call.1} parent=51 // pred_region
          %414 = dma.done [#allocation14], 16
        $region80: #{tpu_custom_call.1} parent=51 // pred_fallthru
          _
        %415 = sfence
        %s416 = sand.u32 %s54, 1
        %s417 = scalar_lea.sflag [#allocation4], %s416
        %s418 = sand.u32 %s54, 1
        %s419 = smul.addr %s418, 8
        %s420 = scalar_lea.vmem [#allocation3], %s419
        %p421 = pneg %p67
        %p422 = pneg %p64
        %s423 = sand.u32 %s82, 1
        %s424 = scalar_lea.sflag [#allocation8], %s423
        %s425 = sand.u32 %s82, 1
        %s426 = smul.addr %s425, 16
        %s427 = scalar_lea.vmem [#allocation7], %s426
        %p428 = pneg %p95
        %p429 = pneg %p92
        %p430 = pneg %p116
        %p431 = pneg %p113
        %p432 = pneg %p137
        %p433 = pneg %p134
        %p434 = pneg %p158
        %p435 = pneg %p155
        %p436 = pneg %p179
        %p437 = pneg %p176
        %p438 = pneg %p200
        %p439 = pneg %p197
        %p440 = pneg %p221
        %p441 = pneg %p218
        %p442 = pneg %p249
        %p443 = pneg %p246
        %s444 = sand.u32 %s236, 1
        %s445 = scalar_lea.sflag [#allocation5], %s444
        %s446 = sand.u32 %s236, 1
        %s447 = smul.addr %s446, 8
        %s448 = scalar_lea.vmem [#allocation16], %s447
        %v449 = vld [vmem:[%s381] sm:$0x3]
        %s450 = sld [smem:[#allocation9]]
        %v451 = vstv %s450
        %v452 = vmul.f32 %v449, %v451
        %s453 = scalar_lea.vmem %s381, 2 [#allocation3]
        %v454 = vld [vmem:[%s453] sm:$0x3]
        %s455 = sld [smem:[#allocation9 + $0x80]]
        %v456 = vstv %s455
        %v457 = vmul.f32 %v454, %v456
        %v458 = vadd.f32 %v452, %v457
        %s459 = scalar_lea.vmem %s381, 4 [#allocation3]
        %v460 = vld [vmem:[%s459] sm:$0x3]
        %s461 = sld [smem:[#allocation9 + $0x100]]
        %v462 = vstv %s461
        %v463 = vmul.f32 %v460, %v462
        %v464 = vadd.f32 %v458, %v463
        %s465 = scalar_lea.vmem %s381, 6 [#allocation3]
        %v466 = vld [vmem:[%s465] sm:$0x3]
        %s467 = sld [smem:[#allocation9 + $0x180]]
        %v468 = vstv %s467
        %v469 = vmul.f32 %v466, %v468
        %v470 = vadd.f32 %v464, %v469
        %v471 = vld [vmem:[%s390] sm:$0x3]
        %s472 = sld [smem:[#allocation12]]
        %v473 = vstv %s472
        %v474 = vmul.f32 %v471, %v473
        %v475 = vadd.f32 %v470, %v474
        %s476 = scalar_lea.vmem %s390, 2 [#allocation7]
        %v477 = vld [vmem:[%s476] sm:$0x3]
        %s478 = sld [smem:[#allocation12 + $0x80]]
        %v479 = vstv %s478
        %v480 = vmul.f32 %v477, %v479
        %v481 = vadd.f32 %v475, %v480
        %s482 = scalar_lea.vmem %s390, 4 [#allocation7]
        %v483 = vld [vmem:[%s482] sm:$0x3]
        %s484 = sld [smem:[#allocation12 + $0x100]]
        %v485 = vstv %s484
        %v486 = vmul.f32 %v483, %v485
        %v487 = vadd.f32 %v481, %v486
        %s488 = scalar_lea.vmem %s390, 6 [#allocation7]
        %v489 = vld [vmem:[%s488] sm:$0x3]
        %s490 = sld [smem:[#allocation12 + $0x180]]
        %v491 = vstv %s490
        %v492 = vmul.f32 %v489, %v491
        %v493 = vadd.f32 %v487, %v492
        %s494 = scalar_lea.vmem %s390, 8 [#allocation7]
        %v495 = vld [vmem:[%s494] sm:$0x3]
        %s496 = sld [smem:[#allocation12 + $0x200]]
        %v497 = vstv %s496
        %v498 = vmul.f32 %v495, %v497
        %v499 = vadd.f32 %v493, %v498
        %s500 = scalar_lea.vmem %s390, 10 [#allocation7]
        %v501 = vld [vmem:[%s500] sm:$0x3]
        %s502 = sld [smem:[#allocation12 + $0x280]]
        %v503 = vstv %s502
        %v504 = vmul.f32 %v501, %v503
        %v505 = vadd.f32 %v499, %v504
        %s506 = scalar_lea.vmem %s390, 12 [#allocation7]
        %v507 = vld [vmem:[%s506] sm:$0x3]
        %s508 = sld [smem:[#allocation12 + $0x300]]
        %v509 = vstv %s508
        %v510 = vmul.f32 %v507, %v509
        %v511 = vadd.f32 %v505, %v510
        %s512 = scalar_lea.vmem %s390, 14 [#allocation7]
        %v513 = vld [vmem:[%s512] sm:$0x3]
        %s514 = sld [smem:[#allocation12 + $0x380]]
        %v515 = vstv %s514
        %v516 = vmul.f32 %v513, %v515
        %v517 = vadd.f32 %v511, %v516
        %s518 = sld [smem:[#allocation10]]
        %s519 = sld [smem:[#allocation13]]
        %s520 = sadd.f32 %s518, %s519
        %v521 = vstv %s520
        %v522 = vadd.f32 %v517, %v521
        %v523 = vmax.f32 %v522, 0.0
        %s524 = sld [smem:[#allocation15]]
        %v525 = vstv %s524
        %v526 = vmul.f32 %v523, %v525
        %s527 = sld [smem:[#allocation9 + $0x1]]
        %v528 = vstv %s527
        %v529 = vmul.f32 %v449, %v528
        %s530 = sld [smem:[#allocation9 + $0x81]]
        %v531 = vstv %s530
        %v532 = vmul.f32 %v454, %v531
        %v533 = vadd.f32 %v529, %v532
        %s534 = sld [smem:[#allocation9 + $0x101]]
        %v535 = vstv %s534
        %v536 = vmul.f32 %v460, %v535
        %v537 = vadd.f32 %v533, %v536
        %s538 = sld [smem:[#allocation9 + $0x181]]
        %v539 = vstv %s538
        %v540 = vmul.f32 %v466, %v539
        %v541 = vadd.f32 %v537, %v540
        %s542 = sld [smem:[#allocation12 + $0x1]]
        %v543 = vstv %s542
        %v544 = vmul.f32 %v471, %v543
        %v545 = vadd.f32 %v541, %v544
        %s546 = sld [smem:[#allocation12 + $0x81]]
        %v547 = vstv %s546
        %v548 = vmul.f32 %v477, %v547
        %v549 = vadd.f32 %v545, %v548
        %s550 = sld [smem:[#allocation12 + $0x101]]
        %v551 = vstv %s550
        %v552 = vmul.f32 %v483, %v551
        %v553 = vadd.f32 %v549, %v552
        %s554 = sld [smem:[#allocation12 + $0x181]]
        %v555 = vstv %s554
        %v556 = vmul.f32 %v489, %v555
        %v557 = vadd.f32 %v553, %v556
        %s558 = sld [smem:[#allocation12 + $0x201]]
        %v559 = vstv %s558
        %v560 = vmul.f32 %v495, %v559
        %v561 = vadd.f32 %v557, %v560
        %s562 = sld [smem:[#allocation12 + $0x281]]
        %v563 = vstv %s562
        %v564 = vmul.f32 %v501, %v563
        %v565 = vadd.f32 %v561, %v564
        %s566 = sld [smem:[#allocation12 + $0x301]]
        %v567 = vstv %s566
        %v568 = vmul.f32 %v507, %v567
        %v569 = vadd.f32 %v565, %v568
        %s570 = sld [smem:[#allocation12 + $0x381]]
        %v571 = vstv %s570
        %v572 = vmul.f32 %v513, %v571
        %v573 = vadd.f32 %v569, %v572
        %s574 = sld [smem:[#allocation10 + $0x1]]
        %s575 = sld [smem:[#allocation13 + $0x1]]
        %s576 = sadd.f32 %s574, %s575
        %v577 = vstv %s576
        %v578 = vadd.f32 %v573, %v577
        %v579 = vmax.f32 %v578, 0.0
        %s580 = sld [smem:[#allocation15 + $0x1]]
        %v581 = vstv %s580
        %v582 = vmul.f32 %v579, %v581
        %v583 = vadd.f32 %v526, %v582
        %s584 = sld [smem:[#allocation9 + $0x2]]
        %v585 = vstv %s584
        %v586 = vmul.f32 %v449, %v585
        %s587 = sld [smem:[#allocation9 + $0x82]]
        %v588 = vstv %s587
        %v589 = vmul.f32 %v454, %v588
        %v590 = vadd.f32 %v586, %v589
        %s591 = sld [smem:[#allocation9 + $0x102]]
        %v592 = vstv %s591
        %v593 = vmul.f32 %v460, %v592
        %v594 = vadd.f32 %v590, %v593
        %s595 = sld [smem:[#allocation9 + $0x182]]
        %v596 = vstv %s595
        %v597 = vmul.f32 %v466, %v596
        %v598 = vadd.f32 %v594, %v597
        %s599 = sld [smem:[#allocation12 + $0x2]]
        %v600 = vstv %s599
        %v601 = vmul.f32 %v471, %v600
        %v602 = vadd.f32 %v598, %v601
        %s603 = sld [smem:[#allocation12 + $0x82]]
        %v604 = vstv %s603
        %v605 = vmul.f32 %v477, %v604
        %v606 = vadd.f32 %v602, %v605
        %s607 = sld [smem:[#allocation12 + $0x102]]
        %v608 = vstv %s607
        %v609 = vmul.f32 %v483, %v608
        %v610 = vadd.f32 %v606, %v609
        %s611 = sld [smem:[#allocation12 + $0x182]]
        %v612 = vstv %s611
        %v613 = vmul.f32 %v489, %v612
        %v614 = vadd.f32 %v610, %v613
        %s615 = sld [smem:[#allocation12 + $0x202]]
        %v616 = vstv %s615
        %v617 = vmul.f32 %v495, %v616
        %v618 = vadd.f32 %v614, %v617
        %s619 = sld [smem:[#allocation12 + $0x282]]
        %v620 = vstv %s619
        %v621 = vmul.f32 %v501, %v620
        %v622 = vadd.f32 %v618, %v621
        %s623 = sld [smem:[#allocation12 + $0x302]]
        %v624 = vstv %s623
        %v625 = vmul.f32 %v507, %v624
        %v626 = vadd.f32 %v622, %v625
        %s627 = sld [smem:[#allocation12 + $0x382]]
        %v628 = vstv %s627
        %v629 = vmul.f32 %v513, %v628
        %v630 = vadd.f32 %v626, %v629
        %s631 = sld [smem:[#allocation10 + $0x2]]
        %s632 = sld [smem:[#allocation13 + $0x2]]
        %s633 = sadd.f32 %s631, %s632
        %v634 = vstv %s633
        %v635 = vadd.f32 %v630, %v634
        %v636 = vmax.f32 %v635, 0.0
        %s637 = sld [smem:[#allocation15 + $0x2]]
        %v638 = vstv %s637
        %v639 = vmul.f32 %v636, %v638
        %v640 = vadd.f32 %v583, %v639
        %s641 = sld [smem:[#allocation9 + $0x3]]
        %v642 = vstv %s641
        %v643 = vmul.f32 %v449, %v642
        %s644 = sld [smem:[#allocation9 + $0x83]]
        %v645 = vstv %s644
        %v646 = vmul.f32 %v454, %v645
        %v647 = vadd.f32 %v643, %v646
        %s648 = sld [smem:[#allocation9 + $0x103]]
        %v649 = vstv %s648
        %v650 = vmul.f32 %v460, %v649
        %v651 = vadd.f32 %v647, %v650
        %s652 = sld [smem:[#allocation9 + $0x183]]
        %v653 = vstv %s652
        %v654 = vmul.f32 %v466, %v653
        %v655 = vadd.f32 %v651, %v654
        %s656 = sld [smem:[#allocation12 + $0x3]]
        %v657 = vstv %s656
        %v658 = vmul.f32 %v471, %v657
        %v659 = vadd.f32 %v655, %v658
        %s660 = sld [smem:[#allocation12 + $0x83]]
        %v661 = vstv %s660
        %v662 = vmul.f32 %v477, %v661
        %v663 = vadd.f32 %v659, %v662
        %s664 = sld [smem:[#allocation12 + $0x103]]
        %v665 = vstv %s664
        %v666 = vmul.f32 %v483, %v665
        %v667 = vadd.f32 %v663, %v666
        %s668 = sld [smem:[#allocation12 + $0x183]]
        %v669 = vstv %s668
        %v670 = vmul.f32 %v489, %v669
        %v671 = vadd.f32 %v667, %v670
        %s672 = sld [smem:[#allocation12 + $0x203]]
        %v673 = vstv %s672
        %v674 = vmul.f32 %v495, %v673
        %v675 = vadd.f32 %v671, %v674
        %s676 = sld [smem:[#allocation12 + $0x283]]
        %v677 = vstv %s676
        %v678 = vmul.f32 %v501, %v677
        %v679 = vadd.f32 %v675, %v678
        %s680 = sld [smem:[#allocation12 + $0x303]]
        %v681 = vstv %s680
        %v682 = vmul.f32 %v507, %v681
        %v683 = vadd.f32 %v679, %v682
        %s684 = sld [smem:[#allocation12 + $0x383]]
        %v685 = vstv %s684
        %v686 = vmul.f32 %v513, %v685
        %v687 = vadd.f32 %v683, %v686
        %s688 = sld [smem:[#allocation10 + $0x3]]
        %s689 = sld [smem:[#allocation13 + $0x3]]
        %s690 = sadd.f32 %s688, %s689
        %v691 = vstv %s690
        %v692 = vadd.f32 %v687, %v691
        %v693 = vmax.f32 %v692, 0.0
        %s694 = sld [smem:[#allocation15 + $0x3]]
        %v695 = vstv %s694
        %v696 = vmul.f32 %v693, %v695
        %v697 = vadd.f32 %v640, %v696
        %s698 = sld [smem:[#allocation9 + $0x4]]
        %v699 = vstv %s698
        %v700 = vmul.f32 %v449, %v699
        %s701 = sld [smem:[#allocation9 + $0x84]]
        %v702 = vstv %s701
        %v703 = vmul.f32 %v454, %v702
        %v704 = vadd.f32 %v700, %v703
        %s705 = sld [smem:[#allocation9 + $0x104]]
        %v706 = vstv %s705
        %v707 = vmul.f32 %v460, %v706
        %v708 = vadd.f32 %v704, %v707
        %s709 = sld [smem:[#allocation9 + $0x184]]
        %v710 = vstv %s709
        %v711 = vmul.f32 %v466, %v710
        %v712 = vadd.f32 %v708, %v711
        %s713 = sld [smem:[#allocation12 + $0x4]]
        %v714 = vstv %s713
        %v715 = vmul.f32 %v471, %v714
        %v716 = vadd.f32 %v712, %v715
        %s717 = sld [smem:[#allocation12 + $0x84]]
        %v718 = vstv %s717
        %v719 = vmul.f32 %v477, %v718
        %v720 = vadd.f32 %v716, %v719
        %s721 = sld [smem:[#allocation12 + $0x104]]
        %v722 = vstv %s721
        %v723 = vmul.f32 %v483, %v722
        %v724 = vadd.f32 %v720, %v723
        %s725 = sld [smem:[#allocation12 + $0x184]]
        %v726 = vstv %s725
        %v727 = vmul.f32 %v489, %v726
        %v728 = vadd.f32 %v724, %v727
        %s729 = sld [smem:[#allocation12 + $0x204]]
        %v730 = vstv %s729
        %v731 = vmul.f32 %v495, %v730
        %v732 = vadd.f32 %v728, %v731
        %s733 = sld [smem:[#allocation12 + $0x284]]
        %v734 = vstv %s733
        %v735 = vmul.f32 %v501, %v734
        %v736 = vadd.f32 %v732, %v735
        %s737 = sld [smem:[#allocation12 + $0x304]]
        %v738 = vstv %s737
        %v739 = vmul.f32 %v507, %v738
        %v740 = vadd.f32 %v736, %v739
        %s741 = sld [smem:[#allocation12 + $0x384]]
        %v742 = vstv %s741
        %v743 = vmul.f32 %v513, %v742
        %v744 = vadd.f32 %v740, %v743
        %s745 = sld [smem:[#allocation10 + $0x4]]
        %s746 = sld [smem:[#allocation13 + $0x4]]
        %s747 = sadd.f32 %s745, %s746
        %v748 = vstv %s747
        %v749 = vadd.f32 %v744, %v748
        %v750 = vmax.f32 %v749, 0.0
        %s751 = sld [smem:[#allocation15 + $0x4]]
        %v752 = vstv %s751
        %v753 = vmul.f32 %v750, %v752
        %v754 = vadd.f32 %v697, %v753
        %s755 = sld [smem:[#allocation9 + $0x5]]
        %v756 = vstv %s755
        %v757 = vmul.f32 %v449, %v756
        %s758 = sld [smem:[#allocation9 + $0x85]]
        %v759 = vstv %s758
        %v760 = vmul.f32 %v454, %v759
        %v761 = vadd.f32 %v757, %v760
        %s762 = sld [smem:[#allocation9 + $0x105]]
        %v763 = vstv %s762
        %v764 = vmul.f32 %v460, %v763
        %v765 = vadd.f32 %v761, %v764
        %s766 = sld [smem:[#allocation9 + $0x185]]
        %v767 = vstv %s766
        %v768 = vmul.f32 %v466, %v767
        %v769 = vadd.f32 %v765, %v768
        %s770 = sld [smem:[#allocation12 + $0x5]]
        %v771 = vstv %s770
        %v772 = vmul.f32 %v471, %v771
        %v773 = vadd.f32 %v769, %v772
        %s774 = sld [smem:[#allocation12 + $0x85]]
        %v775 = vstv %s774
        %v776 = vmul.f32 %v477, %v775
        %v777 = vadd.f32 %v773, %v776
        %s778 = sld [smem:[#allocation12 + $0x105]]
        %v779 = vstv %s778
        %v780 = vmul.f32 %v483, %v779
        %v781 = vadd.f32 %v777, %v780
        %s782 = sld [smem:[#allocation12 + $0x185]]
        %v783 = vstv %s782
        %v784 = vmul.f32 %v489, %v783
        %v785 = vadd.f32 %v781, %v784
        %s786 = sld [smem:[#allocation12 + $0x205]]
        %v787 = vstv %s786
        %v788 = vmul.f32 %v495, %v787
        %v789 = vadd.f32 %v785, %v788
        %s790 = sld [smem:[#allocation12 + $0x285]]
        %v791 = vstv %s790
        %v792 = vmul.f32 %v501, %v791
        %v793 = vadd.f32 %v789, %v792
        %s794 = sld [smem:[#allocation12 + $0x305]]
        %v795 = vstv %s794
        %v796 = vmul.f32 %v507, %v795
        %v797 = vadd.f32 %v793, %v796
        %s798 = sld [smem:[#allocation12 + $0x385]]
        %v799 = vstv %s798
        %v800 = vmul.f32 %v513, %v799
        %v801 = vadd.f32 %v797, %v800
        %s802 = sld [smem:[#allocation10 + $0x5]]
        %s803 = sld [smem:[#allocation13 + $0x5]]
        %s804 = sadd.f32 %s802, %s803
        %v805 = vstv %s804
        %v806 = vadd.f32 %v801, %v805
        %v807 = vmax.f32 %v806, 0.0
        %s808 = sld [smem:[#allocation15 + $0x5]]
        %v809 = vstv %s808
        %v810 = vmul.f32 %v807, %v809
        %v811 = vadd.f32 %v754, %v810
        %s812 = sld [smem:[#allocation9 + $0x6]]
        %v813 = vstv %s812
        %v814 = vmul.f32 %v449, %v813
        %s815 = sld [smem:[#allocation9 + $0x86]]
        %v816 = vstv %s815
        %v817 = vmul.f32 %v454, %v816
        %v818 = vadd.f32 %v814, %v817
        %s819 = sld [smem:[#allocation9 + $0x106]]
        %v820 = vstv %s819
        %v821 = vmul.f32 %v460, %v820
        %v822 = vadd.f32 %v818, %v821
        %s823 = sld [smem:[#allocation9 + $0x186]]
        %v824 = vstv %s823
        %v825 = vmul.f32 %v466, %v824
        %v826 = vadd.f32 %v822, %v825
        %s827 = sld [smem:[#allocation12 + $0x6]]
        %v828 = vstv %s827
        %v829 = vmul.f32 %v471, %v828
        %v830 = vadd.f32 %v826, %v829
        %s831 = sld [smem:[#allocation12 + $0x86]]
        %v832 = vstv %s831
        %v833 = vmul.f32 %v477, %v832
        %v834 = vadd.f32 %v830, %v833
        %s835 = sld [smem:[#allocation12 + $0x106]]
        %v836 = vstv %s835
        %v837 = vmul.f32 %v483, %v836
        %v838 = vadd.f32 %v834, %v837
        %s839 = sld [smem:[#allocation12 + $0x186]]
        %v840 = vstv %s839
        %v841 = vmul.f32 %v489, %v840
        %v842 = vadd.f32 %v838, %v841
        %s843 = sld [smem:[#allocation12 + $0x206]]
        %v844 = vstv %s843
        %v845 = vmul.f32 %v495, %v844
        %v846 = vadd.f32 %v842, %v845
        %s847 = sld [smem:[#allocation12 + $0x286]]
        %v848 = vstv %s847
        %v849 = vmul.f32 %v501, %v848
        %v850 = vadd.f32 %v846, %v849
        %s851 = sld [smem:[#allocation12 + $0x306]]
        %v852 = vstv %s851
        %v853 = vmul.f32 %v507, %v852
        %v854 = vadd.f32 %v850, %v853
        %s855 = sld [smem:[#allocation12 + $0x386]]
        %v856 = vstv %s855
        %v857 = vmul.f32 %v513, %v856
        %v858 = vadd.f32 %v854, %v857
        %s859 = sld [smem:[#allocation10 + $0x6]]
        %s860 = sld [smem:[#allocation13 + $0x6]]
        %s861 = sadd.f32 %s859, %s860
        %v862 = vstv %s861
        %v863 = vadd.f32 %v858, %v862
        %v864 = vmax.f32 %v863, 0.0
        %s865 = sld [smem:[#allocation15 + $0x6]]
        %v866 = vstv %s865
        %v867 = vmul.f32 %v864, %v866
        %v868 = vadd.f32 %v811, %v867
        %s869 = sld [smem:[#allocation9 + $0x7]]
        %v870 = vstv %s869
        %v871 = vmul.f32 %v449, %v870
        %s872 = sld [smem:[#allocation9 + $0x87]]
        %v873 = vstv %s872
        %v874 = vmul.f32 %v454, %v873
        %v875 = vadd.f32 %v871, %v874
        %s876 = sld [smem:[#allocation9 + $0x107]]
        %v877 = vstv %s876
        %v878 = vmul.f32 %v460, %v877
        %v879 = vadd.f32 %v875, %v878
        %s880 = sld [smem:[#allocation9 + $0x187]]
        %v881 = vstv %s880
        %v882 = vmul.f32 %v466, %v881
        %v883 = vadd.f32 %v879, %v882
        %s884 = sld [smem:[#allocation12 + $0x7]]
        %v885 = vstv %s884
        %v886 = vmul.f32 %v471, %v885
        %v887 = vadd.f32 %v883, %v886
        %s888 = sld [smem:[#allocation12 + $0x87]]
        %v889 = vstv %s888
        %v890 = vmul.f32 %v477, %v889
        %v891 = vadd.f32 %v887, %v890
        %s892 = sld [smem:[#allocation12 + $0x107]]
        %v893 = vstv %s892
        %v894 = vmul.f32 %v483, %v893
        %v895 = vadd.f32 %v891, %v894
        %s896 = sld [smem:[#allocation12 + $0x187]]
        %v897 = vstv %s896
        %v898 = vmul.f32 %v489, %v897
        %v899 = vadd.f32 %v895, %v898
        %s900 = sld [smem:[#allocation12 + $0x207]]
        %v901 = vstv %s900
        %v902 = vmul.f32 %v495, %v901
        %v903 = vadd.f32 %v899, %v902
        %s904 = sld [smem:[#allocation12 + $0x287]]
        %v905 = vstv %s904
        %v906 = vmul.f32 %v501, %v905
        %v907 = vadd.f32 %v903, %v906
        %s908 = sld [smem:[#allocation12 + $0x307]]
        %v909 = vstv %s908
        %v910 = vmul.f32 %v507, %v909
        %v911 = vadd.f32 %v907, %v910
        %s912 = sld [smem:[#allocation12 + $0x387]]
        %v913 = vstv %s912
        %v914 = vmul.f32 %v513, %v913
        %v915 = vadd.f32 %v911, %v914
        %s916 = sld [smem:[#allocation10 + $0x7]]
        %s917 = sld [smem:[#allocation13 + $0x7]]
        %s918 = sadd.f32 %s916, %s917
        %v919 = vstv %s918
        %v920 = vadd.f32 %v915, %v919
        %v921 = vmax.f32 %v920, 0.0
        %s922 = sld [smem:[#allocation15 + $0x7]]
        %v923 = vstv %s922
        %v924 = vmul.f32 %v921, %v923
        %v925 = vadd.f32 %v868, %v924
        %s926 = sld [smem:[#allocation9 + $0x8]]
        %v927 = vstv %s926
        %v928 = vmul.f32 %v449, %v927
        %s929 = sld [smem:[#allocation9 + $0x88]]
        %v930 = vstv %s929
        %v931 = vmul.f32 %v454, %v930
        %v932 = vadd.f32 %v928, %v931
        %s933 = sld [smem:[#allocation9 + $0x108]]
        %v934 = vstv %s933
        %v935 = vmul.f32 %v460, %v934
        %v936 = vadd.f32 %v932, %v935
        %s937 = sld [smem:[#allocation9 + $0x188]]
        %v938 = vstv %s937
        %v939 = vmul.f32 %v466, %v938
        %v940 = vadd.f32 %v936, %v939
        %s941 = sld [smem:[#allocation12 + $0x8]]
        %v942 = vstv %s941
        %v943 = vmul.f32 %v471, %v942
        %v944 = vadd.f32 %v940, %v943
        %s945 = sld [smem:[#allocation12 + $0x88]]
        %v946 = vstv %s945
        %v947 = vmul.f32 %v477, %v946
        %v948 = vadd.f32 %v944, %v947
        %s949 = sld [smem:[#allocation12 + $0x108]]
        %v950 = vstv %s949
        %v951 = vmul.f32 %v483, %v950
        %v952 = vadd.f32 %v948, %v951
        %s953 = sld [smem:[#allocation12 + $0x188]]
        %v954 = vstv %s953
        %v955 = vmul.f32 %v489, %v954
        %v956 = vadd.f32 %v952, %v955
        %s957 = sld [smem:[#allocation12 + $0x208]]
        %v958 = vstv %s957
        %v959 = vmul.f32 %v495, %v958
        %v960 = vadd.f32 %v956, %v959
        %s961 = sld [smem:[#allocation12 + $0x288]]
        %v962 = vstv %s961
        %v963 = vmul.f32 %v501, %v962
        %v964 = vadd.f32 %v960, %v963
        %s965 = sld [smem:[#allocation12 + $0x308]]
        %v966 = vstv %s965
        %v967 = vmul.f32 %v507, %v966
        %v968 = vadd.f32 %v964, %v967
        %s969 = sld [smem:[#allocation12 + $0x388]]
        %v970 = vstv %s969
        %v971 = vmul.f32 %v513, %v970
        %v972 = vadd.f32 %v968, %v971
        %s973 = sld [smem:[#allocation10 + $0x8]]
        %s974 = sld [smem:[#allocation13 + $0x8]]
        %s975 = sadd.f32 %s973, %s974
        %v976 = vstv %s975
        %v977 = vadd.f32 %v972, %v976
        %v978 = vmax.f32 %v977, 0.0
        %s979 = sld [smem:[#allocation15 + $0x8]]
        %v980 = vstv %s979
        %v981 = vmul.f32 %v978, %v980
        %v982 = vadd.f32 %v925, %v981
        %s983 = sld [smem:[#allocation9 + $0x9]]
        %v984 = vstv %s983
        %v985 = vmul.f32 %v449, %v984
        %s986 = sld [smem:[#allocation9 + $0x89]]
        %v987 = vstv %s986
        %v988 = vmul.f32 %v454, %v987
        %v989 = vadd.f32 %v985, %v988
        %s990 = sld [smem:[#allocation9 + $0x109]]
        %v991 = vstv %s990
        %v992 = vmul.f32 %v460, %v991
        %v993 = vadd.f32 %v989, %v992
        %s994 = sld [smem:[#allocation9 + $0x189]]
        %v995 = vstv %s994
        %v996 = vmul.f32 %v466, %v995
        %v997 = vadd.f32 %v993, %v996
        %s998 = sld [smem:[#allocation12 + $0x9]]
        %v999 = vstv %s998
        %v1000 = vmul.f32 %v471, %v999
        %v1001 = vadd.f32 %v997, %v1000
        %s1002 = sld [smem:[#allocation12 + $0x89]]
        %v1003 = vstv %s1002
        %v1004 = vmul.f32 %v477, %v1003
        %v1005 = vadd.f32 %v1001, %v1004
        %s1006 = sld [smem:[#allocation12 + $0x109]]
        %v1007 = vstv %s1006
        %v1008 = vmul.f32 %v483, %v1007
        %v1009 = vadd.f32 %v1005, %v1008
        %s1010 = sld [smem:[#allocation12 + $0x189]]
        %v1011 = vstv %s1010
        %v1012 = vmul.f32 %v489, %v1011
        %v1013 = vadd.f32 %v1009, %v1012
        %s1014 = sld [smem:[#allocation12 + $0x209]]
        %v1015 = vstv %s1014
        %v1016 = vmul.f32 %v495, %v1015
        %v1017 = vadd.f32 %v1013, %v1016
        %s1018 = sld [smem:[#allocation12 + $0x289]]
        %v1019 = vstv %s1018
        %v1020 = vmul.f32 %v501, %v1019
        %v1021 = vadd.f32 %v1017, %v1020
        %s1022 = sld [smem:[#allocation12 + $0x309]]
        %v1023 = vstv %s1022
        %v1024 = vmul.f32 %v507, %v1023
        %v1025 = vadd.f32 %v1021, %v1024
        %s1026 = sld [smem:[#allocation12 + $0x389]]
        %v1027 = vstv %s1026
        %v1028 = vmul.f32 %v513, %v1027
        %v1029 = vadd.f32 %v1025, %v1028
        %s1030 = sld [smem:[#allocation10 + $0x9]]
        %s1031 = sld [smem:[#allocation13 + $0x9]]
        %s1032 = sadd.f32 %s1030, %s1031
        %v1033 = vstv %s1032
        %v1034 = vadd.f32 %v1029, %v1033
        %v1035 = vmax.f32 %v1034, 0.0
        %s1036 = sld [smem:[#allocation15 + $0x9]]
        %v1037 = vstv %s1036
        %v1038 = vmul.f32 %v1035, %v1037
        %v1039 = vadd.f32 %v982, %v1038
        %s1040 = sld [smem:[#allocation9 + $0xa]]
        %v1041 = vstv %s1040
        %v1042 = vmul.f32 %v449, %v1041
        %s1043 = sld [smem:[#allocation9 + $0x8a]]
        %v1044 = vstv %s1043
        %v1045 = vmul.f32 %v454, %v1044
        %v1046 = vadd.f32 %v1042, %v1045
        %s1047 = sld [smem:[#allocation9 + $0x10a]]
        %v1048 = vstv %s1047
        %v1049 = vmul.f32 %v460, %v1048
        %v1050 = vadd.f32 %v1046, %v1049
        %s1051 = sld [smem:[#allocation9 + $0x18a]]
        %v1052 = vstv %s1051
        %v1053 = vmul.f32 %v466, %v1052
        %v1054 = vadd.f32 %v1050, %v1053
        %s1055 = sld [smem:[#allocation12 + $0xa]]
        %v1056 = vstv %s1055
        %v1057 = vmul.f32 %v471, %v1056
        %v1058 = vadd.f32 %v1054, %v1057
        %s1059 = sld [smem:[#allocation12 + $0x8a]]
        %v1060 = vstv %s1059
        %v1061 = vmul.f32 %v477, %v1060
        %v1062 = vadd.f32 %v1058, %v1061
        %s1063 = sld [smem:[#allocation12 + $0x10a]]
        %v1064 = vstv %s1063
        %v1065 = vmul.f32 %v483, %v1064
        %v1066 = vadd.f32 %v1062, %v1065
        %s1067 = sld [smem:[#allocation12 + $0x18a]]
        %v1068 = vstv %s1067
        %v1069 = vmul.f32 %v489, %v1068
        %v1070 = vadd.f32 %v1066, %v1069
        %s1071 = sld [smem:[#allocation12 + $0x20a]]
        %v1072 = vstv %s1071
        %v1073 = vmul.f32 %v495, %v1072
        %v1074 = vadd.f32 %v1070, %v1073
        %s1075 = sld [smem:[#allocation12 + $0x28a]]
        %v1076 = vstv %s1075
        %v1077 = vmul.f32 %v501, %v1076
        %v1078 = vadd.f32 %v1074, %v1077
        %s1079 = sld [smem:[#allocation12 + $0x30a]]
        %v1080 = vstv %s1079
        %v1081 = vmul.f32 %v507, %v1080
        %v1082 = vadd.f32 %v1078, %v1081
        %s1083 = sld [smem:[#allocation12 + $0x38a]]
        %v1084 = vstv %s1083
        %v1085 = vmul.f32 %v513, %v1084
        %v1086 = vadd.f32 %v1082, %v1085
        %s1087 = sld [smem:[#allocation10 + $0xa]]
        %s1088 = sld [smem:[#allocation13 + $0xa]]
        %s1089 = sadd.f32 %s1087, %s1088
        %v1090 = vstv %s1089
        %v1091 = vadd.f32 %v1086, %v1090
        %v1092 = vmax.f32 %v1091, 0.0
        %s1093 = sld [smem:[#allocation15 + $0xa]]
        %v1094 = vstv %s1093
        %v1095 = vmul.f32 %v1092, %v1094
        %v1096 = vadd.f32 %v1039, %v1095
        %s1097 = sld [smem:[#allocation9 + $0xb]]
        %v1098 = vstv %s1097
        %v1099 = vmul.f32 %v449, %v1098
        %s1100 = sld [smem:[#allocation9 + $0x8b]]
        %v1101 = vstv %s1100
        %v1102 = vmul.f32 %v454, %v1101
        %v1103 = vadd.f32 %v1099, %v1102
        %s1104 = sld [smem:[#allocation9 + $0x10b]]
        %v1105 = vstv %s1104
        %v1106 = vmul.f32 %v460, %v1105
        %v1107 = vadd.f32 %v1103, %v1106
        %s1108 = sld [smem:[#allocation9 + $0x18b]]
        %v1109 = vstv %s1108
        %v1110 = vmul.f32 %v466, %v1109
        %v1111 = vadd.f32 %v1107, %v1110
        %s1112 = sld [smem:[#allocation12 + $0xb]]
        %v1113 = vstv %s1112
        %v1114 = vmul.f32 %v471, %v1113
        %v1115 = vadd.f32 %v1111, %v1114
        %s1116 = sld [smem:[#allocation12 + $0x8b]]
        %v1117 = vstv %s1116
        %v1118 = vmul.f32 %v477, %v1117
        %v1119 = vadd.f32 %v1115, %v1118
        %s1120 = sld [smem:[#allocation12 + $0x10b]]
        %v1121 = vstv %s1120
        %v1122 = vmul.f32 %v483, %v1121
        %v1123 = vadd.f32 %v1119, %v1122
        %s1124 = sld [smem:[#allocation12 + $0x18b]]
        %v1125 = vstv %s1124
        %v1126 = vmul.f32 %v489, %v1125
        %v1127 = vadd.f32 %v1123, %v1126
        %s1128 = sld [smem:[#allocation12 + $0x20b]]
        %v1129 = vstv %s1128
        %v1130 = vmul.f32 %v495, %v1129
        %v1131 = vadd.f32 %v1127, %v1130
        %s1132 = sld [smem:[#allocation12 + $0x28b]]
        %v1133 = vstv %s1132
        %v1134 = vmul.f32 %v501, %v1133
        %v1135 = vadd.f32 %v1131, %v1134
        %s1136 = sld [smem:[#allocation12 + $0x30b]]
        %v1137 = vstv %s1136
        %v1138 = vmul.f32 %v507, %v1137
        %v1139 = vadd.f32 %v1135, %v1138
        %s1140 = sld [smem:[#allocation12 + $0x38b]]
        %v1141 = vstv %s1140
        %v1142 = vmul.f32 %v513, %v1141
        %v1143 = vadd.f32 %v1139, %v1142
        %s1144 = sld [smem:[#allocation10 + $0xb]]
        %s1145 = sld [smem:[#allocation13 + $0xb]]
        %s1146 = sadd.f32 %s1144, %s1145
        %v1147 = vstv %s1146
        %v1148 = vadd.f32 %v1143, %v1147
        %v1149 = vmax.f32 %v1148, 0.0
        %s1150 = sld [smem:[#allocation15 + $0xb]]
        %v1151 = vstv %s1150
        %v1152 = vmul.f32 %v1149, %v1151
        %v1153 = vadd.f32 %v1096, %v1152
        %s1154 = sld [smem:[#allocation9 + $0xc]]
        %v1155 = vstv %s1154
        %v1156 = vmul.f32 %v449, %v1155
        %s1157 = sld [smem:[#allocation9 + $0x8c]]
        %v1158 = vstv %s1157
        %v1159 = vmul.f32 %v454, %v1158
        %v1160 = vadd.f32 %v1156, %v1159
        %s1161 = sld [smem:[#allocation9 + $0x10c]]
        %v1162 = vstv %s1161
        %v1163 = vmul.f32 %v460, %v1162
        %v1164 = vadd.f32 %v1160, %v1163
        %s1165 = sld [smem:[#allocation9 + $0x18c]]
        %v1166 = vstv %s1165
        %v1167 = vmul.f32 %v466, %v1166
        %v1168 = vadd.f32 %v1164, %v1167
        %s1169 = sld [smem:[#allocation12 + $0xc]]
        %v1170 = vstv %s1169
        %v1171 = vmul.f32 %v471, %v1170
        %v1172 = vadd.f32 %v1168, %v1171
        %s1173 = sld [smem:[#allocation12 + $0x8c]]
        %v1174 = vstv %s1173
        %v1175 = vmul.f32 %v477, %v1174
        %v1176 = vadd.f32 %v1172, %v1175
        %s1177 = sld [smem:[#allocation12 + $0x10c]]
        %v1178 = vstv %s1177
        %v1179 = vmul.f32 %v483, %v1178
        %v1180 = vadd.f32 %v1176, %v1179
        %s1181 = sld [smem:[#allocation12 + $0x18c]]
        %v1182 = vstv %s1181
        %v1183 = vmul.f32 %v489, %v1182
        %v1184 = vadd.f32 %v1180, %v1183
        %s1185 = sld [smem:[#allocation12 + $0x20c]]
        %v1186 = vstv %s1185
        %v1187 = vmul.f32 %v495, %v1186
        %v1188 = vadd.f32 %v1184, %v1187
        %s1189 = sld [smem:[#allocation12 + $0x28c]]
        %v1190 = vstv %s1189
        %v1191 = vmul.f32 %v501, %v1190
        %v1192 = vadd.f32 %v1188, %v1191
        %s1193 = sld [smem:[#allocation12 + $0x30c]]
        %v1194 = vstv %s1193
        %v1195 = vmul.f32 %v507, %v1194
        %v1196 = vadd.f32 %v1192, %v1195
        %s1197 = sld [smem:[#allocation12 + $0x38c]]
        %v1198 = vstv %s1197
        %v1199 = vmul.f32 %v513, %v1198
        %v1200 = vadd.f32 %v1196, %v1199
        %s1201 = sld [smem:[#allocation10 + $0xc]]
        %s1202 = sld [smem:[#allocation13 + $0xc]]
        %s1203 = sadd.f32 %s1201, %s1202
        %v1204 = vstv %s1203
        %v1205 = vadd.f32 %v1200, %v1204
        %v1206 = vmax.f32 %v1205, 0.0
        %s1207 = sld [smem:[#allocation15 + $0xc]]
        %v1208 = vstv %s1207
        %v1209 = vmul.f32 %v1206, %v1208
        %v1210 = vadd.f32 %v1153, %v1209
        %s1211 = sld [smem:[#allocation9 + $0xd]]
        %v1212 = vstv %s1211
        %v1213 = vmul.f32 %v449, %v1212
        %s1214 = sld [smem:[#allocation9 + $0x8d]]
        %v1215 = vstv %s1214
        %v1216 = vmul.f32 %v454, %v1215
        %v1217 = vadd.f32 %v1213, %v1216
        %s1218 = sld [smem:[#allocation9 + $0x10d]]
        %v1219 = vstv %s1218
        %v1220 = vmul.f32 %v460, %v1219
        %v1221 = vadd.f32 %v1217, %v1220
        %s1222 = sld [smem:[#allocation9 + $0x18d]]
        %v1223 = vstv %s1222
        %v1224 = vmul.f32 %v466, %v1223
        %v1225 = vadd.f32 %v1221, %v1224
        %s1226 = sld [smem:[#allocation12 + $0xd]]
        %v1227 = vstv %s1226
        %v1228 = vmul.f32 %v471, %v1227
        %v1229 = vadd.f32 %v1225, %v1228
        %s1230 = sld [smem:[#allocation12 + $0x8d]]
        %v1231 = vstv %s1230
        %v1232 = vmul.f32 %v477, %v1231
        %v1233 = vadd.f32 %v1229, %v1232
        %s1234 = sld [smem:[#allocation12 + $0x10d]]
        %v1235 = vstv %s1234
        %v1236 = vmul.f32 %v483, %v1235
        %v1237 = vadd.f32 %v1233, %v1236
        %s1238 = sld [smem:[#allocation12 + $0x18d]]
        %v1239 = vstv %s1238
        %v1240 = vmul.f32 %v489, %v1239
        %v1241 = vadd.f32 %v1237, %v1240
        %s1242 = sld [smem:[#allocation12 + $0x20d]]
        %v1243 = vstv %s1242
        %v1244 = vmul.f32 %v495, %v1243
        %v1245 = vadd.f32 %v1241, %v1244
        %s1246 = sld [smem:[#allocation12 + $0x28d]]
        %v1247 = vstv %s1246
        %v1248 = vmul.f32 %v501, %v1247
        %v1249 = vadd.f32 %v1245, %v1248
        %s1250 = sld [smem:[#allocation12 + $0x30d]]
        %v1251 = vstv %s1250
        %v1252 = vmul.f32 %v507, %v1251
        %v1253 = vadd.f32 %v1249, %v1252
        %s1254 = sld [smem:[#allocation12 + $0x38d]]
        %v1255 = vstv %s1254
        %v1256 = vmul.f32 %v513, %v1255
        %v1257 = vadd.f32 %v1253, %v1256
        %s1258 = sld [smem:[#allocation10 + $0xd]]
        %s1259 = sld [smem:[#allocation13 + $0xd]]
        %s1260 = sadd.f32 %s1258, %s1259
        %v1261 = vstv %s1260
        %v1262 = vadd.f32 %v1257, %v1261
        %v1263 = vmax.f32 %v1262, 0.0
        %s1264 = sld [smem:[#allocation15 + $0xd]]
        %v1265 = vstv %s1264
        %v1266 = vmul.f32 %v1263, %v1265
        %v1267 = vadd.f32 %v1210, %v1266
        %s1268 = sld [smem:[#allocation9 + $0xe]]
        %v1269 = vstv %s1268
        %v1270 = vmul.f32 %v449, %v1269
        %s1271 = sld [smem:[#allocation9 + $0x8e]]
        %v1272 = vstv %s1271
        %v1273 = vmul.f32 %v454, %v1272
        %v1274 = vadd.f32 %v1270, %v1273
        %s1275 = sld [smem:[#allocation9 + $0x10e]]
        %v1276 = vstv %s1275
        %v1277 = vmul.f32 %v460, %v1276
        %v1278 = vadd.f32 %v1274, %v1277
        %s1279 = sld [smem:[#allocation9 + $0x18e]]
        %v1280 = vstv %s1279
        %v1281 = vmul.f32 %v466, %v1280
        %v1282 = vadd.f32 %v1278, %v1281
        %s1283 = sld [smem:[#allocation12 + $0xe]]
        %v1284 = vstv %s1283
        %v1285 = vmul.f32 %v471, %v1284
        %v1286 = vadd.f32 %v1282, %v1285
        %s1287 = sld [smem:[#allocation12 + $0x8e]]
        %v1288 = vstv %s1287
        %v1289 = vmul.f32 %v477, %v1288
        %v1290 = vadd.f32 %v1286, %v1289
        %s1291 = sld [smem:[#allocation12 + $0x10e]]
        %v1292 = vstv %s1291
        %v1293 = vmul.f32 %v483, %v1292
        %v1294 = vadd.f32 %v1290, %v1293
        %s1295 = sld [smem:[#allocation12 + $0x18e]]
        %v1296 = vstv %s1295
        %v1297 = vmul.f32 %v489, %v1296
        %v1298 = vadd.f32 %v1294, %v1297
        %s1299 = sld [smem:[#allocation12 + $0x20e]]
        %v1300 = vstv %s1299
        %v1301 = vmul.f32 %v495, %v1300
        %v1302 = vadd.f32 %v1298, %v1301
        %s1303 = sld [smem:[#allocation12 + $0x28e]]
        %v1304 = vstv %s1303
        %v1305 = vmul.f32 %v501, %v1304
        %v1306 = vadd.f32 %v1302, %v1305
        %s1307 = sld [smem:[#allocation12 + $0x30e]]
        %v1308 = vstv %s1307
        %v1309 = vmul.f32 %v507, %v1308
        %v1310 = vadd.f32 %v1306, %v1309
        %s1311 = sld [smem:[#allocation12 + $0x38e]]
        %v1312 = vstv %s1311
        %v1313 = vmul.f32 %v513, %v1312
        %v1314 = vadd.f32 %v1310, %v1313
        %s1315 = sld [smem:[#allocation10 + $0xe]]
        %s1316 = sld [smem:[#allocation13 + $0xe]]
        %s1317 = sadd.f32 %s1315, %s1316
        %v1318 = vstv %s1317
        %v1319 = vadd.f32 %v1314, %v1318
        %v1320 = vmax.f32 %v1319, 0.0
        %s1321 = sld [smem:[#allocation15 + $0xe]]
        %v1322 = vstv %s1321
        %v1323 = vmul.f32 %v1320, %v1322
        %v1324 = vadd.f32 %v1267, %v1323
        %s1325 = sld [smem:[#allocation9 + $0xf]]
        %v1326 = vstv %s1325
        %v1327 = vmul.f32 %v449, %v1326
        %s1328 = sld [smem:[#allocation9 + $0x8f]]
        %v1329 = vstv %s1328
        %v1330 = vmul.f32 %v454, %v1329
        %v1331 = vadd.f32 %v1327, %v1330
        %s1332 = sld [smem:[#allocation9 + $0x10f]]
        %v1333 = vstv %s1332
        %v1334 = vmul.f32 %v460, %v1333
        %v1335 = vadd.f32 %v1331, %v1334
        %s1336 = sld [smem:[#allocation9 + $0x18f]]
        %v1337 = vstv %s1336
        %v1338 = vmul.f32 %v466, %v1337
        %v1339 = vadd.f32 %v1335, %v1338
        %s1340 = sld [smem:[#allocation12 + $0xf]]
        %v1341 = vstv %s1340
        %v1342 = vmul.f32 %v471, %v1341
        %v1343 = vadd.f32 %v1339, %v1342
        %s1344 = sld [smem:[#allocation12 + $0x8f]]
        %v1345 = vstv %s1344
        %v1346 = vmul.f32 %v477, %v1345
        %v1347 = vadd.f32 %v1343, %v1346
        %s1348 = sld [smem:[#allocation12 + $0x10f]]
        %v1349 = vstv %s1348
        %v1350 = vmul.f32 %v483, %v1349
        %v1351 = vadd.f32 %v1347, %v1350
        %s1352 = sld [smem:[#allocation12 + $0x18f]]
        %v1353 = vstv %s1352
        %v1354 = vmul.f32 %v489, %v1353
        %v1355 = vadd.f32 %v1351, %v1354
        %s1356 = sld [smem:[#allocation12 + $0x20f]]
        %v1357 = vstv %s1356
        %v1358 = vmul.f32 %v495, %v1357
        %v1359 = vadd.f32 %v1355, %v1358
        %s1360 = sld [smem:[#allocation12 + $0x28f]]
        %v1361 = vstv %s1360
        %v1362 = vmul.f32 %v501, %v1361
        %v1363 = vadd.f32 %v1359, %v1362
        %s1364 = sld [smem:[#allocation12 + $0x30f]]
        %v1365 = vstv %s1364
        %v1366 = vmul.f32 %v507, %v1365
        %v1367 = vadd.f32 %v1363, %v1366
        %s1368 = sld [smem:[#allocation12 + $0x38f]]
        %v1369 = vstv %s1368
        %v1370 = vmul.f32 %v513, %v1369
        %v1371 = vadd.f32 %v1367, %v1370
        %s1372 = sld [smem:[#allocation10 + $0xf]]
        %s1373 = sld [smem:[#allocation13 + $0xf]]
        %s1374 = sadd.f32 %s1372, %s1373
        %v1375 = vstv %s1374
        %v1376 = vadd.f32 %v1371, %v1375
        %v1377 = vmax.f32 %v1376, 0.0
        %s1378 = sld [smem:[#allocation15 + $0xf]]
        %v1379 = vstv %s1378
        %v1380 = vmul.f32 %v1377, %v1379
        %v1381 = vadd.f32 %v1324, %v1380
        %s1382 = sld [smem:[#allocation2]]
        %v1383 = vstv %s1382
        %v1384 = vadd.f32 %v1381, %v1383
        %v1385 = vxor.u32 %v1384, 2147483648
        %v1386 = vmul.f32 %v1385, 1.442695
        %v1387 = vpow.pop %v1386
        %v1388 = vadd.f32 %v1387, 1.0
        %v1389 = vrcp.pop %v1388
        %v1390 = vmul.f32 1.0, %v1389
        %v1391 = vld [vmem:[%s381] sm:$0x3]
        %v1392 = vld [vmem:[%s381 + $0x2] sm:$0x3]
        %v1393 = vld [vmem:[%s381 + $0x4] sm:$0x3]
        %v1394 = vld [vmem:[%s381 + $0x6] sm:$0x3]
        %v1395 = vmul.f32 %v1391, %v1390
        %v1396 = vmul.f32 %v1392, %v1390
        %v1397 = vmul.f32 %v1393, %v1390
        %v1398 = vmul.f32 %v1394, %v1390
        %1399 = vst [vmem:[%s448] sm:$0x3] %v1395
        %1400 = vst [vmem:[%s448 + $0x2] sm:$0x3] %v1396
        %1401 = vst [vmem:[%s448 + $0x4] sm:$0x3] %v1397
        %1402 = vst [vmem:[%s448 + $0x6] sm:$0x3] %v1398
        %s1403 = sand.u32 %s236, 1
        %s1404 = scalar_lea.sflag [#allocation5], %s1403
        %s1405 = sand.u32 %s236, 1
        %s1406 = smul.addr %s1405, 8
        %s1407 = scalar_lea.vmem [#allocation16], %s1406
        // Predicated region
        $region81: #{tpu_custom_call.1} parent=51 // pred_check
          %p1408 = pneg %p246
        $region82: #{tpu_custom_call.1} parent=51 // pred_check_branch
          %1410 = sbr.rel (%p1408) target = $region84
        $region83: #{tpu_custom_call.1} parent=51 // pred_region
          %s1412 = ssub.s32 128, 128
          %1413 = vsyncadd %s1404, %s1412
          %s1414 = smul.addr %s36, 4
          %s1415 = sadd.s32 %s37, %s1414
          %s1416 = smul.addr %s1415, 32
          %s1417 = scalar_lea.hbm %s8, %s1416
          %s1418 = sshll.u32 %s1407, 4
          %s1419 = int_to_ptr.vmem [resolvable:$true] %s1418
          %1424 = dma.vmem_to_hbm [thread:$0]  %s1419, 128, %s1417, %s1404, 32, 32, 2
        $region84: #{tpu_custom_call.1} parent=51 // pred_fallthru
          _
      $region52: #{tpu_custom_call.1} parent=5 // pred_fallthru
        _
      %p1425 = scmp.le.s32.totalorder 2, %s27
      // Predicated region
      $region85: #{tpu_custom_call.1} parent=5 // pred_check
        %p1426 = pneg %p1425
      $region86: #{tpu_custom_call.1} parent=5 // pred_check_branch
        %1428 = sbr.rel (%p1426) target = $region88
      $region87: #{tpu_custom_call.1} parent=5 // pred_region
        %s1429 = ssub.s32 %s27, 2
        // Predicated region
        $region89: #{tpu_custom_call.1} parent=87 // pred_check
          %p1430 = pneg %p252
        $region90: #{tpu_custom_call.1} parent=87 // pred_check_branch
          %1432 = sbr.rel (%p1430) target = $region92
        $region91: #{tpu_custom_call.1} parent=87 // pred_region
          %s1433 = sand.u32 %s237, 1
          %s1434 = scalar_lea.sflag [#allocation5], %s1433
          %s1435 = sand.u32 %s237, 1
          %s1436 = smul.addr %s1435, 8
          %s1437 = scalar_lea.vmem [#allocation16], %s1436
          %1438 = dma.done %s1434, 128
        $region92: #{tpu_custom_call.1} parent=87 // pred_fallthru
          _
      $region88: #{tpu_custom_call.1} parent=5 // pred_fallthru
        _
    $region6: #{tpu_custom_call.1} parent=1 // loop_footer
      %s31 = sadd.s32 1, %s27
    $region7: #{tpu_custom_call.1} parent=1 // loop_footer_branch
      %26 = sbr.rel target = $region3
    $region8: #{tpu_custom_call.1} parent=1 // loop_exit
      _
    %1439 = vsyncpa [#allocation4], 1
    %s1440 = scalar_lea.sflag [#allocation4], 1
    %1441 = vsyncpa %s1440, 1
    %1442 = vsyncpa [#allocation8], 1
    %s1443 = scalar_lea.sflag [#allocation8], 1
    %1444 = vsyncpa %s1443, 1
    %1445 = vsyncpa [#allocation5], 1
    %s1446 = scalar_lea.sflag [#allocation5], 1
    %1447 = vsyncpa %s1446, 1
    %1448 = vsyncpa [#allocation6], 1
    %s1449 = scalar_lea.sflag [#allocation6], 1
    %1450 = vsyncpa %s1449, 1
    %1451 = vsyncpa [#allocation11], 1
    %1452 = vsyncpa [#allocation14], 1

</llo_original>
